<compile_context>
chip_gen: v7x
topology: tpu7x:2x2x1
jax: 0.10.0
libtpu: 0.0.40
codegen_flags: <defaults>
</compile_context>

<pallas_src>
import functools
import math

import jax
import jax.numpy as jnp
from jax import lax
from jax.experimental import pallas as pl

# ---- model_parameters (synthetic, small) -------------------------------------------
HIDDEN = 32          # model_parameters.hidden_size
HEADS = 4            # model_parameters.attention_heads
HEAD_DIM = 8         # model_parameters.attention_dim  (HEADS * HEAD_DIM == HIDDEN)
RANK = 4             # LoRA rank
VOCAB = 64           # projection output size (vocab)
MAX_POS = 64         # positional embedding table size
N_LAYERS = 2         # number of decoder layers
FFN_DIM = 128        # TODO(synk): GPT's fnn internals are not shown; standard Linear-ReLU-Linear + residual + LN assumed
PAD_ID = 0
LN_EPS = 1e-5

QKV_OUT = HEADS * HEAD_DIM                      # 32
VOCAB_PAD = ((VOCAB + 127) // 128) * 128        # lane-dense (multiple-of-128) logits slab

assert HEADS * HEAD_DIM == HIDDEN


# ====================== fused Pallas kernel ======================

def _layernorm(y, gamma, beta):
    mu = jnp.mean(y, axis=-1, keepdims=True)
    var = jnp.mean(jnp.square(y - mu), axis=-1, keepdims=True)
    return (y - mu) * lax.rsqrt(var + LN_EPS) * gamma + beta


def _lora_gpt_kernel(
    x_ref, bias_ref, wqkv_ref, bqkv_ref, wo_ref, bo_ref, g1_ref, be1_ref,
    w1_ref, b1_ref, w2_ref, b2_ref, g2_ref, be2_ref, pw_ref, pb_ref,
    logits_ref, scores_ref, *, batch, seq):
    """Whole forward pass in one invocation: all weights/activations VMEM-resident."""
    B, S, H, D = batch, seq, HEADS, HEAD_DIM
    M = B * S
    scale = 1.0 / math.sqrt(D)

    x = x_ref[...]                      # [M, HIDDEN] activations (carried as a value)
    bias = bias_ref[...]                # [B, S, S] additive attention-mask bias (0 / -1e9)

    for l in range(N_LAYERS):           # static in-kernel layer loop (no grid steps)
        # --- fused QKV projection (LoRA folded into the frozen weights), bf16 x bf16 -> f32 ---
        qkv = jnp.dot(x.astype(jnp.bfloat16), wqkv_ref[l],
                      preferred_element_type=jnp.float32) + bqkv_ref[l]       # [M, 3*QKV_OUT]

        # --- attention: per head, batched over the batch dim with a single 3-D dot_general ---
        ctx_heads = []
        score_heads = []
        for h in range(H):
            c0 = h * D
            q = qkv[:, c0:c0 + D].reshape(B, S, D)
            k = qkv[:, QKV_OUT + c0:QKV_OUT + c0 + D].reshape(B, S, D)
            v = qkv[:, 2 * QKV_OUT + c0:2 * QKV_OUT + c0 + D].reshape(B, S, D)
            # 'bqd,bkd->bqk' (no .T -> no extra transpose), then additive mask bias
            s = lax.dot_general(q, k, (((2,), (2,)), ((0,), (0,))),
                                preferred_element_type=jnp.float32) * scale + bias
            s = s - jnp.max(s, axis=-1, keepdims=True)
            e = jnp.exp(s)
            p = e / jnp.sum(e, axis=-1, keepdims=True)    # exact divide: p is a model output
            # 'bqk,bkd->bqd'
            ctx_h = lax.dot_general(p, v, (((2,), (1,)), ((0,), (0,))),
                                    preferred_element_type=jnp.float32)       # [B, S, D]
            ctx_heads.append(ctx_h.reshape(M, D))
            score_heads.append(p.reshape(M, S))

        ctx = jnp.concatenate(ctx_heads, axis=1)                 # [M, QKV_OUT], register value
        scores_ref[l] = jnp.concatenate(score_heads, axis=1)     # one [M, H*S] store per layer

        # --- output projection + residual + LayerNorm ---
        attn = jnp.dot(ctx.astype(jnp.bfloat16), wo_ref[l],
                       preferred_element_type=jnp.float32) + bo_ref[l]
        y = _layernorm(attn + x, g1_ref[l], be1_ref[l])

        # --- FFN (Linear-ReLU-Linear) + residual + LayerNorm ---
        hid = jnp.maximum(jnp.dot(y.astype(jnp.bfloat16), w1_ref[l],
                                  preferred_element_type=jnp.float32) + b1_ref[l], 0.0)
        y2 = jnp.dot(hid.astype(jnp.bfloat16), w2_ref[l],
                     preferred_element_type=jnp.float32) + b2_ref[l] + y
        x = _layernorm(y2, g2_ref[l], be2_ref[l])                # carried to the next layer

    # --- final vocab projection, lane-dense (128-wide) padded output slab ---
    logits_ref[...] = (jnp.dot(x.astype(jnp.bfloat16), pw_ref[...],
                               preferred_element_type=jnp.float32) + pb_ref[...]
                       ).astype(logits_ref.dtype)


# ====================== wrapper / glue ======================

def _fold_and_stack_layers(layers):
    """Fold LoRA into frozen weights (W_eff = W + B @ A; reference LoRA has no alpha/rank
    scaling and no dropout), concatenate Q/K/V, pre-transpose every weight to [in, out],
    cast matmul weights to bf16 (f32 accumulation in-kernel), stack on a layer axis."""
    cols = {k: [] for k in ("wqkv", "bqkv", "wo", "bo", "g1", "be1",
                            "w1", "b1", "w2", "b2", "g2", "be2")}
    for lp in layers:
        wq = lp["wq"] + lp["qb"] @ lp["qa"]
        wk = lp["wk"] + lp["kb"] @ lp["ka"]
        wv = lp["wv"] + lp["vb"] @ lp["va"]
        cols["wqkv"].append(jnp.concatenate([wq, wk, wv], axis=0).T.astype(jnp.bfloat16))
        cols["bqkv"].append(jnp.concatenate([lp["bq"], lp["bk"], lp["bv"]])[None, :])
        cols["wo"].append(lp["wo"].T.astype(jnp.bfloat16))
        cols["bo"].append(lp["bo"][None, :])
        cols["g1"].append(lp["ln1_g"][None, :])
        cols["be1"].append(lp["ln1_b"][None, :])
        cols["w1"].append(lp["w1"].T.astype(jnp.bfloat16))
        cols["b1"].append(lp["b1"][None, :])
        cols["w2"].append(lp["w2"].T.astype(jnp.bfloat16))
        cols["b2"].append(lp["b2"][None, :])
        cols["g2"].append(lp["ln2_g"][None, :])
        cols["be2"].append(lp["ln2_b"][None, :])
    return {k: jnp.stack(v, axis=0) for k, v in cols.items()}


def lora_model_forward(params, input_ids):
    """LoRaModel.forward: returns (logits [B*S, VOCAB], list of per-layer attention scores)."""
    B, S = input_ids.shape
    M = B * S

    # embeddings (glue: gather lookups stay in plain JAX)
    word_emb = jnp.take(params["word_emb"], input_ids, axis=0)              # [B, S, H]
    pos_emb = jnp.take(params["pos_emb"], jnp.arange(S), axis=0)[None]      # [1, S, H]
    x = (word_emb + pos_emb).reshape(M, HIDDEN).astype(jnp.float32)

    # additive attention-mask bias [B, S, S]: pad mask on key positions + strict causal mask.
    # 0.0 where attended, -1e9 where masked (a fully masked row degrades to a uniform
    # distribution rather than NaN thanks to the in-kernel max subtraction).
    pad = jnp.broadcast_to((input_ids == PAD_ID)[:, None, :], (B, S, S))
    causal = jnp.triu(jnp.ones((S, S), dtype=bool), k=1)[None]
    bias = jnp.where(jnp.logical_or(pad, causal), -1e9, 0.0).astype(jnp.float32)

    stk = _fold_and_stack_layers(params["layers"])

    # final projection, padded to a lane-dense 128-wide slab (sliced after the kernel)
    pw = jnp.zeros((HIDDEN, VOCAB_PAD), jnp.bfloat16).at[:, :VOCAB].set(
        params["proj_w"].T.astype(jnp.bfloat16))
    pb = jnp.zeros((1, VOCAB_PAD), jnp.float32).at[:, :VOCAB].set(params["proj_b"][None, :])

    kernel = functools.partial(_lora_gpt_kernel, batch=B, seq=S)

    # One grid-less pallas_call: every operand is placed whole in VMEM (total < 1 MiB),
    # the layer loop runs inside the kernel, outputs are written once.
    logits_pad, scores_slab = pl.pallas_call(
        kernel,
        out_shape=(
            jax.ShapeDtypeStruct((M, VOCAB_PAD), jnp.float32),
            jax.ShapeDtypeStruct((N_LAYERS, M, HEADS * S), jnp.float32),
        ),
    )(x, bias, stk["wqkv"], stk["bqkv"], stk["wo"], stk["bo"], stk["g1"], stk["be1"],
      stk["w1"], stk["b1"], stk["w2"], stk["b2"], stk["g2"], stk["be2"], pw, pb)

    logits = logits_pad[:, :VOCAB]
    # scores_slab[l, b*S+q, h*S+k]  ->  [N_LAYERS, B, HEADS, S, S] (plain-JAX reorder)
    scores = jnp.transpose(scores_slab.reshape(N_LAYERS, B, S, HEADS, S), (0, 1, 3, 2, 4))
    attentions = [scores[i] for i in range(N_LAYERS)]
    return logits, attentions


# ====================== deterministic parameter init ======================

def init_params(key):
    def normal(k, shape, scale=0.02):
        return (scale * jax.random.normal(k, shape)).astype(jnp.float32)

    keys = jax.random.split(key, 4 + N_LAYERS)
    params = {
        "word_emb": normal(keys[0], (VOCAB, HIDDEN)),
        "pos_emb": normal(keys[1], (MAX_POS, HIDDEN)),
        "proj_w": normal(keys[2], (VOCAB, HIDDEN)),
        "proj_b": jnp.zeros((VOCAB,), jnp.float32),
        "layers": [],
    }
    for li in range(N_LAYERS):
        lk = jax.random.split(keys[4 + li], 12)
        qkv_out = HEADS * HEAD_DIM
        layer = {
            # frozen GPT attention weights
            "wq": normal(lk[0], (qkv_out, HIDDEN)), "bq": jnp.zeros((qkv_out,), jnp.float32),
            "wk": normal(lk[1], (qkv_out, HIDDEN)), "bk": jnp.zeros((qkv_out,), jnp.float32),
            "wv": normal(lk[2], (qkv_out, HIDDEN)), "bv": jnp.zeros((qkv_out,), jnp.float32),
            "wo": normal(lk[3], (HIDDEN, qkv_out)), "bo": jnp.zeros((HIDDEN,), jnp.float32),
            "ln1_g": jnp.ones((HIDDEN,), jnp.float32), "ln1_b": jnp.zeros((HIDDEN,), jnp.float32),
            # LoRA adapters: A matrices zero-initialized (as in the module), B random
            "qa": jnp.zeros((RANK, HIDDEN), jnp.float32), "qb": normal(lk[4], (qkv_out, RANK)),
            "ka": jnp.zeros((RANK, HIDDEN), jnp.float32), "kb": normal(lk[5], (qkv_out, RANK)),
            "va": jnp.zeros((RANK, HIDDEN), jnp.float32), "vb": normal(lk[6], (qkv_out, RANK)),
            # frozen GPT FFN weights
            "w1": normal(lk[7], (FFN_DIM, HIDDEN)), "b1": jnp.zeros((FFN_DIM,), jnp.float32),
            "w2": normal(lk[8], (HIDDEN, FFN_DIM)), "b2": jnp.zeros((HIDDEN,), jnp.float32),
            "ln2_g": jnp.ones((HIDDEN,), jnp.float32), "ln2_b": jnp.zeros((HIDDEN,), jnp.float32),
        }
        params["layers"].append(layer)
    return params


# ====================== main ======================

if __name__ == "__main__":
    key = jax.random.PRNGKey(0)
    pkey, dkey = jax.random.split(key)
    params = init_params(pkey)

    B, S = 2, 8
    input_ids = jax.random.randint(dkey, (B, S), 1, VOCAB, dtype=jnp.int32)
    # put a pad token at the end of the second sequence to exercise the pad mask
    input_ids = input_ids.at[1, -1].set(PAD_ID)

    logits, attentions = jax.jit(lora_model_forward)(params, input_ids)
    jax.block_until_ready(logits)
    for a in attentions:
        jax.block_until_ready(a)

    assert logits.shape == (B * S, VOCAB)
    assert len(attentions) == N_LAYERS
    assert attentions[0].shape == (B, HEADS, S, S)
    assert bool(jnp.all(jnp.isfinite(logits)))
    # attention rows must sum to ~1 (exact softmax divide)
    assert bool(jnp.all(jnp.abs(jnp.sum(attentions[0], axis=-1) - 1.0) < 1e-4))
    print("KERNEL_OK")
</pallas_src>

<mosaic_0001>
module attributes {stable_mosaic.version = 11 : i64} {
  func.func @_lora_gpt_kernel(%arg0: memref<16x32xf32, #tpu.memory_space<vmem>>, %arg1: memref<2x8x8xf32, #tpu.memory_space<vmem>>, %arg2: memref<2x32x96xbf16, #tpu.memory_space<vmem>>, %arg3: memref<2x1x96xf32, #tpu.memory_space<vmem>>, %arg4: memref<2x32x32xbf16, #tpu.memory_space<vmem>>, %arg5: memref<2x1x32xf32, #tpu.memory_space<vmem>>, %arg6: memref<2x1x32xf32, #tpu.memory_space<vmem>>, %arg7: memref<2x1x32xf32, #tpu.memory_space<vmem>>, %arg8: memref<2x32x128xbf16, #tpu.memory_space<vmem>>, %arg9: memref<2x1x128xf32, #tpu.memory_space<vmem>>, %arg10: memref<2x128x32xbf16, #tpu.memory_space<vmem>>, %arg11: memref<2x1x32xf32, #tpu.memory_space<vmem>>, %arg12: memref<2x1x32xf32, #tpu.memory_space<vmem>>, %arg13: memref<2x1x32xf32, #tpu.memory_space<vmem>>, %arg14: memref<32x128xbf16, #tpu.memory_space<vmem>>, %arg15: memref<1x128xf32, #tpu.memory_space<vmem>>, %arg16: memref<16x128xf32, #tpu.memory_space<vmem>>, %arg17: memref<2x16x32xf32, #tpu.memory_space<vmem>>) attributes {dimension_semantics = [], scalar_prefetch = 0 : i64, scratch_operands = 0 : i64, tpu.core_type = #tpu.core_type<tc>} {
    %c0 = arith.constant 0 : index
    %c0_0 = arith.constant 0 : index
    %0 = vector.load %arg0[%c0, %c0_0] : memref<16x32xf32, #tpu.memory_space<vmem>>, vector<16x32xf32>
    %c0_1 = arith.constant 0 : index
    %c0_2 = arith.constant 0 : index
    %c0_3 = arith.constant 0 : index
    %1 = vector.load %arg1[%c0_1, %c0_2, %c0_3] : memref<2x8x8xf32, #tpu.memory_space<vmem>>, vector<2x8x8xf32>
    %2 = arith.truncf %0 : vector<16x32xf32> to vector<16x32xbf16>
    %c0_4 = arith.constant 0 : index
    %c0_5 = arith.constant 0 : index
    %c0_6 = arith.constant 0 : index
    %3 = vector.load %arg2[%c0_4, %c0_5, %c0_6] : memref<2x32x96xbf16, #tpu.memory_space<vmem>>, vector<1x32x96xbf16>
    %4 = vector.shape_cast %3 : vector<1x32x96xbf16> to vector<32x96xbf16>
    %cst = arith.constant dense<0.000000e+00> : vector<16x96xf32>
    %5 = tpu.matmul %2, %4, %cst {dimension_numbers = #tpu.dot_dimension_numbers<[1], [0], [0], [1], [0, 0, 1, 1], [], []>} : vector<16x32xbf16>, vector<32x96xbf16>, vector<16x96xf32> -> vector<16x96xf32>
    %c0_7 = arith.constant 0 : index
    %c0_8 = arith.constant 0 : index
    %c0_9 = arith.constant 0 : index
    %6 = vector.load %arg3[%c0_7, %c0_8, %c0_9] : memref<2x1x96xf32, #tpu.memory_space<vmem>>, vector<1x1x96xf32>
    %7 = vector.shape_cast %6 : vector<1x1x96xf32> to vector<1x96xf32>
    %8 = vector.broadcast %7 : vector<1x96xf32> to vector<16x96xf32>
    %9 = arith.addf %5, %8 : vector<16x96xf32>
    %10 = vector.extract_strided_slice %9 {offsets = [0, 0], sizes = [16, 8], strides = [1, 1]} : vector<16x96xf32> to vector<16x8xf32>
    %11 = vector.shape_cast %10 : vector<16x8xf32> to vector<2x8x8xf32>
    %12 = vector.extract_strided_slice %9 {offsets = [0, 32], sizes = [16, 8], strides = [1, 1]} : vector<16x96xf32> to vector<16x8xf32>
    %13 = vector.shape_cast %12 : vector<16x8xf32> to vector<2x8x8xf32>
    %14 = vector.extract_strided_slice %9 {offsets = [0, 64], sizes = [16, 8], strides = [1, 1]} : vector<16x96xf32> to vector<16x8xf32>
    %15 = vector.shape_cast %14 : vector<16x8xf32> to vector<2x8x8xf32>
    %cst_10 = arith.constant dense<0.000000e+00> : vector<2x8x8xf32>
    %16 = tpu.matmul %11, %13, %cst_10 {dimension_numbers = #tpu.dot_dimension_numbers<[2], [2], [1], [1], [0, 0, 0, 1, 1, 1], [0], [0]>} : vector<2x8x8xf32>, vector<2x8x8xf32>, vector<2x8x8xf32> -> vector<2x8x8xf32>
    %cst_11 = arith.constant 0.353553385 : f32
    %17 = vector.broadcast %cst_11 : f32 to vector<2x8x8xf32>
    %18 = arith.mulf %16, %17 : vector<2x8x8xf32>
    %19 = arith.addf %18, %1 : vector<2x8x8xf32>
    %cst_12 = arith.constant dense<0xFF800000> : vector<2x8xf32>
    %20 = vector.multi_reduction <maximumf>, %19, %cst_12 [2] : vector<2x8x8xf32> to vector<2x8xf32>
    %21 = vector.shape_cast %20 : vector<2x8xf32> to vector<2x8x1xf32>
    %22 = vector.broadcast %21 : vector<2x8x1xf32> to vector<2x8x8xf32>
    %23 = arith.subf %19, %22 : vector<2x8x8xf32>
    %24 = math.exp %23 : vector<2x8x8xf32>
    %cst_13 = arith.constant dense<0.000000e+00> : vector<2x8xf32>
    %25 = vector.multi_reduction <add>, %24, %cst_13 [2] : vector<2x8x8xf32> to vector<2x8xf32>
    %26 = vector.shape_cast %25 : vector<2x8xf32> to vector<2x8x1xf32>
    %27 = vector.broadcast %26 : vector<2x8x1xf32> to vector<2x8x8xf32>
    %28 = arith.divf %24, %27 : vector<2x8x8xf32>
    %cst_14 = arith.constant dense<0.000000e+00> : vector<2x8x8xf32>
    %29 = tpu.matmul %28, %15, %cst_14 {dimension_numbers = #tpu.dot_dimension_numbers<[2], [1], [1], [2], [0, 0, 0, 1, 1, 2], [0], [0]>} : vector<2x8x8xf32>, vector<2x8x8xf32>, vector<2x8x8xf32> -> vector<2x8x8xf32>
    %30 = vector.shape_cast %29 : vector<2x8x8xf32> to vector<16x8xf32>
    %31 = vector.shape_cast %28 : vector<2x8x8xf32> to vector<16x8xf32>
    %32 = vector.extract_strided_slice %9 {offsets = [0, 8], sizes = [16, 8], strides = [1, 1]} : vector<16x96xf32> to vector<16x8xf32>
    %33 = vector.shape_cast %32 : vector<16x8xf32> to vector<2x8x8xf32>
    %34 = vector.extract_strided_slice %9 {offsets = [0, 40], sizes = [16, 8], strides = [1, 1]} : vector<16x96xf32> to vector<16x8xf32>
    %35 = vector.shape_cast %34 : vector<16x8xf32> to vector<2x8x8xf32>
    %36 = vector.extract_strided_slice %9 {offsets = [0, 72], sizes = [16, 8], strides = [1, 1]} : vector<16x96xf32> to vector<16x8xf32>
    %37 = vector.shape_cast %36 : vector<16x8xf32> to vector<2x8x8xf32>
    %cst_15 = arith.constant dense<0.000000e+00> : vector<2x8x8xf32>
    %38 = tpu.matmul %33, %35, %cst_15 {dimension_numbers = #tpu.dot_dimension_numbers<[2], [2], [1], [1], [0, 0, 0, 1, 1, 1], [0], [0]>} : vector<2x8x8xf32>, vector<2x8x8xf32>, vector<2x8x8xf32> -> vector<2x8x8xf32>
    %cst_16 = arith.constant 0.353553385 : f32
    %39 = vector.broadcast %cst_16 : f32 to vector<2x8x8xf32>
    %40 = arith.mulf %38, %39 : vector<2x8x8xf32>
    %41 = arith.addf %40, %1 : vector<2x8x8xf32>
    %cst_17 = arith.constant dense<0xFF800000> : vector<2x8xf32>
    %42 = vector.multi_reduction <maximumf>, %41, %cst_17 [2] : vector<2x8x8xf32> to vector<2x8xf32>
    %43 = vector.shape_cast %42 : vector<2x8xf32> to vector<2x8x1xf32>
    %44 = vector.broadcast %43 : vector<2x8x1xf32> to vector<2x8x8xf32>
    %45 = arith.subf %41, %44 : vector<2x8x8xf32>
    %46 = math.exp %45 : vector<2x8x8xf32>
    %cst_18 = arith.constant dense<0.000000e+00> : vector<2x8xf32>
    %47 = vector.multi_reduction <add>, %46, %cst_18 [2] : vector<2x8x8xf32> to vector<2x8xf32>
    %48 = vector.shape_cast %47 : vector<2x8xf32> to vector<2x8x1xf32>
    %49 = vector.broadcast %48 : vector<2x8x1xf32> to vector<2x8x8xf32>
    %50 = arith.divf %46, %49 : vector<2x8x8xf32>
    %cst_19 = arith.constant dense<0.000000e+00> : vector<2x8x8xf32>
    %51 = tpu.matmul %50, %37, %cst_19 {dimension_numbers = #tpu.dot_dimension_numbers<[2], [1], [1], [2], [0, 0, 0, 1, 1, 2], [0], [0]>} : vector<2x8x8xf32>, vector<2x8x8xf32>, vector<2x8x8xf32> -> vector<2x8x8xf32>
    %52 = vector.shape_cast %51 : vector<2x8x8xf32> to vector<16x8xf32>
    %53 = vector.shape_cast %50 : vector<2x8x8xf32> to vector<16x8xf32>
    %54 = vector.extract_strided_slice %9 {offsets = [0, 16], sizes = [16, 8], strides = [1, 1]} : vector<16x96xf32> to vector<16x8xf32>
    %55 = vector.shape_cast %54 : vector<16x8xf32> to vector<2x8x8xf32>
    %56 = vector.extract_strided_slice %9 {offsets = [0, 48], sizes = [16, 8], strides = [1, 1]} : vector<16x96xf32> to vector<16x8xf32>
    %57 = vector.shape_cast %56 : vector<16x8xf32> to vector<2x8x8xf32>
    %58 = vector.extract_strided_slice %9 {offsets = [0, 80], sizes = [16, 8], strides = [1, 1]} : vector<16x96xf32> to vector<16x8xf32>
    %59 = vector.shape_cast %58 : vector<16x8xf32> to vector<2x8x8xf32>
    %cst_20 = arith.constant dense<0.000000e+00> : vector<2x8x8xf32>
    %60 = tpu.matmul %55, %57, %cst_20 {dimension_numbers = #tpu.dot_dimension_numbers<[2], [2], [1], [1], [0, 0, 0, 1, 1, 1], [0], [0]>} : vector<2x8x8xf32>, vector<2x8x8xf32>, vector<2x8x8xf32> -> vector<2x8x8xf32>
    %cst_21 = arith.constant 0.353553385 : f32
    %61 = vector.broadcast %cst_21 : f32 to vector<2x8x8xf32>
    %62 = arith.mulf %60, %61 : vector<2x8x8xf32>
    %63 = arith.addf %62, %1 : vector<2x8x8xf32>
    %cst_22 = arith.constant dense<0xFF800000> : vector<2x8xf32>
    %64 = vector.multi_reduction <maximumf>, %63, %cst_22 [2] : vector<2x8x8xf32> to vector<2x8xf32>
    %65 = vector.shape_cast %64 : vector<2x8xf32> to vector<2x8x1xf32>
    %66 = vector.broadcast %65 : vector<2x8x1xf32> to vector<2x8x8xf32>
    %67 = arith.subf %63, %66 : vector<2x8x8xf32>
    %68 = math.exp %67 : vector<2x8x8xf32>
    %cst_23 = arith.constant dense<0.000000e+00> : vector<2x8xf32>
    %69 = vector.multi_reduction <add>, %68, %cst_23 [2] : vector<2x8x8xf32> to vector<2x8xf32>
    %70 = vector.shape_cast %69 : vector<2x8xf32> to vector<2x8x1xf32>
    %71 = vector.broadcast %70 : vector<2x8x1xf32> to vector<2x8x8xf32>
    %72 = arith.divf %68, %71 : vector<2x8x8xf32>
    %cst_24 = arith.constant dense<0.000000e+00> : vector<2x8x8xf32>
    %73 = tpu.matmul %72, %59, %cst_24 {dimension_numbers = #tpu.dot_dimension_numbers<[2], [1], [1], [2], [0, 0, 0, 1, 1, 2], [0], [0]>} : vector<2x8x8xf32>, vector<2x8x8xf32>, vector<2x8x8xf32> -> vector<2x8x8xf32>
    %74 = vector.shape_cast %73 : vector<2x8x8xf32> to vector<16x8xf32>
    %75 = vector.shape_cast %72 : vector<2x8x8xf32> to vector<16x8xf32>
    %76 = vector.extract_strided_slice %9 {offsets = [0, 24], sizes = [16, 8], strides = [1, 1]} : vector<16x96xf32> to vector<16x8xf32>
    %77 = vector.shape_cast %76 : vector<16x8xf32> to vector<2x8x8xf32>
    %78 = vector.extract_strided_slice %9 {offsets = [0, 56], sizes = [16, 8], strides = [1, 1]} : vector<16x96xf32> to vector<16x8xf32>
    %79 = vector.shape_cast %78 : vector<16x8xf32> to vector<2x8x8xf32>
    %80 = vector.extract_strided_slice %9 {offsets = [0, 88], sizes = [16, 8], strides = [1, 1]} : vector<16x96xf32> to vector<16x8xf32>
    %81 = vector.shape_cast %80 : vector<16x8xf32> to vector<2x8x8xf32>
    %cst_25 = arith.constant dense<0.000000e+00> : vector<2x8x8xf32>
    %82 = tpu.matmul %77, %79, %cst_25 {dimension_numbers = #tpu.dot_dimension_numbers<[2], [2], [1], [1], [0, 0, 0, 1, 1, 1], [0], [0]>} : vector<2x8x8xf32>, vector<2x8x8xf32>, vector<2x8x8xf32> -> vector<2x8x8xf32>
    %cst_26 = arith.constant 0.353553385 : f32
    %83 = vector.broadcast %cst_26 : f32 to vector<2x8x8xf32>
    %84 = arith.mulf %82, %83 : vector<2x8x8xf32>
    %85 = arith.addf %84, %1 : vector<2x8x8xf32>
    %cst_27 = arith.constant dense<0xFF800000> : vector<2x8xf32>
    %86 = vector.multi_reduction <maximumf>, %85, %cst_27 [2] : vector<2x8x8xf32> to vector<2x8xf32>
    %87 = vector.shape_cast %86 : vector<2x8xf32> to vector<2x8x1xf32>
    %88 = vector.broadcast %87 : vector<2x8x1xf32> to vector<2x8x8xf32>
    %89 = arith.subf %85, %88 : vector<2x8x8xf32>
    %90 = math.exp %89 : vector<2x8x8xf32>
    %cst_28 = arith.constant dense<0.000000e+00> : vector<2x8xf32>
    %91 = vector.multi_reduction <add>, %90, %cst_28 [2] : vector<2x8x8xf32> to vector<2x8xf32>
    %92 = vector.shape_cast %91 : vector<2x8xf32> to vector<2x8x1xf32>
    %93 = vector.broadcast %92 : vector<2x8x1xf32> to vector<2x8x8xf32>
    %94 = arith.divf %90, %93 : vector<2x8x8xf32>
    %cst_29 = arith.constant dense<0.000000e+00> : vector<2x8x8xf32>
    %95 = tpu.matmul %94, %81, %cst_29 {dimension_numbers = #tpu.dot_dimension_numbers<[2], [1], [1], [2], [0, 0, 0, 1, 1, 2], [0], [0]>} : vector<2x8x8xf32>, vector<2x8x8xf32>, vector<2x8x8xf32> -> vector<2x8x8xf32>
    %96 = vector.shape_cast %95 : vector<2x8x8xf32> to vector<16x8xf32>
    %97 = vector.shape_cast %94 : vector<2x8x8xf32> to vector<16x8xf32>
    %98 = tpu.concatenate %30, %52, %74, %96 in 1 : vector<16x8xf32>, vector<16x8xf32>, vector<16x8xf32>, vector<16x8xf32> -> vector<16x32xf32>
    %99 = tpu.concatenate %31, %53, %75, %97 in 1 : vector<16x8xf32>, vector<16x8xf32>, vector<16x8xf32>, vector<16x8xf32> -> vector<16x32xf32>
    %c0_30 = arith.constant 0 : index
    %c0_31 = arith.constant 0 : index
    %c0_32 = arith.constant 0 : index
    %100 = vector.load %arg17[%c0_30, %c0_31, %c0_32] : memref<2x16x32xf32, #tpu.memory_space<vmem>>, vector<1x16x32xf32>
    %101 = vector.shape_cast %100 : vector<1x16x32xf32> to vector<16x32xf32>
    %102 = vector.shape_cast %99 : vector<16x32xf32> to vector<1x16x32xf32>
    tpu.vector_store %arg17[%c0_30, %c0_31, %c0_32], %102 {strides = array<i32>} : memref<2x16x32xf32, #tpu.memory_space<vmem>>, vector<1x16x32xf32>,
    %103 = arith.truncf %98 : vector<16x32xf32> to vector<16x32xbf16>
    %c0_33 = arith.constant 0 : index
    %c0_34 = arith.constant 0 : index
    %c0_35 = arith.constant 0 : index
    %104 = vector.load %arg4[%c0_33, %c0_34, %c0_35] : memref<2x32x32xbf16, #tpu.memory_space<vmem>>, vector<1x32x32xbf16>
    %105 = vector.shape_cast %104 : vector<1x32x32xbf16> to vector<32x32xbf16>
    %cst_36 = arith.constant dense<0.000000e+00> : vector<16x32xf32>
    %106 = tpu.matmul %103, %105, %cst_36 {dimension_numbers = #tpu.dot_dimension_numbers<[1], [0], [0], [1], [0, 0, 1, 1], [], []>} : vector<16x32xbf16>, vector<32x32xbf16>, vector<16x32xf32> -> vector<16x32xf32>
    %c0_37 = arith.constant 0 : index
    %c0_38 = arith.constant 0 : index
    %c0_39 = arith.constant 0 : index
    %107 = vector.load %arg5[%c0_37, %c0_38, %c0_39] : memref<2x1x32xf32, #tpu.memory_space<vmem>>, vector<1x1x32xf32>
    %108 = vector.shape_cast %107 : vector<1x1x32xf32> to vector<1x32xf32>
    %109 = vector.broadcast %108 : vector<1x32xf32> to vector<16x32xf32>
    %110 = arith.addf %106, %109 : vector<16x32xf32>
    %111 = arith.addf %110, %0 : vector<16x32xf32>
    %c0_40 = arith.constant 0 : index
    %c0_41 = arith.constant 0 : index
    %c0_42 = arith.constant 0 : index
    %112 = vector.load %arg6[%c0_40, %c0_41, %c0_42] : memref<2x1x32xf32, #tpu.memory_space<vmem>>, vector<1x1x32xf32>
    %113 = vector.shape_cast %112 : vector<1x1x32xf32> to vector<1x32xf32>
    %c0_43 = arith.constant 0 : index
    %c0_44 = arith.constant 0 : index
    %c0_45 = arith.constant 0 : index
    %114 = vector.load %arg7[%c0_43, %c0_44, %c0_45] : memref<2x1x32xf32, #tpu.memory_space<vmem>>, vector<1x1x32xf32>
    %115 = vector.shape_cast %114 : vector<1x1x32xf32> to vector<1x32xf32>
    %cst_46 = arith.constant dense<0.000000e+00> : vector<16xf32>
    %116 = vector.multi_reduction <add>, %111, %cst_46 [1] : vector<16x32xf32> to vector<16xf32>
    %117 = vector.shape_cast %116 : vector<16xf32> to vector<16x1xf32>
    %cst_47 = arith.constant 3.200000e+01 : f32
    %118 = vector.broadcast %cst_47 : f32 to vector<16x1xf32>
    %119 = arith.divf %117, %118 : vector<16x1xf32>
    %120 = vector.broadcast %119 : vector<16x1xf32> to vector<16x32xf32>
    %121 = arith.subf %111, %120 : vector<16x32xf32>
    %122 = arith.mulf %121, %121 : vector<16x32xf32>
    %cst_48 = arith.constant dense<0.000000e+00> : vector<16xf32>
    %123 = vector.multi_reduction <add>, %122, %cst_48 [1] : vector<16x32xf32> to vector<16xf32>
    %124 = vector.shape_cast %123 : vector<16xf32> to vector<16x1xf32>
    %cst_49 = arith.constant 3.200000e+01 : f32
    %125 = vector.broadcast %cst_49 : f32 to vector<16x1xf32>
    %126 = arith.divf %124, %125 : vector<16x1xf32>
    %127 = vector.broadcast %119 : vector<16x1xf32> to vector<16x32xf32>
    %128 = arith.subf %111, %127 : vector<16x32xf32>
    %cst_50 = arith.constant 9.99999974E-6 : f32
    %129 = vector.broadcast %cst_50 : f32 to vector<16x1xf32>
    %130 = arith.addf %126, %129 : vector<16x1xf32>
    %131 = math.rsqrt %130 : vector<16x1xf32>
    %132 = vector.broadcast %131 : vector<16x1xf32> to vector<16x32xf32>
    %133 = arith.mulf %128, %132 : vector<16x32xf32>
    %134 = vector.broadcast %113 : vector<1x32xf32> to vector<16x32xf32>
    %135 = arith.mulf %133, %134 : vector<16x32xf32>
    %136 = vector.broadcast %115 : vector<1x32xf32> to vector<16x32xf32>
    %137 = arith.addf %135, %136 : vector<16x32xf32>
    %138 = arith.truncf %137 : vector<16x32xf32> to vector<16x32xbf16>
    %c0_51 = arith.constant 0 : index
    %c0_52 = arith.constant 0 : index
    %c0_53 = arith.constant 0 : index
    %139 = vector.load %arg8[%c0_51, %c0_52, %c0_53] : memref<2x32x128xbf16, #tpu.memory_space<vmem>>, vector<1x32x128xbf16>
    %140 = vector.shape_cast %139 : vector<1x32x128xbf16> to vector<32x128xbf16>
    %cst_54 = arith.constant dense<0.000000e+00> : vector<16x128xf32>
    %141 = tpu.matmul %138, %140, %cst_54 {dimension_numbers = #tpu.dot_dimension_numbers<[1], [0], [0], [1], [0, 0, 1, 1], [], []>} : vector<16x32xbf16>, vector<32x128xbf16>, vector<16x128xf32> -> vector<16x128xf32>
    %c0_55 = arith.constant 0 : index
    %c0_56 = arith.constant 0 : index
    %c0_57 = arith.constant 0 : index
    %142 = vector.load %arg9[%c0_55, %c0_56, %c0_57] : memref<2x1x128xf32, #tpu.memory_space<vmem>>, vector<1x1x128xf32>
    %143 = vector.shape_cast %142 : vector<1x1x128xf32> to vector<1x128xf32>
    %144 = vector.broadcast %143 : vector<1x128xf32> to vector<16x128xf32>
    %145 = arith.addf %141, %144 : vector<16x128xf32>
    %cst_58 = arith.constant 0.000000e+00 : f32
    %146 = vector.broadcast %cst_58 : f32 to vector<16x128xf32>
    %147 = arith.maximumf %145, %146 : vector<16x128xf32>
    %148 = arith.truncf %147 : vector<16x128xf32> to vector<16x128xbf16>
    %c0_59 = arith.constant 0 : index
    %c0_60 = arith.constant 0 : index
    %c0_61 = arith.constant 0 : index
    %149 = vector.load %arg10[%c0_59, %c0_60, %c0_61] : memref<2x128x32xbf16, #tpu.memory_space<vmem>>, vector<1x128x32xbf16>
    %150 = vector.shape_cast %149 : vector<1x128x32xbf16> to vector<128x32xbf16>
    %cst_62 = arith.constant dense<0.000000e+00> : vector<16x32xf32>
    %151 = tpu.matmul %148, %150, %cst_62 {dimension_numbers = #tpu.dot_dimension_numbers<[1], [0], [0], [1], [0, 0, 1, 1], [], []>} : vector<16x128xbf16>, vector<128x32xbf16>, vector<16x32xf32> -> vector<16x32xf32>
    %c0_63 = arith.constant 0 : index
    %c0_64 = arith.constant 0 : index
    %c0_65 = arith.constant 0 : index
    %152 = vector.load %arg11[%c0_63, %c0_64, %c0_65] : memref<2x1x32xf32, #tpu.memory_space<vmem>>, vector<1x1x32xf32>
    %153 = vector.shape_cast %152 : vector<1x1x32xf32> to vector<1x32xf32>
    %154 = vector.broadcast %153 : vector<1x32xf32> to vector<16x32xf32>
    %155 = arith.addf %151, %154 : vector<16x32xf32>
    %156 = arith.addf %155, %137 : vector<16x32xf32>
    %c0_66 = arith.constant 0 : index
    %c0_67 = arith.constant 0 : index
    %c0_68 = arith.constant 0 : index
    %157 = vector.load %arg12[%c0_66, %c0_67, %c0_68] : memref<2x1x32xf32, #tpu.memory_space<vmem>>, vector<1x1x32xf32>
    %158 = vector.shape_cast %157 : vector<1x1x32xf32> to vector<1x32xf32>
    %c0_69 = arith.constant 0 : index
    %c0_70 = arith.constant 0 : index
    %c0_71 = arith.constant 0 : index
    %159 = vector.load %arg13[%c0_69, %c0_70, %c0_71] : memref<2x1x32xf32, #tpu.memory_space<vmem>>, vector<1x1x32xf32>
    %160 = vector.shape_cast %159 : vector<1x1x32xf32> to vector<1x32xf32>
    %cst_72 = arith.constant dense<0.000000e+00> : vector<16xf32>
    %161 = vector.multi_reduction <add>, %156, %cst_72 [1] : vector<16x32xf32> to vector<16xf32>
    %162 = vector.shape_cast %161 : vector<16xf32> to vector<16x1xf32>
    %cst_73 = arith.constant 3.200000e+01 : f32
    %163 = vector.broadcast %cst_73 : f32 to vector<16x1xf32>
    %164 = arith.divf %162, %163 : vector<16x1xf32>
    %165 = vector.broadcast %164 : vector<16x1xf32> to vector<16x32xf32>
    %166 = arith.subf %156, %165 : vector<16x32xf32>
    %167 = arith.mulf %166, %166 : vector<16x32xf32>
    %cst_74 = arith.constant dense<0.000000e+00> : vector<16xf32>
    %168 = vector.multi_reduction <add>, %167, %cst_74 [1] : vector<16x32xf32> to vector<16xf32>
    %169 = vector.shape_cast %168 : vector<16xf32> to vector<16x1xf32>
    %cst_75 = arith.constant 3.200000e+01 : f32
    %170 = vector.broadcast %cst_75 : f32 to vector<16x1xf32>
    %171 = arith.divf %169, %170 : vector<16x1xf32>
    %172 = vector.broadcast %164 : vector<16x1xf32> to vector<16x32xf32>
    %173 = arith.subf %156, %172 : vector<16x32xf32>
    %cst_76 = arith.constant 9.99999974E-6 : f32
    %174 = vector.broadcast %cst_76 : f32 to vector<16x1xf32>
    %175 = arith.addf %171, %174 : vector<16x1xf32>
    %176 = math.rsqrt %175 : vector<16x1xf32>
    %177 = vector.broadcast %176 : vector<16x1xf32> to vector<16x32xf32>
    %178 = arith.mulf %173, %177 : vector<16x32xf32>
    %179 = vector.broadcast %158 : vector<1x32xf32> to vector<16x32xf32>
    %180 = arith.mulf %178, %179 : vector<16x32xf32>
    %181 = vector.broadcast %160 : vector<1x32xf32> to vector<16x32xf32>
    %182 = arith.addf %180, %181 : vector<16x32xf32>
    %183 = arith.truncf %182 : vector<16x32xf32> to vector<16x32xbf16>
    %c1 = arith.constant 1 : index
    %c0_77 = arith.constant 0 : index
    %c0_78 = arith.constant 0 : index
    %184 = vector.load %arg2[%c1, %c0_77, %c0_78] : memref<2x32x96xbf16, #tpu.memory_space<vmem>>, vector<1x32x96xbf16>
    %185 = vector.shape_cast %184 : vector<1x32x96xbf16> to vector<32x96xbf16>
    %cst_79 = arith.constant dense<0.000000e+00> : vector<16x96xf32>
    %186 = tpu.matmul %183, %185, %cst_79 {dimension_numbers = #tpu.dot_dimension_numbers<[1], [0], [0], [1], [0, 0, 1, 1], [], []>} : vector<16x32xbf16>, vector<32x96xbf16>, vector<16x96xf32> -> vector<16x96xf32>
    %c1_80 = arith.constant 1 : index
    %c0_81 = arith.constant 0 : index
    %c0_82 = arith.constant 0 : index
    %187 = vector.load %arg3[%c1_80, %c0_81, %c0_82] : memref<2x1x96xf32, #tpu.memory_space<vmem>>, vector<1x1x96xf32>
    %188 = vector.shape_cast %187 : vector<1x1x96xf32> to vector<1x96xf32>
    %189 = vector.broadcast %188 : vector<1x96xf32> to vector<16x96xf32>
    %190 = arith.addf %186, %189 : vector<16x96xf32>
    %191 = vector.extract_strided_slice %190 {offsets = [0, 0], sizes = [16, 8], strides = [1, 1]} : vector<16x96xf32> to vector<16x8xf32>
    %192 = vector.shape_cast %191 : vector<16x8xf32> to vector<2x8x8xf32>
    %193 = vector.extract_strided_slice %190 {offsets = [0, 32], sizes = [16, 8], strides = [1, 1]} : vector<16x96xf32> to vector<16x8xf32>
    %194 = vector.shape_cast %193 : vector<16x8xf32> to vector<2x8x8xf32>
    %195 = vector.extract_strided_slice %190 {offsets = [0, 64], sizes = [16, 8], strides = [1, 1]} : vector<16x96xf32> to vector<16x8xf32>
    %196 = vector.shape_cast %195 : vector<16x8xf32> to vector<2x8x8xf32>
    %cst_83 = arith.constant dense<0.000000e+00> : vector<2x8x8xf32>
    %197 = tpu.matmul %192, %194, %cst_83 {dimension_numbers = #tpu.dot_dimension_numbers<[2], [2], [1], [1], [0, 0, 0, 1, 1, 1], [0], [0]>} : vector<2x8x8xf32>, vector<2x8x8xf32>, vector<2x8x8xf32> -> vector<2x8x8xf32>
    %cst_84 = arith.constant 0.353553385 : f32
    %198 = vector.broadcast %cst_84 : f32 to vector<2x8x8xf32>
    %199 = arith.mulf %197, %198 : vector<2x8x8xf32>
    %200 = arith.addf %199, %1 : vector<2x8x8xf32>
    %cst_85 = arith.constant dense<0xFF800000> : vector<2x8xf32>
    %201 = vector.multi_reduction <maximumf>, %200, %cst_85 [2] : vector<2x8x8xf32> to vector<2x8xf32>
    %202 = vector.shape_cast %201 : vector<2x8xf32> to vector<2x8x1xf32>
    %203 = vector.broadcast %202 : vector<2x8x1xf32> to vector<2x8x8xf32>
    %204 = arith.subf %200, %203 : vector<2x8x8xf32>
    %205 = math.exp %204 : vector<2x8x8xf32>
    %cst_86 = arith.constant dense<0.000000e+00> : vector<2x8xf32>
    %206 = vector.multi_reduction <add>, %205, %cst_86 [2] : vector<2x8x8xf32> to vector<2x8xf32>
    %207 = vector.shape_cast %206 : vector<2x8xf32> to vector<2x8x1xf32>
    %208 = vector.broadcast %207 : vector<2x8x1xf32> to vector<2x8x8xf32>
    %209 = arith.divf %205, %208 : vector<2x8x8xf32>
    %cst_87 = arith.constant dense<0.000000e+00> : vector<2x8x8xf32>
    %210 = tpu.matmul %209, %196, %cst_87 {dimension_numbers = #tpu.dot_dimension_numbers<[2], [1], [1], [2], [0, 0, 0, 1, 1, 2], [0], [0]>} : vector<2x8x8xf32>, vector<2x8x8xf32>, vector<2x8x8xf32> -> vector<2x8x8xf32>
    %211 = vector.shape_cast %210 : vector<2x8x8xf32> to vector<16x8xf32>
    %212 = vector.shape_cast %209 : vector<2x8x8xf32> to vector<16x8xf32>
    %213 = vector.extract_strided_slice %190 {offsets = [0, 8], sizes = [16, 8], strides = [1, 1]} : vector<16x96xf32> to vector<16x8xf32>
    %214 = vector.shape_cast %213 : vector<16x8xf32> to vector<2x8x8xf32>
    %215 = vector.extract_strided_slice %190 {offsets = [0, 40], sizes = [16, 8], strides = [1, 1]} : vector<16x96xf32> to vector<16x8xf32>
    %216 = vector.shape_cast %215 : vector<16x8xf32> to vector<2x8x8xf32>
    %217 = vector.extract_strided_slice %190 {offsets = [0, 72], sizes = [16, 8], strides = [1, 1]} : vector<16x96xf32> to vector<16x8xf32>
    %218 = vector.shape_cast %217 : vector<16x8xf32> to vector<2x8x8xf32>
    %cst_88 = arith.constant dense<0.000000e+00> : vector<2x8x8xf32>
    %219 = tpu.matmul %214, %216, %cst_88 {dimension_numbers = #tpu.dot_dimension_numbers<[2], [2], [1], [1], [0, 0, 0, 1, 1, 1], [0], [0]>} : vector<2x8x8xf32>, vector<2x8x8xf32>, vector<2x8x8xf32> -> vector<2x8x8xf32>
    %cst_89 = arith.constant 0.353553385 : f32
    %220 = vector.broadcast %cst_89 : f32 to vector<2x8x8xf32>
    %221 = arith.mulf %219, %220 : vector<2x8x8xf32>
    %222 = arith.addf %221, %1 : vector<2x8x8xf32>
    %cst_90 = arith.constant dense<0xFF800000> : vector<2x8xf32>
    %223 = vector.multi_reduction <maximumf>, %222, %cst_90 [2] : vector<2x8x8xf32> to vector<2x8xf32>
    %224 = vector.shape_cast %223 : vector<2x8xf32> to vector<2x8x1xf32>
    %225 = vector.broadcast %224 : vector<2x8x1xf32> to vector<2x8x8xf32>
    %226 = arith.subf %222, %225 : vector<2x8x8xf32>
    %227 = math.exp %226 : vector<2x8x8xf32>
    %cst_91 = arith.constant dense<0.000000e+00> : vector<2x8xf32>
    %228 = vector.multi_reduction <add>, %227, %cst_91 [2] : vector<2x8x8xf32> to vector<2x8xf32>
    %229 = vector.shape_cast %228 : vector<2x8xf32> to vector<2x8x1xf32>
    %230 = vector.broadcast %229 : vector<2x8x1xf32> to vector<2x8x8xf32>
    %231 = arith.divf %227, %230 : vector<2x8x8xf32>
    %cst_92 = arith.constant dense<0.000000e+00> : vector<2x8x8xf32>
    %232 = tpu.matmul %231, %218, %cst_92 {dimension_numbers = #tpu.dot_dimension_numbers<[2], [1], [1], [2], [0, 0, 0, 1, 1, 2], [0], [0]>} : vector<2x8x8xf32>, vector<2x8x8xf32>, vector<2x8x8xf32> -> vector<2x8x8xf32>
    %233 = vector.shape_cast %232 : vector<2x8x8xf32> to vector<16x8xf32>
    %234 = vector.shape_cast %231 : vector<2x8x8xf32> to vector<16x8xf32>
    %235 = vector.extract_strided_slice %190 {offsets = [0, 16], sizes = [16, 8], strides = [1, 1]} : vector<16x96xf32> to vector<16x8xf32>
    %236 = vector.shape_cast %235 : vector<16x8xf32> to vector<2x8x8xf32>
    %237 = vector.extract_strided_slice %190 {offsets = [0, 48], sizes = [16, 8], strides = [1, 1]} : vector<16x96xf32> to vector<16x8xf32>
    %238 = vector.shape_cast %237 : vector<16x8xf32> to vector<2x8x8xf32>
    %239 = vector.extract_strided_slice %190 {offsets = [0, 80], sizes = [16, 8], strides = [1, 1]} : vector<16x96xf32> to vector<16x8xf32>
    %240 = vector.shape_cast %239 : vector<16x8xf32> to vector<2x8x8xf32>
    %cst_93 = arith.constant dense<0.000000e+00> : vector<2x8x8xf32>
    %241 = tpu.matmul %236, %238, %cst_93 {dimension_numbers = #tpu.dot_dimension_numbers<[2], [2], [1], [1], [0, 0, 0, 1, 1, 1], [0], [0]>} : vector<2x8x8xf32>, vector<2x8x8xf32>, vector<2x8x8xf32> -> vector<2x8x8xf32>
    %cst_94 = arith.constant 0.353553385 : f32
    %242 = vector.broadcast %cst_94 : f32 to vector<2x8x8xf32>
    %243 = arith.mulf %241, %242 : vector<2x8x8xf32>
    %244 = arith.addf %243, %1 : vector<2x8x8xf32>
    %cst_95 = arith.constant dense<0xFF800000> : vector<2x8xf32>
    %245 = vector.multi_reduction <maximumf>, %244, %cst_95 [2] : vector<2x8x8xf32> to vector<2x8xf32>
    %246 = vector.shape_cast %245 : vector<2x8xf32> to vector<2x8x1xf32>
    %247 = vector.broadcast %246 : vector<2x8x1xf32> to vector<2x8x8xf32>
    %248 = arith.subf %244, %247 : vector<2x8x8xf32>
    %249 = math.exp %248 : vector<2x8x8xf32>
    %cst_96 = arith.constant dense<0.000000e+00> : vector<2x8xf32>
    %250 = vector.multi_reduction <add>, %249, %cst_96 [2] : vector<2x8x8xf32> to vector<2x8xf32>
    %251 = vector.shape_cast %250 : vector<2x8xf32> to vector<2x8x1xf32>
    %252 = vector.broadcast %251 : vector<2x8x1xf32> to vector<2x8x8xf32>
    %253 = arith.divf %249, %252 : vector<2x8x8xf32>
    %cst_97 = arith.constant dense<0.000000e+00> : vector<2x8x8xf32>
    %254 = tpu.matmul %253, %240, %cst_97 {dimension_numbers = #tpu.dot_dimension_numbers<[2], [1], [1], [2], [0, 0, 0, 1, 1, 2], [0], [0]>} : vector<2x8x8xf32>, vector<2x8x8xf32>, vector<2x8x8xf32> -> vector<2x8x8xf32>
    %255 = vector.shape_cast %254 : vector<2x8x8xf32> to vector<16x8xf32>
    %256 = vector.shape_cast %253 : vector<2x8x8xf32> to vector<16x8xf32>
    %257 = vector.extract_strided_slice %190 {offsets = [0, 24], sizes = [16, 8], strides = [1, 1]} : vector<16x96xf32> to vector<16x8xf32>
    %258 = vector.shape_cast %257 : vector<16x8xf32> to vector<2x8x8xf32>
    %259 = vector.extract_strided_slice %190 {offsets = [0, 56], sizes = [16, 8], strides = [1, 1]} : vector<16x96xf32> to vector<16x8xf32>
    %260 = vector.shape_cast %259 : vector<16x8xf32> to vector<2x8x8xf32>
    %261 = vector.extract_strided_slice %190 {offsets = [0, 88], sizes = [16, 8], strides = [1, 1]} : vector<16x96xf32> to vector<16x8xf32>
    %262 = vector.shape_cast %261 : vector<16x8xf32> to vector<2x8x8xf32>
    %cst_98 = arith.constant dense<0.000000e+00> : vector<2x8x8xf32>
    %263 = tpu.matmul %258, %260, %cst_98 {dimension_numbers = #tpu.dot_dimension_numbers<[2], [2], [1], [1], [0, 0, 0, 1, 1, 1], [0], [0]>} : vector<2x8x8xf32>, vector<2x8x8xf32>, vector<2x8x8xf32> -> vector<2x8x8xf32>
    %cst_99 = arith.constant 0.353553385 : f32
    %264 = vector.broadcast %cst_99 : f32 to vector<2x8x8xf32>
    %265 = arith.mulf %263, %264 : vector<2x8x8xf32>
    %266 = arith.addf %265, %1 : vector<2x8x8xf32>
    %cst_100 = arith.constant dense<0xFF800000> : vector<2x8xf32>
    %267 = vector.multi_reduction <maximumf>, %266, %cst_100 [2] : vector<2x8x8xf32> to vector<2x8xf32>
    %268 = vector.shape_cast %267 : vector<2x8xf32> to vector<2x8x1xf32>
    %269 = vector.broadcast %268 : vector<2x8x1xf32> to vector<2x8x8xf32>
    %270 = arith.subf %266, %269 : vector<2x8x8xf32>
    %271 = math.exp %270 : vector<2x8x8xf32>
    %cst_101 = arith.constant dense<0.000000e+00> : vector<2x8xf32>
    %272 = vector.multi_reduction <add>, %271, %cst_101 [2] : vector<2x8x8xf32> to vector<2x8xf32>
    %273 = vector.shape_cast %272 : vector<2x8xf32> to vector<2x8x1xf32>
    %274 = vector.broadcast %273 : vector<2x8x1xf32> to vector<2x8x8xf32>
    %275 = arith.divf %271, %274 : vector<2x8x8xf32>
    %cst_102 = arith.constant dense<0.000000e+00> : vector<2x8x8xf32>
    %276 = tpu.matmul %275, %262, %cst_102 {dimension_numbers = #tpu.dot_dimension_numbers<[2], [1], [1], [2], [0, 0, 0, 1, 1, 2], [0], [0]>} : vector<2x8x8xf32>, vector<2x8x8xf32>, vector<2x8x8xf32> -> vector<2x8x8xf32>
    %277 = vector.shape_cast %276 : vector<2x8x8xf32> to vector<16x8xf32>
    %278 = vector.shape_cast %275 : vector<2x8x8xf32> to vector<16x8xf32>
    %279 = tpu.concatenate %211, %233, %255, %277 in 1 : vector<16x8xf32>, vector<16x8xf32>, vector<16x8xf32>, vector<16x8xf32> -> vector<16x32xf32>
    %280 = tpu.concatenate %212, %234, %256, %278 in 1 : vector<16x8xf32>, vector<16x8xf32>, vector<16x8xf32>, vector<16x8xf32> -> vector<16x32xf32>
    %c1_103 = arith.constant 1 : index
    %c0_104 = arith.constant 0 : index
    %c0_105 = arith.constant 0 : index
    %281 = vector.load %arg17[%c1_103, %c0_104, %c0_105] : memref<2x16x32xf32, #tpu.memory_space<vmem>>, vector<1x16x32xf32>
    %282 = vector.shape_cast %281 : vector<1x16x32xf32> to vector<16x32xf32>
    %283 = vector.shape_cast %280 : vector<16x32xf32> to vector<1x16x32xf32>
    tpu.vector_store %arg17[%c1_103, %c0_104, %c0_105], %283 {strides = array<i32>} : memref<2x16x32xf32, #tpu.memory_space<vmem>>, vector<1x16x32xf32>,
    %284 = arith.truncf %279 : vector<16x32xf32> to vector<16x32xbf16>
    %c1_106 = arith.constant 1 : index
    %c0_107 = arith.constant 0 : index
    %c0_108 = arith.constant 0 : index
    %285 = vector.load %arg4[%c1_106, %c0_107, %c0_108] : memref<2x32x32xbf16, #tpu.memory_space<vmem>>, vector<1x32x32xbf16>
    %286 = vector.shape_cast %285 : vector<1x32x32xbf16> to vector<32x32xbf16>
    %cst_109 = arith.constant dense<0.000000e+00> : vector<16x32xf32>
    %287 = tpu.matmul %284, %286, %cst_109 {dimension_numbers = #tpu.dot_dimension_numbers<[1], [0], [0], [1], [0, 0, 1, 1], [], []>} : vector<16x32xbf16>, vector<32x32xbf16>, vector<16x32xf32> -> vector<16x32xf32>
    %c1_110 = arith.constant 1 : index
    %c0_111 = arith.constant 0 : index
    %c0_112 = arith.constant 0 : index
    %288 = vector.load %arg5[%c1_110, %c0_111, %c0_112] : memref<2x1x32xf32, #tpu.memory_space<vmem>>, vector<1x1x32xf32>
    %289 = vector.shape_cast %288 : vector<1x1x32xf32> to vector<1x32xf32>
    %290 = vector.broadcast %289 : vector<1x32xf32> to vector<16x32xf32>
    %291 = arith.addf %287, %290 : vector<16x32xf32>
    %292 = arith.addf %291, %182 : vector<16x32xf32>
    %c1_113 = arith.constant 1 : index
    %c0_114 = arith.constant 0 : index
    %c0_115 = arith.constant 0 : index
    %293 = vector.load %arg6[%c1_113, %c0_114, %c0_115] : memref<2x1x32xf32, #tpu.memory_space<vmem>>, vector<1x1x32xf32>
    %294 = vector.shape_cast %293 : vector<1x1x32xf32> to vector<1x32xf32>
    %c1_116 = arith.constant 1 : index
    %c0_117 = arith.constant 0 : index
    %c0_118 = arith.constant 0 : index
    %295 = vector.load %arg7[%c1_116, %c0_117, %c0_118] : memref<2x1x32xf32, #tpu.memory_space<vmem>>, vector<1x1x32xf32>
    %296 = vector.shape_cast %295 : vector<1x1x32xf32> to vector<1x32xf32>
    %cst_119 = arith.constant dense<0.000000e+00> : vector<16xf32>
    %297 = vector.multi_reduction <add>, %292, %cst_119 [1] : vector<16x32xf32> to vector<16xf32>
    %298 = vector.shape_cast %297 : vector<16xf32> to vector<16x1xf32>
    %cst_120 = arith.constant 3.200000e+01 : f32
    %299 = vector.broadcast %cst_120 : f32 to vector<16x1xf32>
    %300 = arith.divf %298, %299 : vector<16x1xf32>
    %301 = vector.broadcast %300 : vector<16x1xf32> to vector<16x32xf32>
    %302 = arith.subf %292, %301 : vector<16x32xf32>
    %303 = arith.mulf %302, %302 : vector<16x32xf32>
    %cst_121 = arith.constant dense<0.000000e+00> : vector<16xf32>
    %304 = vector.multi_reduction <add>, %303, %cst_121 [1] : vector<16x32xf32> to vector<16xf32>
    %305 = vector.shape_cast %304 : vector<16xf32> to vector<16x1xf32>
    %cst_122 = arith.constant 3.200000e+01 : f32
    %306 = vector.broadcast %cst_122 : f32 to vector<16x1xf32>
    %307 = arith.divf %305, %306 : vector<16x1xf32>
    %308 = vector.broadcast %300 : vector<16x1xf32> to vector<16x32xf32>
    %309 = arith.subf %292, %308 : vector<16x32xf32>
    %cst_123 = arith.constant 9.99999974E-6 : f32
    %310 = vector.broadcast %cst_123 : f32 to vector<16x1xf32>
    %311 = arith.addf %307, %310 : vector<16x1xf32>
    %312 = math.rsqrt %311 : vector<16x1xf32>
    %313 = vector.broadcast %312 : vector<16x1xf32> to vector<16x32xf32>
    %314 = arith.mulf %309, %313 : vector<16x32xf32>
    %315 = vector.broadcast %294 : vector<1x32xf32> to vector<16x32xf32>
    %316 = arith.mulf %314, %315 : vector<16x32xf32>
    %317 = vector.broadcast %296 : vector<1x32xf32> to vector<16x32xf32>
    %318 = arith.addf %316, %317 : vector<16x32xf32>
    %319 = arith.truncf %318 : vector<16x32xf32> to vector<16x32xbf16>
    %c1_124 = arith.constant 1 : index
    %c0_125 = arith.constant 0 : index
    %c0_126 = arith.constant 0 : index
    %320 = vector.load %arg8[%c1_124, %c0_125, %c0_126] : memref<2x32x128xbf16, #tpu.memory_space<vmem>>, vector<1x32x128xbf16>
    %321 = vector.shape_cast %320 : vector<1x32x128xbf16> to vector<32x128xbf16>
    %cst_127 = arith.constant dense<0.000000e+00> : vector<16x128xf32>
    %322 = tpu.matmul %319, %321, %cst_127 {dimension_numbers = #tpu.dot_dimension_numbers<[1], [0], [0], [1], [0, 0, 1, 1], [], []>} : vector<16x32xbf16>, vector<32x128xbf16>, vector<16x128xf32> -> vector<16x128xf32>
    %c1_128 = arith.constant 1 : index
    %c0_129 = arith.constant 0 : index
    %c0_130 = arith.constant 0 : index
    %323 = vector.load %arg9[%c1_128, %c0_129, %c0_130] : memref<2x1x128xf32, #tpu.memory_space<vmem>>, vector<1x1x128xf32>
    %324 = vector.shape_cast %323 : vector<1x1x128xf32> to vector<1x128xf32>
    %325 = vector.broadcast %324 : vector<1x128xf32> to vector<16x128xf32>
    %326 = arith.addf %322, %325 : vector<16x128xf32>
    %cst_131 = arith.constant 0.000000e+00 : f32
    %327 = vector.broadcast %cst_131 : f32 to vector<16x128xf32>
    %328 = arith.maximumf %326, %327 : vector<16x128xf32>
    %329 = arith.truncf %328 : vector<16x128xf32> to vector<16x128xbf16>
    %c1_132 = arith.constant 1 : index
    %c0_133 = arith.constant 0 : index
    %c0_134 = arith.constant 0 : index
    %330 = vector.load %arg10[%c1_132, %c0_133, %c0_134] : memref<2x128x32xbf16, #tpu.memory_space<vmem>>, vector<1x128x32xbf16>
    %331 = vector.shape_cast %330 : vector<1x128x32xbf16> to vector<128x32xbf16>
    %cst_135 = arith.constant dense<0.000000e+00> : vector<16x32xf32>
    %332 = tpu.matmul %329, %331, %cst_135 {dimension_numbers = #tpu.dot_dimension_numbers<[1], [0], [0], [1], [0, 0, 1, 1], [], []>} : vector<16x128xbf16>, vector<128x32xbf16>, vector<16x32xf32> -> vector<16x32xf32>
    %c1_136 = arith.constant 1 : index
    %c0_137 = arith.constant 0 : index
    %c0_138 = arith.constant 0 : index
    %333 = vector.load %arg11[%c1_136, %c0_137, %c0_138] : memref<2x1x32xf32, #tpu.memory_space<vmem>>, vector<1x1x32xf32>
    %334 = vector.shape_cast %333 : vector<1x1x32xf32> to vector<1x32xf32>
    %335 = vector.broadcast %334 : vector<1x32xf32> to vector<16x32xf32>
    %336 = arith.addf %332, %335 : vector<16x32xf32>
    %337 = arith.addf %336, %318 : vector<16x32xf32>
    %c1_139 = arith.constant 1 : index
    %c0_140 = arith.constant 0 : index
    %c0_141 = arith.constant 0 : index
    %338 = vector.load %arg12[%c1_139, %c0_140, %c0_141] : memref<2x1x32xf32, #tpu.memory_space<vmem>>, vector<1x1x32xf32>
    %339 = vector.shape_cast %338 : vector<1x1x32xf32> to vector<1x32xf32>
    %c1_142 = arith.constant 1 : index
    %c0_143 = arith.constant 0 : index
    %c0_144 = arith.constant 0 : index
    %340 = vector.load %arg13[%c1_142, %c0_143, %c0_144] : memref<2x1x32xf32, #tpu.memory_space<vmem>>, vector<1x1x32xf32>
    %341 = vector.shape_cast %340 : vector<1x1x32xf32> to vector<1x32xf32>
    %cst_145 = arith.constant dense<0.000000e+00> : vector<16xf32>
    %342 = vector.multi_reduction <add>, %337, %cst_145 [1] : vector<16x32xf32> to vector<16xf32>
    %343 = vector.shape_cast %342 : vector<16xf32> to vector<16x1xf32>
    %cst_146 = arith.constant 3.200000e+01 : f32
    %344 = vector.broadcast %cst_146 : f32 to vector<16x1xf32>
    %345 = arith.divf %343, %344 : vector<16x1xf32>
    %346 = vector.broadcast %345 : vector<16x1xf32> to vector<16x32xf32>
    %347 = arith.subf %337, %346 : vector<16x32xf32>
    %348 = arith.mulf %347, %347 : vector<16x32xf32>
    %cst_147 = arith.constant dense<0.000000e+00> : vector<16xf32>
    %349 = vector.multi_reduction <add>, %348, %cst_147 [1] : vector<16x32xf32> to vector<16xf32>
    %350 = vector.shape_cast %349 : vector<16xf32> to vector<16x1xf32>
    %cst_148 = arith.constant 3.200000e+01 : f32
    %351 = vector.broadcast %cst_148 : f32 to vector<16x1xf32>
    %352 = arith.divf %350, %351 : vector<16x1xf32>
    %353 = vector.broadcast %345 : vector<16x1xf32> to vector<16x32xf32>
    %354 = arith.subf %337, %353 : vector<16x32xf32>
    %cst_149 = arith.constant 9.99999974E-6 : f32
    %355 = vector.broadcast %cst_149 : f32 to vector<16x1xf32>
    %356 = arith.addf %352, %355 : vector<16x1xf32>
    %357 = math.rsqrt %356 : vector<16x1xf32>
    %358 = vector.broadcast %357 : vector<16x1xf32> to vector<16x32xf32>
    %359 = arith.mulf %354, %358 : vector<16x32xf32>
    %360 = vector.broadcast %339 : vector<1x32xf32> to vector<16x32xf32>
    %361 = arith.mulf %359, %360 : vector<16x32xf32>
    %362 = vector.broadcast %341 : vector<1x32xf32> to vector<16x32xf32>
    %363 = arith.addf %361, %362 : vector<16x32xf32>
    %364 = arith.truncf %363 : vector<16x32xf32> to vector<16x32xbf16>
    %c0_150 = arith.constant 0 : index
    %c0_151 = arith.constant 0 : index
    %365 = vector.load %arg14[%c0_150, %c0_151] : memref<32x128xbf16, #tpu.memory_space<vmem>>, vector<32x128xbf16>
    %cst_152 = arith.constant dense<0.000000e+00> : vector<16x128xf32>
    %366 = tpu.matmul %364, %365, %cst_152 {dimension_numbers = #tpu.dot_dimension_numbers<[1], [0], [0], [1], [0, 0, 1, 1], [], []>} : vector<16x32xbf16>, vector<32x128xbf16>, vector<16x128xf32> -> vector<16x128xf32>
    %c0_153 = arith.constant 0 : index
    %c0_154 = arith.constant 0 : index
    %367 = vector.load %arg15[%c0_153, %c0_154] : memref<1x128xf32, #tpu.memory_space<vmem>>, vector<1x128xf32>
    %368 = vector.broadcast %367 : vector<1x128xf32> to vector<16x128xf32>
    %369 = arith.addf %366, %368 : vector<16x128xf32>
    %c0_155 = arith.constant 0 : index
    %c0_156 = arith.constant 0 : index
    %370 = vector.load %arg16[%c0_155, %c0_156] : memref<16x128xf32, #tpu.memory_space<vmem>>, vector<16x128xf32>
    tpu.vector_store %arg16[%c0_155, %c0_156], %369 {strides = array<i32>} : memref<16x128xf32, #tpu.memory_space<vmem>>, vector<16x128xf32>,
    return
  }
}

</mosaic_0001>

<llo_original>
// kernel: lora_model_forward.1
$region0: #{lora_model_forward.1}
  #allocation0 [shape = 'u32[]', space=smem, size = 0x4, offset = 0x4, fixed_abs, tag = 'smem constant byte address 0x4 - core index']
  #allocation1 [shape = 'u32[144,128]{1,0:T(1,128)}', space=vmem, size = 0x12000, scoped, tag = 'internal scratch']
  %s0 = inlined_call_operand.vmem [shape: f32[16,32], index: 0, kind: input, shape index: {}]
  %s1 = inlined_call_operand.vmem [shape: f32[2,8,8], index: 1, kind: input, shape index: {}]
  %s2 = inlined_call_operand.vmem [shape: bf16[2,32,96], index: 2, kind: input, shape index: {}]
  %s3 = inlined_call_operand.vmem [shape: f32[2,1,96], index: 3, kind: input, shape index: {}]
  %s4 = inlined_call_operand.vmem [shape: bf16[2,32,32], index: 4, kind: input, shape index: {}]
  %s5 = inlined_call_operand.vmem [shape: f32[2,1,32], index: 5, kind: input, shape index: {}]
  %s6 = inlined_call_operand.vmem [shape: f32[2,1,32], index: 6, kind: input, shape index: {}]
  %s7 = inlined_call_operand.vmem [shape: f32[2,1,32], index: 7, kind: input, shape index: {}]
  %s8 = inlined_call_operand.vmem [shape: bf16[2,32,128], index: 8, kind: input, shape index: {}]
  %s9 = inlined_call_operand.vmem [shape: f32[2,1,128], index: 9, kind: input, shape index: {}]
  %s10 = inlined_call_operand.vmem [shape: bf16[2,128,32], index: 10, kind: input, shape index: {}]
  %s11 = inlined_call_operand.vmem [shape: f32[2,1,32], index: 11, kind: input, shape index: {}]
  %s12 = inlined_call_operand.vmem [shape: f32[2,1,32], index: 12, kind: input, shape index: {}]
  %s13 = inlined_call_operand.vmem [shape: f32[2,1,32], index: 13, kind: input, shape index: {}]
  %s14 = inlined_call_operand.vmem [shape: bf16[32,128], index: 14, kind: input, shape index: {}]
  %s15 = inlined_call_operand.vmem [shape: f32[1,128], index: 15, kind: input, shape index: {}]
  %s16 = inlined_call_operand.hbm [shape: f32[16,128], index: 16, kind: output, shape index: {0}]
  %s17 = inlined_call_operand.vmem [shape: f32[2,16,32], index: 17, kind: output, shape index: {1}]
  %18 = xla_tuple %s16, %s17
  %s19 = sld [smem:[#allocation0]]
  $region82: #{lora_model_forward.1} parent=0
    _
  %s21 = ssub.s32 1, %s19
  %s22 = scalar_select 0, %s21, %s19
  $region1: #{lora_model_forward.1} parent=0
    #allocation2 [shape = 'u8[8192]{0}', space=vmem, size = 0x2000, scoped, tag = 'output window, operand 0, single buffered']
    #allocation3 [shape = 's32[1]{0}', space=sflag, size = 0x4, scoped, tag = 'scoped memory for lora_model_forward.1']
    %23 = vsyncpa [#allocation3], 0
    // Predicated region
    $region2: #{lora_model_forward.1} parent=1 // pred_check
      _
    $region3: #{lora_model_forward.1} parent=1 // pred_check_branch
      %25 = sbr.rel (0) target = $region5
    $region4: #{lora_model_forward.1} parent=1 // pred_region
      _
    $region5: #{lora_model_forward.1} parent=1 // pred_fallthru
      _
    // Predicated region
    $region6: #{lora_model_forward.1} parent=1 // pred_check
      _
    $region7: #{lora_model_forward.1} parent=1 // pred_check_branch
      %27 = sbr.rel (0) target = $region9
    $region8: #{lora_model_forward.1} parent=1 // pred_region
      _
    $region9: #{lora_model_forward.1} parent=1 // pred_fallthru
      _
    // Predicated region
    $region10: #{lora_model_forward.1} parent=1 // pred_check
      _
    $region11: #{lora_model_forward.1} parent=1 // pred_check_branch
      %29 = sbr.rel (0) target = $region13
    $region12: #{lora_model_forward.1} parent=1 // pred_region
      _
    $region13: #{lora_model_forward.1} parent=1 // pred_fallthru
      _
    // Predicated region
    $region14: #{lora_model_forward.1} parent=1 // pred_check
      _
    $region15: #{lora_model_forward.1} parent=1 // pred_check_branch
      %31 = sbr.rel (0) target = $region17
    $region16: #{lora_model_forward.1} parent=1 // pred_region
      _
    $region17: #{lora_model_forward.1} parent=1 // pred_fallthru
      _
    // Predicated region
    $region18: #{lora_model_forward.1} parent=1 // pred_check
      _
    $region19: #{lora_model_forward.1} parent=1 // pred_check_branch
      %33 = sbr.rel (0) target = $region21
    $region20: #{lora_model_forward.1} parent=1 // pred_region
      _
    $region21: #{lora_model_forward.1} parent=1 // pred_fallthru
      _
    // Predicated region
    $region22: #{lora_model_forward.1} parent=1 // pred_check
      _
    $region23: #{lora_model_forward.1} parent=1 // pred_check_branch
      %35 = sbr.rel (0) target = $region25
    $region24: #{lora_model_forward.1} parent=1 // pred_region
      _
    $region25: #{lora_model_forward.1} parent=1 // pred_fallthru
      _
    // Predicated region
    $region26: #{lora_model_forward.1} parent=1 // pred_check
      _
    $region27: #{lora_model_forward.1} parent=1 // pred_check_branch
      %37 = sbr.rel (0) target = $region29
    $region28: #{lora_model_forward.1} parent=1 // pred_region
      _
    $region29: #{lora_model_forward.1} parent=1 // pred_fallthru
      _
    // Predicated region
    $region30: #{lora_model_forward.1} parent=1 // pred_check
      _
    $region31: #{lora_model_forward.1} parent=1 // pred_check_branch
      %39 = sbr.rel (0) target = $region33
    $region32: #{lora_model_forward.1} parent=1 // pred_region
      _
    $region33: #{lora_model_forward.1} parent=1 // pred_fallthru
      _
    // Predicated region
    $region34: #{lora_model_forward.1} parent=1 // pred_check
      _
    $region35: #{lora_model_forward.1} parent=1 // pred_check_branch
      %41 = sbr.rel (0) target = $region37
    $region36: #{lora_model_forward.1} parent=1 // pred_region
      _
    $region37: #{lora_model_forward.1} parent=1 // pred_fallthru
      _
    // Predicated region
    $region38: #{lora_model_forward.1} parent=1 // pred_check
      _
    $region39: #{lora_model_forward.1} parent=1 // pred_check_branch
      %43 = sbr.rel (0) target = $region41
    $region40: #{lora_model_forward.1} parent=1 // pred_region
      _
    $region41: #{lora_model_forward.1} parent=1 // pred_fallthru
      _
    // Predicated region
    $region42: #{lora_model_forward.1} parent=1 // pred_check
      _
    $region43: #{lora_model_forward.1} parent=1 // pred_check_branch
      %45 = sbr.rel (0) target = $region45
    $region44: #{lora_model_forward.1} parent=1 // pred_region
      _
    $region45: #{lora_model_forward.1} parent=1 // pred_fallthru
      _
    // Predicated region
    $region46: #{lora_model_forward.1} parent=1 // pred_check
      _
    $region47: #{lora_model_forward.1} parent=1 // pred_check_branch
      %47 = sbr.rel (0) target = $region49
    $region48: #{lora_model_forward.1} parent=1 // pred_region
      _
    $region49: #{lora_model_forward.1} parent=1 // pred_fallthru
      _
    // Predicated region
    $region50: #{lora_model_forward.1} parent=1 // pred_check
      _
    $region51: #{lora_model_forward.1} parent=1 // pred_check_branch
      %49 = sbr.rel (0) target = $region53
    $region52: #{lora_model_forward.1} parent=1 // pred_region
      _
    $region53: #{lora_model_forward.1} parent=1 // pred_fallthru
      _
    // Predicated region
    $region54: #{lora_model_forward.1} parent=1 // pred_check
      _
    $region55: #{lora_model_forward.1} parent=1 // pred_check_branch
      %51 = sbr.rel (0) target = $region57
    $region56: #{lora_model_forward.1} parent=1 // pred_region
      _
    $region57: #{lora_model_forward.1} parent=1 // pred_fallthru
      _
    // Predicated region
    $region58: #{lora_model_forward.1} parent=1 // pred_check
      _
    $region59: #{lora_model_forward.1} parent=1 // pred_check_branch
      %53 = sbr.rel (0) target = $region61
    $region60: #{lora_model_forward.1} parent=1 // pred_region
      _
    $region61: #{lora_model_forward.1} parent=1 // pred_fallthru
      _
    // Predicated region
    $region62: #{lora_model_forward.1} parent=1 // pred_check
      _
    $region63: #{lora_model_forward.1} parent=1 // pred_check_branch
      %55 = sbr.rel (0) target = $region65
    $region64: #{lora_model_forward.1} parent=1 // pred_region
      _
    $region65: #{lora_model_forward.1} parent=1 // pred_fallthru
      _
    %v57 = vld [vmem:[%s0] sm:$0xff]
    %v58 = vld [vmem:[%s0 + $0x8] sm:$0xff]
    %v59 = vld [vmem:[%s1] sm:$0xff]
    %v60 = vld [vmem:[%s1 + $0x8] sm:$0xff]
    %v61 = vpack.c.bf16 %v58, %v57
    %v62 = vld [vmem:[%s2] sm:$0xf]
    %v63 = vld [vmem:[%s2 + $0x4] sm:$0xf]
    %v64 = vld [vmem:[%s2 + $0x8] sm:$0xf]
    %v65 = vld [vmem:[%s2 + $0xc] sm:$0xf]
    %v66 = vld [vmem:[%s3] sm:$0x1]
    %v68 = vlaneseq
    %v69 = vshrl.u32 %v68, 7
    %v70 = vsub.s32 0, %v69
    %v71 = vrot.slane %v66, %v70
    %v77 = vunpack.c.l.b16 %v62
    %v78 = vunpack.c.l.b16 %v63
    %v79 = vunpack.c.l.b16 %v64
    %v80 = vunpack.c.l.b16 %v65
    %v81 = vpack.c.b16 %v78, %v77
    %v82 = vpack.c.b16 %v80, %v79
    %vm85 = vcmask 261120
    %v87 = vsel %vm85, %v61, 0
    %89 = vmatprep.subr.bf16.mxu0 0
    %90 = vmatpush1.bf16.msra.mxu0 %v81
    %91 = vmatprep.subr.bf16.mxu0 0
    %92 = vmatpush1.bf16.msra.mxu0 %v82
    %93 = vmatprep.subr.bf16.mxu0 0
    %94 = vmatpush1.bf16.msra.mxu0 0
    %95 = vmatprep.subr.bf16.mxu0 0
    %96 = vmatpush1.bf16.msra.mxu0 0
    %97 = vmatprep.subr.bf16.mxu0 0
    %98 = vmatpush1.bf16.msra.mxu0 0
    %99 = vmatprep.subr.bf16.mxu0 0
    %100 = vmatpush1.bf16.msra.mxu0 0
    %101 = vmatprep.subr.bf16.mxu0 0
    %102 = vmatpush1.bf16.msra.mxu0 0
    %103 = vmatprep.subr.bf16.mxu0 0
    %104 = vmatpush1.bf16.msra.mxu0 0
    %105 = vmatprep.subr.bf16.mxu0 0
    %106 = vmatpush1.bf16.msra.mxu0 0
    %107 = vmatprep.subr.bf16.mxu0 0
    %108 = vmatpush1.bf16.msra.mxu0 0
    %109 = vmatprep.subr.bf16.mxu0 0
    %110 = vmatpush1.bf16.msra.mxu0 0
    %111 = vmatprep.subr.bf16.mxu0 0
    %112 = vmatpush1.bf16.msra.mxu0 0
    %113 = vmatprep.subr.bf16.mxu0 0
    %114 = vmatpush1.bf16.msra.mxu0 0
    %115 = vmatprep.subr.bf16.mxu0 0
    %116 = vmatpush1.bf16.msra.mxu0 0
    %117 = vmatprep.subr.bf16.mxu0 0
    %118 = vmatpush1.bf16.msra.mxu0 0
    %119 = vmatprep.subr.bf16.mxu0 0
    %120 = vmatpush1.bf16.msra.mxu0 0
    %121 = vmatprep.mubr.bf16.mxu0 0
    %122 = vmatmul.mubr.bf16.gmra.mrb[0].mxu0 %v87
    %v123 = vpop.f32.mrb[0].mxu0
    %v124 = vadd.f32 %v71, %v123
    %v125 = vpop.f32.mrb[0].mxu0
    %v126 = vpop.f32.mrb[0].mxu0
    %v127 = vadd.f32 %v71, %v126
    %v128 = vpop.f32.mrb[0].mxu0
    %129 = vdwg.mxu0
    %131 = vrot.lane.b32.xlu0 %v124, 96
    %v132 = vpop.permute.xlu0 %131
    %vm133 = vcmask 64512
    %v134 = vsel %vm133, %v124, 0
    %v136 = vsel %vm133, %v132, 0
    %138 = vmatprep.subr.mxu0 0.0
    %139 = vmatpush1.xpose.msra.mxu0 %v136
    %140 = vmatprep.subr.mxu0 0.0
    %141 = vmatpush1.xpose.msra.mxu0 0.0
    %142 = vmatprep.subr.mxu0 0.0
    %143 = vmatpush1.xpose.msra.mxu0 0.0
    %144 = vmatprep.subr.mxu0 0.0
    %145 = vmatpush1.xpose.msra.mxu0 0.0
    %146 = vmatprep.subr.mxu0 0.0
    %147 = vmatpush1.xpose.msra.mxu0 0.0
    %148 = vmatprep.subr.mxu0 0.0
    %149 = vmatpush1.xpose.msra.mxu0 0.0
    %150 = vmatprep.subr.mxu0 0.0
    %151 = vmatpush1.xpose.msra.mxu0 0.0
    %152 = vmatprep.subr.mxu0 0.0
    %153 = vmatpush1.xpose.msra.mxu0 0.0
    %154 = vmatprep.subr.mxu0 0.0
    %155 = vmatpush1.xpose.msra.mxu0 0.0
    %156 = vmatprep.subr.mxu0 0.0
    %157 = vmatpush1.xpose.msra.mxu0 0.0
    %158 = vmatprep.subr.mxu0 0.0
    %159 = vmatpush1.xpose.msra.mxu0 0.0
    %160 = vmatprep.subr.mxu0 0.0
    %161 = vmatpush1.xpose.msra.mxu0 0.0
    %162 = vmatprep.subr.mxu0 0.0
    %163 = vmatpush1.xpose.msra.mxu0 0.0
    %164 = vmatprep.subr.mxu0 0.0
    %165 = vmatpush1.xpose.msra.mxu0 0.0
    %166 = vmatprep.subr.mxu0 0.0
    %167 = vmatpush1.xpose.msra.mxu0 0.0
    %168 = vmatprep.subr.mxu0 0.0
    %169 = vmatpush1.xpose.msra.mxu0 0.0
    %170 = vmatprep.subr.mxu0 0.0
    %171 = vmatpush1.xpose.msra.mxu0 0.0
    %172 = vmatprep.subr.mxu0 0.0
    %173 = vmatpush1.xpose.msra.mxu0 0.0
    %174 = vmatprep.subr.mxu0 0.0
    %175 = vmatpush1.xpose.msra.mxu0 0.0
    %176 = vmatprep.subr.mxu0 0.0
    %177 = vmatpush1.xpose.msra.mxu0 0.0
    %178 = vmatprep.subr.mxu0 0.0
    %179 = vmatpush1.xpose.msra.mxu0 0.0
    %180 = vmatprep.subr.mxu0 0.0
    %181 = vmatpush1.xpose.msra.mxu0 0.0
    %182 = vmatprep.subr.mxu0 0.0
    %183 = vmatpush1.xpose.msra.mxu0 0.0
    %184 = vmatprep.subr.mxu0 0.0
    %185 = vmatpush1.xpose.msra.mxu0 0.0
    %186 = vmatprep.subr.mxu0 0.0
    %187 = vmatpush1.xpose.msra.mxu0 0.0
    %188 = vmatprep.subr.mxu0 0.0
    %189 = vmatpush1.xpose.msra.mxu0 0.0
    %190 = vmatprep.subr.mxu0 0.0
    %191 = vmatpush1.xpose.msra.mxu0 0.0
    %192 = vmatprep.subr.mxu0 0.0
    %193 = vmatpush1.xpose.msra.mxu0 0.0
    %194 = vmatprep.subr.mxu0 0.0
    %195 = vmatpush1.xpose.msra.mxu0 0.0
    %196 = vmatprep.subr.mxu0 0.0
    %197 = vmatpush1.xpose.msra.mxu0 0.0
    %198 = vmatprep.subr.mxu0 0.0
    %199 = vmatpush1.xpose.msra.mxu0 0.0
    %200 = vmatprep.subr.mxu0 0.0
    %201 = vmatpush1.xpose.msra.mxu0 0.0
    %202 = vmatprep.mubr.f32.mxu0 0.0
    %203 = vmatmul.mubr.f32.gmra.mrb[0].mxu0 %v134
    %v204 = vpop.f32.mrb[0].mxu0
    %v205 = vadd.f32 0.0, %v204
    %v206 = vpop.f32.mrb[0].mxu0
    %207 = vdwg.mxu0
    %209 = vrot.lane.b32.xlu0 %v127, 96
    %v210 = vpop.permute.xlu0 %209
    %v211 = vsel %vm133, %v127, 0
    %v213 = vsel %vm133, %v210, 0
    %215 = vmatprep.subr.mxu0 0.0
    %216 = vmatpush1.xpose.msra.mxu0 %v213
    %217 = vmatprep.subr.mxu0 0.0
    %218 = vmatpush1.xpose.msra.mxu0 0.0
    %219 = vmatprep.subr.mxu0 0.0
    %220 = vmatpush1.xpose.msra.mxu0 0.0
    %221 = vmatprep.subr.mxu0 0.0
    %222 = vmatpush1.xpose.msra.mxu0 0.0
    %223 = vmatprep.subr.mxu0 0.0
    %224 = vmatpush1.xpose.msra.mxu0 0.0
    %225 = vmatprep.subr.mxu0 0.0
    %226 = vmatpush1.xpose.msra.mxu0 0.0
    %227 = vmatprep.subr.mxu0 0.0
    %228 = vmatpush1.xpose.msra.mxu0 0.0
    %229 = vmatprep.subr.mxu0 0.0
    %230 = vmatpush1.xpose.msra.mxu0 0.0
    %231 = vmatprep.subr.mxu0 0.0
    %232 = vmatpush1.xpose.msra.mxu0 0.0
    %233 = vmatprep.subr.mxu0 0.0
    %234 = vmatpush1.xpose.msra.mxu0 0.0
    %235 = vmatprep.subr.mxu0 0.0
    %236 = vmatpush1.xpose.msra.mxu0 0.0
    %237 = vmatprep.subr.mxu0 0.0
    %238 = vmatpush1.xpose.msra.mxu0 0.0
    %239 = vmatprep.subr.mxu0 0.0
    %240 = vmatpush1.xpose.msra.mxu0 0.0
    %241 = vmatprep.subr.mxu0 0.0
    %242 = vmatpush1.xpose.msra.mxu0 0.0
    %243 = vmatprep.subr.mxu0 0.0
    %244 = vmatpush1.xpose.msra.mxu0 0.0
    %245 = vmatprep.subr.mxu0 0.0
    %246 = vmatpush1.xpose.msra.mxu0 0.0
    %247 = vmatprep.subr.mxu0 0.0
    %248 = vmatpush1.xpose.msra.mxu0 0.0
    %249 = vmatprep.subr.mxu0 0.0
    %250 = vmatpush1.xpose.msra.mxu0 0.0
    %251 = vmatprep.subr.mxu0 0.0
    %252 = vmatpush1.xpose.msra.mxu0 0.0
    %253 = vmatprep.subr.mxu0 0.0
    %254 = vmatpush1.xpose.msra.mxu0 0.0
    %255 = vmatprep.subr.mxu0 0.0
    %256 = vmatpush1.xpose.msra.mxu0 0.0
    %257 = vmatprep.subr.mxu0 0.0
    %258 = vmatpush1.xpose.msra.mxu0 0.0
    %259 = vmatprep.subr.mxu0 0.0
    %260 = vmatpush1.xpose.msra.mxu0 0.0
    %261 = vmatprep.subr.mxu0 0.0
    %262 = vmatpush1.xpose.msra.mxu0 0.0
    %263 = vmatprep.subr.mxu0 0.0
    %264 = vmatpush1.xpose.msra.mxu0 0.0
    %265 = vmatprep.subr.mxu0 0.0
    %266 = vmatpush1.xpose.msra.mxu0 0.0
    %267 = vmatprep.subr.mxu0 0.0
    %268 = vmatpush1.xpose.msra.mxu0 0.0
    %269 = vmatprep.subr.mxu0 0.0
    %270 = vmatpush1.xpose.msra.mxu0 0.0
    %271 = vmatprep.subr.mxu0 0.0
    %272 = vmatpush1.xpose.msra.mxu0 0.0
    %273 = vmatprep.subr.mxu0 0.0
    %274 = vmatpush1.xpose.msra.mxu0 0.0
    %275 = vmatprep.subr.mxu0 0.0
    %276 = vmatpush1.xpose.msra.mxu0 0.0
    %277 = vmatprep.subr.mxu0 0.0
    %278 = vmatpush1.xpose.msra.mxu0 0.0
    %279 = vmatprep.mubr.f32.mxu0 0.0
    %280 = vmatmul.mubr.f32.gmra.mrb[0].mxu0 %v211
    %v281 = vpop.f32.mrb[0].mxu0
    %v282 = vadd.f32 0.0, %v281
    %v283 = vpop.f32.mrb[0].mxu0
    %284 = vdwg.mxu0
    %v285 = vmul.f32 %v205, 0.35355338
    %v286 = vmul.f32 %v282, 0.35355338
    %v287 = vadd.f32 %v285, %v59
    %v288 = vadd.f32 %v286, %v60
    %v289 = vsel %vm133, %v287, -inf
    %290 = vmax.xlane.f32.xlu0 %v289
    %v291 = vpop.xlane.xlu0 %290
    %v292 = vsel %vm133, %v288, -inf
    %293 = vmax.xlane.f32.xlu0 %v292
    %v294 = vpop.xlane.xlu0 %293
    %v295 = vsub.f32 %v287, %v291
    %v296 = vsub.f32 %v288, %v294
    %v297 = vmul.f32 %v295, 1.442695
    %v298 = vpow.pop %v297
    %v299 = vmul.f32 %v296, 1.442695
    %v300 = vpow.pop %v299
    %v301 = vsel %vm133, %v298, 0.0
    %302 = vadd.xlane.f32.xlu0 %v301
    %v303 = vpop.xlane.xlu0 %302
    %v304 = vsel %vm133, %v300, 0.0
    %305 = vadd.xlane.f32.xlu0 %v304
    %v306 = vpop.xlane.xlu0 %305
    %v307 = vrcp.pop %v303
    %v308 = vmul.f32 %v298, %v307
    %v309 = vrcp.pop %v306
    %v310 = vmul.f32 %v300, %v309
    %311 = vrot.lane.b32.xlu0 %v124, 64
    %v312 = vpop.permute.xlu0 %311
    %v315 = vsel %vm133, %v308, 0
    %317 = vmatprep.subr.mxu0 0.0
    %318 = vmatpush1.msra.mxu0 %v312
    %319 = vmatprep.subr.mxu0 0.0
    %320 = vmatpush1.msra.mxu0 0.0
    %321 = vmatprep.subr.mxu0 0.0
    %322 = vmatpush1.msra.mxu0 0.0
    %323 = vmatprep.subr.mxu0 0.0
    %324 = vmatpush1.msra.mxu0 0.0
    %325 = vmatprep.subr.mxu0 0.0
    %326 = vmatpush1.msra.mxu0 0.0
    %327 = vmatprep.subr.mxu0 0.0
    %328 = vmatpush1.msra.mxu0 0.0
    %329 = vmatprep.subr.mxu0 0.0
    %330 = vmatpush1.msra.mxu0 0.0
    %331 = vmatprep.subr.mxu0 0.0
    %332 = vmatpush1.msra.mxu0 0.0
    %333 = vmatprep.subr.mxu0 0.0
    %334 = vmatpush1.msra.mxu0 0.0
    %335 = vmatprep.subr.mxu0 0.0
    %336 = vmatpush1.msra.mxu0 0.0
    %337 = vmatprep.subr.mxu0 0.0
    %338 = vmatpush1.msra.mxu0 0.0
    %339 = vmatprep.subr.mxu0 0.0
    %340 = vmatpush1.msra.mxu0 0.0
    %341 = vmatprep.subr.mxu0 0.0
    %342 = vmatpush1.msra.mxu0 0.0
    %343 = vmatprep.subr.mxu0 0.0
    %344 = vmatpush1.msra.mxu0 0.0
    %345 = vmatprep.subr.mxu0 0.0
    %346 = vmatpush1.msra.mxu0 0.0
    %347 = vmatprep.subr.mxu0 0.0
    %348 = vmatpush1.msra.mxu0 0.0
    %349 = vmatprep.subr.mxu0 0.0
    %350 = vmatpush1.msra.mxu0 0.0
    %351 = vmatprep.subr.mxu0 0.0
    %352 = vmatpush1.msra.mxu0 0.0
    %353 = vmatprep.subr.mxu0 0.0
    %354 = vmatpush1.msra.mxu0 0.0
    %355 = vmatprep.subr.mxu0 0.0
    %356 = vmatpush1.msra.mxu0 0.0
    %357 = vmatprep.subr.mxu0 0.0
    %358 = vmatpush1.msra.mxu0 0.0
    %359 = vmatprep.subr.mxu0 0.0
    %360 = vmatpush1.msra.mxu0 0.0
    %361 = vmatprep.subr.mxu0 0.0
    %362 = vmatpush1.msra.mxu0 0.0
    %363 = vmatprep.subr.mxu0 0.0
    %364 = vmatpush1.msra.mxu0 0.0
    %365 = vmatprep.subr.mxu0 0.0
    %366 = vmatpush1.msra.mxu0 0.0
    %367 = vmatprep.subr.mxu0 0.0
    %368 = vmatpush1.msra.mxu0 0.0
    %369 = vmatprep.subr.mxu0 0.0
    %370 = vmatpush1.msra.mxu0 0.0
    %371 = vmatprep.subr.mxu0 0.0
    %372 = vmatpush1.msra.mxu0 0.0
    %373 = vmatprep.subr.mxu0 0.0
    %374 = vmatpush1.msra.mxu0 0.0
    %375 = vmatprep.subr.mxu0 0.0
    %376 = vmatpush1.msra.mxu0 0.0
    %377 = vmatprep.subr.mxu0 0.0
    %378 = vmatpush1.msra.mxu0 0.0
    %379 = vmatprep.subr.mxu0 0.0
    %380 = vmatpush1.msra.mxu0 0.0
    %381 = vmatprep.mubr.f32.mxu0 0.0
    %382 = vmatmul.mubr.f32.gmra.mrb[0].mxu0 %v315
    %v383 = vpop.f32.mrb[0].mxu0
    %v384 = vadd.f32 0.0, %v383
    %v385 = vpop.f32.mrb[0].mxu0
    %386 = vdwg.mxu0
    %387 = vrot.lane.b32.xlu0 %v127, 64
    %v388 = vpop.permute.xlu0 %387
    %v391 = vsel %vm133, %v310, 0
    %393 = vmatprep.subr.mxu0 0.0
    %394 = vmatpush1.msra.mxu0 %v388
    %395 = vmatprep.subr.mxu0 0.0
    %396 = vmatpush1.msra.mxu0 0.0
    %397 = vmatprep.subr.mxu0 0.0
    %398 = vmatpush1.msra.mxu0 0.0
    %399 = vmatprep.subr.mxu0 0.0
    %400 = vmatpush1.msra.mxu0 0.0
    %401 = vmatprep.subr.mxu0 0.0
    %402 = vmatpush1.msra.mxu0 0.0
    %403 = vmatprep.subr.mxu0 0.0
    %404 = vmatpush1.msra.mxu0 0.0
    %405 = vmatprep.subr.mxu0 0.0
    %406 = vmatpush1.msra.mxu0 0.0
    %407 = vmatprep.subr.mxu0 0.0
    %408 = vmatpush1.msra.mxu0 0.0
    %409 = vmatprep.subr.mxu0 0.0
    %410 = vmatpush1.msra.mxu0 0.0
    %411 = vmatprep.subr.mxu0 0.0
    %412 = vmatpush1.msra.mxu0 0.0
    %413 = vmatprep.subr.mxu0 0.0
    %414 = vmatpush1.msra.mxu0 0.0
    %415 = vmatprep.subr.mxu0 0.0
    %416 = vmatpush1.msra.mxu0 0.0
    %417 = vmatprep.subr.mxu0 0.0
    %418 = vmatpush1.msra.mxu0 0.0
    %419 = vmatprep.subr.mxu0 0.0
    %420 = vmatpush1.msra.mxu0 0.0
    %421 = vmatprep.subr.mxu0 0.0
    %422 = vmatpush1.msra.mxu0 0.0
    %423 = vmatprep.subr.mxu0 0.0
    %424 = vmatpush1.msra.mxu0 0.0
    %425 = vmatprep.subr.mxu0 0.0
    %426 = vmatpush1.msra.mxu0 0.0
    %427 = vmatprep.subr.mxu0 0.0
    %428 = vmatpush1.msra.mxu0 0.0
    %429 = vmatprep.subr.mxu0 0.0
    %430 = vmatpush1.msra.mxu0 0.0
    %431 = vmatprep.subr.mxu0 0.0
    %432 = vmatpush1.msra.mxu0 0.0
    %433 = vmatprep.subr.mxu0 0.0
    %434 = vmatpush1.msra.mxu0 0.0
    %435 = vmatprep.subr.mxu0 0.0
    %436 = vmatpush1.msra.mxu0 0.0
    %437 = vmatprep.subr.mxu0 0.0
    %438 = vmatpush1.msra.mxu0 0.0
    %439 = vmatprep.subr.mxu0 0.0
    %440 = vmatpush1.msra.mxu0 0.0
    %441 = vmatprep.subr.mxu0 0.0
    %442 = vmatpush1.msra.mxu0 0.0
    %443 = vmatprep.subr.mxu0 0.0
    %444 = vmatpush1.msra.mxu0 0.0
    %445 = vmatprep.subr.mxu0 0.0
    %446 = vmatpush1.msra.mxu0 0.0
    %447 = vmatprep.subr.mxu0 0.0
    %448 = vmatpush1.msra.mxu0 0.0
    %449 = vmatprep.subr.mxu0 0.0
    %450 = vmatpush1.msra.mxu0 0.0
    %451 = vmatprep.subr.mxu0 0.0
    %452 = vmatpush1.msra.mxu0 0.0
    %453 = vmatprep.subr.mxu0 0.0
    %454 = vmatpush1.msra.mxu0 0.0
    %455 = vmatprep.subr.mxu0 0.0
    %456 = vmatpush1.msra.mxu0 0.0
    %457 = vmatprep.mubr.f32.mxu0 0.0
    %458 = vmatmul.mubr.f32.gmra.mrb[0].mxu0 %v391
    %v459 = vpop.f32.mrb[0].mxu0
    %v460 = vadd.f32 0.0, %v459
    %v461 = vpop.f32.mrb[0].mxu0
    %462 = vdwg.mxu0
    %463 = vrot.lane.b32.xlu0 %v124, 120
    %v464 = vpop.permute.xlu0 %463
    %465 = vrot.lane.b32.xlu0 %v124, 88
    %v466 = vpop.permute.xlu0 %465
    %v467 = vsel %vm133, %v464, 0
    %v469 = vsel %vm133, %v466, 0
    %471 = vmatprep.subr.mxu0 0.0
    %472 = vmatpush1.xpose.msra.mxu0 %v469
    %473 = vmatprep.subr.mxu0 0.0
    %474 = vmatpush1.xpose.msra.mxu0 0.0
    %475 = vmatprep.subr.mxu0 0.0
    %476 = vmatpush1.xpose.msra.mxu0 0.0
    %477 = vmatprep.subr.mxu0 0.0
    %478 = vmatpush1.xpose.msra.mxu0 0.0
    %479 = vmatprep.subr.mxu0 0.0
    %480 = vmatpush1.xpose.msra.mxu0 0.0
    %481 = vmatprep.subr.mxu0 0.0
    %482 = vmatpush1.xpose.msra.mxu0 0.0
    %483 = vmatprep.subr.mxu0 0.0
    %484 = vmatpush1.xpose.msra.mxu0 0.0
    %485 = vmatprep.subr.mxu0 0.0
    %486 = vmatpush1.xpose.msra.mxu0 0.0
    %487 = vmatprep.subr.mxu0 0.0
    %488 = vmatpush1.xpose.msra.mxu0 0.0
    %489 = vmatprep.subr.mxu0 0.0
    %490 = vmatpush1.xpose.msra.mxu0 0.0
    %491 = vmatprep.subr.mxu0 0.0
    %492 = vmatpush1.xpose.msra.mxu0 0.0
    %493 = vmatprep.subr.mxu0 0.0
    %494 = vmatpush1.xpose.msra.mxu0 0.0
    %495 = vmatprep.subr.mxu0 0.0
    %496 = vmatpush1.xpose.msra.mxu0 0.0
    %497 = vmatprep.subr.mxu0 0.0
    %498 = vmatpush1.xpose.msra.mxu0 0.0
    %499 = vmatprep.subr.mxu0 0.0
    %500 = vmatpush1.xpose.msra.mxu0 0.0
    %501 = vmatprep.subr.mxu0 0.0
    %502 = vmatpush1.xpose.msra.mxu0 0.0
    %503 = vmatprep.subr.mxu0 0.0
    %504 = vmatpush1.xpose.msra.mxu0 0.0
    %505 = vmatprep.subr.mxu0 0.0
    %506 = vmatpush1.xpose.msra.mxu0 0.0
    %507 = vmatprep.subr.mxu0 0.0
    %508 = vmatpush1.xpose.msra.mxu0 0.0
    %509 = vmatprep.subr.mxu0 0.0
    %510 = vmatpush1.xpose.msra.mxu0 0.0
    %511 = vmatprep.subr.mxu0 0.0
    %512 = vmatpush1.xpose.msra.mxu0 0.0
    %513 = vmatprep.subr.mxu0 0.0
    %514 = vmatpush1.xpose.msra.mxu0 0.0
    %515 = vmatprep.subr.mxu0 0.0
    %516 = vmatpush1.xpose.msra.mxu0 0.0
    %517 = vmatprep.subr.mxu0 0.0
    %518 = vmatpush1.xpose.msra.mxu0 0.0
    %519 = vmatprep.subr.mxu0 0.0
    %520 = vmatpush1.xpose.msra.mxu0 0.0
    %521 = vmatprep.subr.mxu0 0.0
    %522 = vmatpush1.xpose.msra.mxu0 0.0
    %523 = vmatprep.subr.mxu0 0.0
    %524 = vmatpush1.xpose.msra.mxu0 0.0
    %525 = vmatprep.subr.mxu0 0.0
    %526 = vmatpush1.xpose.msra.mxu0 0.0
    %527 = vmatprep.subr.mxu0 0.0
    %528 = vmatpush1.xpose.msra.mxu0 0.0
    %529 = vmatprep.subr.mxu0 0.0
    %530 = vmatpush1.xpose.msra.mxu0 0.0
    %531 = vmatprep.subr.mxu0 0.0
    %532 = vmatpush1.xpose.msra.mxu0 0.0
    %533 = vmatprep.subr.mxu0 0.0
    %534 = vmatpush1.xpose.msra.mxu0 0.0
    %535 = vmatprep.mubr.f32.mxu0 0.0
    %536 = vmatmul.mubr.f32.gmra.mrb[0].mxu0 %v467
    %v537 = vpop.f32.mrb[0].mxu0
    %v538 = vadd.f32 0.0, %v537
    %v539 = vpop.f32.mrb[0].mxu0
    %540 = vdwg.mxu0
    %541 = vrot.lane.b32.xlu0 %v127, 120
    %v542 = vpop.permute.xlu0 %541
    %543 = vrot.lane.b32.xlu0 %v127, 88
    %v544 = vpop.permute.xlu0 %543
    %v545 = vsel %vm133, %v542, 0
    %v547 = vsel %vm133, %v544, 0
    %549 = vmatprep.subr.mxu0 0.0
    %550 = vmatpush1.xpose.msra.mxu0 %v547
    %551 = vmatprep.subr.mxu0 0.0
    %552 = vmatpush1.xpose.msra.mxu0 0.0
    %553 = vmatprep.subr.mxu0 0.0
    %554 = vmatpush1.xpose.msra.mxu0 0.0
    %555 = vmatprep.subr.mxu0 0.0
    %556 = vmatpush1.xpose.msra.mxu0 0.0
    %557 = vmatprep.subr.mxu0 0.0
    %558 = vmatpush1.xpose.msra.mxu0 0.0
    %559 = vmatprep.subr.mxu0 0.0
    %560 = vmatpush1.xpose.msra.mxu0 0.0
    %561 = vmatprep.subr.mxu0 0.0
    %562 = vmatpush1.xpose.msra.mxu0 0.0
    %563 = vmatprep.subr.mxu0 0.0
    %564 = vmatpush1.xpose.msra.mxu0 0.0
    %565 = vmatprep.subr.mxu0 0.0
    %566 = vmatpush1.xpose.msra.mxu0 0.0
    %567 = vmatprep.subr.mxu0 0.0
    %568 = vmatpush1.xpose.msra.mxu0 0.0
    %569 = vmatprep.subr.mxu0 0.0
    %570 = vmatpush1.xpose.msra.mxu0 0.0
    %571 = vmatprep.subr.mxu0 0.0
    %572 = vmatpush1.xpose.msra.mxu0 0.0
    %573 = vmatprep.subr.mxu0 0.0
    %574 = vmatpush1.xpose.msra.mxu0 0.0
    %575 = vmatprep.subr.mxu0 0.0
    %576 = vmatpush1.xpose.msra.mxu0 0.0
    %577 = vmatprep.subr.mxu0 0.0
    %578 = vmatpush1.xpose.msra.mxu0 0.0
    %579 = vmatprep.subr.mxu0 0.0
    %580 = vmatpush1.xpose.msra.mxu0 0.0
    %581 = vmatprep.subr.mxu0 0.0
    %582 = vmatpush1.xpose.msra.mxu0 0.0
    %583 = vmatprep.subr.mxu0 0.0
    %584 = vmatpush1.xpose.msra.mxu0 0.0
    %585 = vmatprep.subr.mxu0 0.0
    %586 = vmatpush1.xpose.msra.mxu0 0.0
    %587 = vmatprep.subr.mxu0 0.0
    %588 = vmatpush1.xpose.msra.mxu0 0.0
    %589 = vmatprep.subr.mxu0 0.0
    %590 = vmatpush1.xpose.msra.mxu0 0.0
    %591 = vmatprep.subr.mxu0 0.0
    %592 = vmatpush1.xpose.msra.mxu0 0.0
    %593 = vmatprep.subr.mxu0 0.0
    %594 = vmatpush1.xpose.msra.mxu0 0.0
    %595 = vmatprep.subr.mxu0 0.0
    %596 = vmatpush1.xpose.msra.mxu0 0.0
    %597 = vmatprep.subr.mxu0 0.0
    %598 = vmatpush1.xpose.msra.mxu0 0.0
    %599 = vmatprep.subr.mxu0 0.0
    %600 = vmatpush1.xpose.msra.mxu0 0.0
    %601 = vmatprep.subr.mxu0 0.0
    %602 = vmatpush1.xpose.msra.mxu0 0.0
    %603 = vmatprep.subr.mxu0 0.0
    %604 = vmatpush1.xpose.msra.mxu0 0.0
    %605 = vmatprep.subr.mxu0 0.0
    %606 = vmatpush1.xpose.msra.mxu0 0.0
    %607 = vmatprep.subr.mxu0 0.0
    %608 = vmatpush1.xpose.msra.mxu0 0.0
    %609 = vmatprep.subr.mxu0 0.0
    %610 = vmatpush1.xpose.msra.mxu0 0.0
    %611 = vmatprep.subr.mxu0 0.0
    %612 = vmatpush1.xpose.msra.mxu0 0.0
    %613 = vmatprep.mubr.f32.mxu0 0.0
    %614 = vmatmul.mubr.f32.gmra.mrb[0].mxu0 %v545
    %v615 = vpop.f32.mrb[0].mxu0
    %v616 = vadd.f32 0.0, %v615
    %v617 = vpop.f32.mrb[0].mxu0
    %618 = vdwg.mxu0
    %v619 = vmul.f32 %v538, 0.35355338
    %v620 = vmul.f32 %v616, 0.35355338
    %v621 = vadd.f32 %v619, %v59
    %v622 = vadd.f32 %v620, %v60
    %v623 = vsel %vm133, %v621, -inf
    %624 = vmax.xlane.f32.xlu0 %v623
    %v625 = vpop.xlane.xlu0 %624
    %v626 = vsel %vm133, %v622, -inf
    %627 = vmax.xlane.f32.xlu0 %v626
    %v628 = vpop.xlane.xlu0 %627
    %v629 = vsub.f32 %v621, %v625
    %v630 = vsub.f32 %v622, %v628
    %v631 = vmul.f32 %v629, 1.442695
    %v632 = vpow.pop %v631
    %v633 = vmul.f32 %v630, 1.442695
    %v634 = vpow.pop %v633
    %v635 = vsel %vm133, %v632, 0.0
    %636 = vadd.xlane.f32.xlu0 %v635
    %v637 = vpop.xlane.xlu0 %636
    %v638 = vsel %vm133, %v634, 0.0
    %639 = vadd.xlane.f32.xlu0 %v638
    %v640 = vpop.xlane.xlu0 %639
    %v641 = vrcp.pop %v637
    %v642 = vmul.f32 %v632, %v641
    %v643 = vrcp.pop %v640
    %v644 = vmul.f32 %v634, %v643
    %645 = vrot.lane.b32.xlu0 %v124, 56
    %v646 = vpop.permute.xlu0 %645
    %v649 = vsel %vm133, %v642, 0
    %651 = vmatprep.subr.mxu0 0.0
    %652 = vmatpush1.msra.mxu0 %v646
    %653 = vmatprep.subr.mxu0 0.0
    %654 = vmatpush1.msra.mxu0 0.0
    %655 = vmatprep.subr.mxu0 0.0
    %656 = vmatpush1.msra.mxu0 0.0
    %657 = vmatprep.subr.mxu0 0.0
    %658 = vmatpush1.msra.mxu0 0.0
    %659 = vmatprep.subr.mxu0 0.0
    %660 = vmatpush1.msra.mxu0 0.0
    %661 = vmatprep.subr.mxu0 0.0
    %662 = vmatpush1.msra.mxu0 0.0
    %663 = vmatprep.subr.mxu0 0.0
    %664 = vmatpush1.msra.mxu0 0.0
    %665 = vmatprep.subr.mxu0 0.0
    %666 = vmatpush1.msra.mxu0 0.0
    %667 = vmatprep.subr.mxu0 0.0
    %668 = vmatpush1.msra.mxu0 0.0
    %669 = vmatprep.subr.mxu0 0.0
    %670 = vmatpush1.msra.mxu0 0.0
    %671 = vmatprep.subr.mxu0 0.0
    %672 = vmatpush1.msra.mxu0 0.0
    %673 = vmatprep.subr.mxu0 0.0
    %674 = vmatpush1.msra.mxu0 0.0
    %675 = vmatprep.subr.mxu0 0.0
    %676 = vmatpush1.msra.mxu0 0.0
    %677 = vmatprep.subr.mxu0 0.0
    %678 = vmatpush1.msra.mxu0 0.0
    %679 = vmatprep.subr.mxu0 0.0
    %680 = vmatpush1.msra.mxu0 0.0
    %681 = vmatprep.subr.mxu0 0.0
    %682 = vmatpush1.msra.mxu0 0.0
    %683 = vmatprep.subr.mxu0 0.0
    %684 = vmatpush1.msra.mxu0 0.0
    %685 = vmatprep.subr.mxu0 0.0
    %686 = vmatpush1.msra.mxu0 0.0
    %687 = vmatprep.subr.mxu0 0.0
    %688 = vmatpush1.msra.mxu0 0.0
    %689 = vmatprep.subr.mxu0 0.0
    %690 = vmatpush1.msra.mxu0 0.0
    %691 = vmatprep.subr.mxu0 0.0
    %692 = vmatpush1.msra.mxu0 0.0
    %693 = vmatprep.subr.mxu0 0.0
    %694 = vmatpush1.msra.mxu0 0.0
    %695 = vmatprep.subr.mxu0 0.0
    %696 = vmatpush1.msra.mxu0 0.0
    %697 = vmatprep.subr.mxu0 0.0
    %698 = vmatpush1.msra.mxu0 0.0
    %699 = vmatprep.subr.mxu0 0.0
    %700 = vmatpush1.msra.mxu0 0.0
    %701 = vmatprep.subr.mxu0 0.0
    %702 = vmatpush1.msra.mxu0 0.0
    %703 = vmatprep.subr.mxu0 0.0
    %704 = vmatpush1.msra.mxu0 0.0
    %705 = vmatprep.subr.mxu0 0.0
    %706 = vmatpush1.msra.mxu0 0.0
    %707 = vmatprep.subr.mxu0 0.0
    %708 = vmatpush1.msra.mxu0 0.0
    %709 = vmatprep.subr.mxu0 0.0
    %710 = vmatpush1.msra.mxu0 0.0
    %711 = vmatprep.subr.mxu0 0.0
    %712 = vmatpush1.msra.mxu0 0.0
    %713 = vmatprep.subr.mxu0 0.0
    %714 = vmatpush1.msra.mxu0 0.0
    %715 = vmatprep.mubr.f32.mxu0 0.0
    %716 = vmatmul.mubr.f32.gmra.mrb[0].mxu0 %v649
    %v717 = vpop.f32.mrb[0].mxu0
    %v718 = vadd.f32 0.0, %v717
    %v719 = vpop.f32.mrb[0].mxu0
    %720 = vdwg.mxu0
    %721 = vrot.lane.b32.xlu0 %v127, 56
    %v722 = vpop.permute.xlu0 %721
    %v725 = vsel %vm133, %v644, 0
    %727 = vmatprep.subr.mxu0 0.0
    %728 = vmatpush1.msra.mxu0 %v722
    %729 = vmatprep.subr.mxu0 0.0
    %730 = vmatpush1.msra.mxu0 0.0
    %731 = vmatprep.subr.mxu0 0.0
    %732 = vmatpush1.msra.mxu0 0.0
    %733 = vmatprep.subr.mxu0 0.0
    %734 = vmatpush1.msra.mxu0 0.0
    %735 = vmatprep.subr.mxu0 0.0
    %736 = vmatpush1.msra.mxu0 0.0
    %737 = vmatprep.subr.mxu0 0.0
    %738 = vmatpush1.msra.mxu0 0.0
    %739 = vmatprep.subr.mxu0 0.0
    %740 = vmatpush1.msra.mxu0 0.0
    %741 = vmatprep.subr.mxu0 0.0
    %742 = vmatpush1.msra.mxu0 0.0
    %743 = vmatprep.subr.mxu0 0.0
    %744 = vmatpush1.msra.mxu0 0.0
    %745 = vmatprep.subr.mxu0 0.0
    %746 = vmatpush1.msra.mxu0 0.0
    %747 = vmatprep.subr.mxu0 0.0
    %748 = vmatpush1.msra.mxu0 0.0
    %749 = vmatprep.subr.mxu0 0.0
    %750 = vmatpush1.msra.mxu0 0.0
    %751 = vmatprep.subr.mxu0 0.0
    %752 = vmatpush1.msra.mxu0 0.0
    %753 = vmatprep.subr.mxu0 0.0
    %754 = vmatpush1.msra.mxu0 0.0
    %755 = vmatprep.subr.mxu0 0.0
    %756 = vmatpush1.msra.mxu0 0.0
    %757 = vmatprep.subr.mxu0 0.0
    %758 = vmatpush1.msra.mxu0 0.0
    %759 = vmatprep.subr.mxu0 0.0
    %760 = vmatpush1.msra.mxu0 0.0
    %761 = vmatprep.subr.mxu0 0.0
    %762 = vmatpush1.msra.mxu0 0.0
    %763 = vmatprep.subr.mxu0 0.0
    %764 = vmatpush1.msra.mxu0 0.0
    %765 = vmatprep.subr.mxu0 0.0
    %766 = vmatpush1.msra.mxu0 0.0
    %767 = vmatprep.subr.mxu0 0.0
    %768 = vmatpush1.msra.mxu0 0.0
    %769 = vmatprep.subr.mxu0 0.0
    %770 = vmatpush1.msra.mxu0 0.0
    %771 = vmatprep.subr.mxu0 0.0
    %772 = vmatpush1.msra.mxu0 0.0
    %773 = vmatprep.subr.mxu0 0.0
    %774 = vmatpush1.msra.mxu0 0.0
    %775 = vmatprep.subr.mxu0 0.0
    %776 = vmatpush1.msra.mxu0 0.0
    %777 = vmatprep.subr.mxu0 0.0
    %778 = vmatpush1.msra.mxu0 0.0
    %779 = vmatprep.subr.mxu0 0.0
    %780 = vmatpush1.msra.mxu0 0.0
    %781 = vmatprep.subr.mxu0 0.0
    %782 = vmatpush1.msra.mxu0 0.0
    %783 = vmatprep.subr.mxu0 0.0
    %784 = vmatpush1.msra.mxu0 0.0
    %785 = vmatprep.subr.mxu0 0.0
    %786 = vmatpush1.msra.mxu0 0.0
    %787 = vmatprep.subr.mxu0 0.0
    %788 = vmatpush1.msra.mxu0 0.0
    %789 = vmatprep.subr.mxu0 0.0
    %790 = vmatpush1.msra.mxu0 0.0
    %791 = vmatprep.mubr.f32.mxu0 0.0
    %792 = vmatmul.mubr.f32.gmra.mrb[0].mxu0 %v725
    %v793 = vpop.f32.mrb[0].mxu0
    %v794 = vadd.f32 0.0, %v793
    %v795 = vpop.f32.mrb[0].mxu0
    %796 = vdwg.mxu0
    %797 = vrot.lane.b32.xlu0 %v124, 112
    %v798 = vpop.permute.xlu0 %797
    %799 = vrot.lane.b32.xlu0 %v124, 80
    %v800 = vpop.permute.xlu0 %799
    %v801 = vsel %vm133, %v798, 0
    %v803 = vsel %vm133, %v800, 0
    %805 = vmatprep.subr.mxu0 0.0
    %806 = vmatpush1.xpose.msra.mxu0 %v803
    %807 = vmatprep.subr.mxu0 0.0
    %808 = vmatpush1.xpose.msra.mxu0 0.0
    %809 = vmatprep.subr.mxu0 0.0
    %810 = vmatpush1.xpose.msra.mxu0 0.0
    %811 = vmatprep.subr.mxu0 0.0
    %812 = vmatpush1.xpose.msra.mxu0 0.0
    %813 = vmatprep.subr.mxu0 0.0
    %814 = vmatpush1.xpose.msra.mxu0 0.0
    %815 = vmatprep.subr.mxu0 0.0
    %816 = vmatpush1.xpose.msra.mxu0 0.0
    %817 = vmatprep.subr.mxu0 0.0
    %818 = vmatpush1.xpose.msra.mxu0 0.0
    %819 = vmatprep.subr.mxu0 0.0
    %820 = vmatpush1.xpose.msra.mxu0 0.0
    %821 = vmatprep.subr.mxu0 0.0
    %822 = vmatpush1.xpose.msra.mxu0 0.0
    %823 = vmatprep.subr.mxu0 0.0
    %824 = vmatpush1.xpose.msra.mxu0 0.0
    %825 = vmatprep.subr.mxu0 0.0
    %826 = vmatpush1.xpose.msra.mxu0 0.0
    %827 = vmatprep.subr.mxu0 0.0
    %828 = vmatpush1.xpose.msra.mxu0 0.0
    %829 = vmatprep.subr.mxu0 0.0
    %830 = vmatpush1.xpose.msra.mxu0 0.0
    %831 = vmatprep.subr.mxu0 0.0
    %832 = vmatpush1.xpose.msra.mxu0 0.0
    %833 = vmatprep.subr.mxu0 0.0
    %834 = vmatpush1.xpose.msra.mxu0 0.0
    %835 = vmatprep.subr.mxu0 0.0
    %836 = vmatpush1.xpose.msra.mxu0 0.0
    %837 = vmatprep.subr.mxu0 0.0
    %838 = vmatpush1.xpose.msra.mxu0 0.0
    %839 = vmatprep.subr.mxu0 0.0
    %840 = vmatpush1.xpose.msra.mxu0 0.0
    %841 = vmatprep.subr.mxu0 0.0
    %842 = vmatpush1.xpose.msra.mxu0 0.0
    %843 = vmatprep.subr.mxu0 0.0
    %844 = vmatpush1.xpose.msra.mxu0 0.0
    %845 = vmatprep.subr.mxu0 0.0
    %846 = vmatpush1.xpose.msra.mxu0 0.0
    %847 = vmatprep.subr.mxu0 0.0
    %848 = vmatpush1.xpose.msra.mxu0 0.0
    %849 = vmatprep.subr.mxu0 0.0
    %850 = vmatpush1.xpose.msra.mxu0 0.0
    %851 = vmatprep.subr.mxu0 0.0
    %852 = vmatpush1.xpose.msra.mxu0 0.0
    %853 = vmatprep.subr.mxu0 0.0
    %854 = vmatpush1.xpose.msra.mxu0 0.0
    %855 = vmatprep.subr.mxu0 0.0
    %856 = vmatpush1.xpose.msra.mxu0 0.0
    %857 = vmatprep.subr.mxu0 0.0
    %858 = vmatpush1.xpose.msra.mxu0 0.0
    %859 = vmatprep.subr.mxu0 0.0
    %860 = vmatpush1.xpose.msra.mxu0 0.0
    %861 = vmatprep.subr.mxu0 0.0
    %862 = vmatpush1.xpose.msra.mxu0 0.0
    %863 = vmatprep.subr.mxu0 0.0
    %864 = vmatpush1.xpose.msra.mxu0 0.0
    %865 = vmatprep.subr.mxu0 0.0
    %866 = vmatpush1.xpose.msra.mxu0 0.0
    %867 = vmatprep.subr.mxu0 0.0
    %868 = vmatpush1.xpose.msra.mxu0 0.0
    %869 = vmatprep.mubr.f32.mxu0 0.0
    %870 = vmatmul.mubr.f32.gmra.mrb[0].mxu0 %v801
    %v871 = vpop.f32.mrb[0].mxu0
    %v872 = vadd.f32 0.0, %v871
    %v873 = vpop.f32.mrb[0].mxu0
    %874 = vdwg.mxu0
    %875 = vrot.lane.b32.xlu0 %v127, 112
    %v876 = vpop.permute.xlu0 %875
    %877 = vrot.lane.b32.xlu0 %v127, 80
    %v878 = vpop.permute.xlu0 %877
    %v879 = vsel %vm133, %v876, 0
    %v881 = vsel %vm133, %v878, 0
    %883 = vmatprep.subr.mxu0 0.0
    %884 = vmatpush1.xpose.msra.mxu0 %v881
    %885 = vmatprep.subr.mxu0 0.0
    %886 = vmatpush1.xpose.msra.mxu0 0.0
    %887 = vmatprep.subr.mxu0 0.0
    %888 = vmatpush1.xpose.msra.mxu0 0.0
    %889 = vmatprep.subr.mxu0 0.0
    %890 = vmatpush1.xpose.msra.mxu0 0.0
    %891 = vmatprep.subr.mxu0 0.0
    %892 = vmatpush1.xpose.msra.mxu0 0.0
    %893 = vmatprep.subr.mxu0 0.0
    %894 = vmatpush1.xpose.msra.mxu0 0.0
    %895 = vmatprep.subr.mxu0 0.0
    %896 = vmatpush1.xpose.msra.mxu0 0.0
    %897 = vmatprep.subr.mxu0 0.0
    %898 = vmatpush1.xpose.msra.mxu0 0.0
    %899 = vmatprep.subr.mxu0 0.0
    %900 = vmatpush1.xpose.msra.mxu0 0.0
    %901 = vmatprep.subr.mxu0 0.0
    %902 = vmatpush1.xpose.msra.mxu0 0.0
    %903 = vmatprep.subr.mxu0 0.0
    %904 = vmatpush1.xpose.msra.mxu0 0.0
    %905 = vmatprep.subr.mxu0 0.0
    %906 = vmatpush1.xpose.msra.mxu0 0.0
    %907 = vmatprep.subr.mxu0 0.0
    %908 = vmatpush1.xpose.msra.mxu0 0.0
    %909 = vmatprep.subr.mxu0 0.0
    %910 = vmatpush1.xpose.msra.mxu0 0.0
    %911 = vmatprep.subr.mxu0 0.0
    %912 = vmatpush1.xpose.msra.mxu0 0.0
    %913 = vmatprep.subr.mxu0 0.0
    %914 = vmatpush1.xpose.msra.mxu0 0.0
    %915 = vmatprep.subr.mxu0 0.0
    %916 = vmatpush1.xpose.msra.mxu0 0.0
    %917 = vmatprep.subr.mxu0 0.0
    %918 = vmatpush1.xpose.msra.mxu0 0.0
    %919 = vmatprep.subr.mxu0 0.0
    %920 = vmatpush1.xpose.msra.mxu0 0.0
    %921 = vmatprep.subr.mxu0 0.0
    %922 = vmatpush1.xpose.msra.mxu0 0.0
    %923 = vmatprep.subr.mxu0 0.0
    %924 = vmatpush1.xpose.msra.mxu0 0.0
    %925 = vmatprep.subr.mxu0 0.0
    %926 = vmatpush1.xpose.msra.mxu0 0.0
    %927 = vmatprep.subr.mxu0 0.0
    %928 = vmatpush1.xpose.msra.mxu0 0.0
    %929 = vmatprep.subr.mxu0 0.0
    %930 = vmatpush1.xpose.msra.mxu0 0.0
    %931 = vmatprep.subr.mxu0 0.0
    %932 = vmatpush1.xpose.msra.mxu0 0.0
    %933 = vmatprep.subr.mxu0 0.0
    %934 = vmatpush1.xpose.msra.mxu0 0.0
    %935 = vmatprep.subr.mxu0 0.0
    %936 = vmatpush1.xpose.msra.mxu0 0.0
    %937 = vmatprep.subr.mxu0 0.0
    %938 = vmatpush1.xpose.msra.mxu0 0.0
    %939 = vmatprep.subr.mxu0 0.0
    %940 = vmatpush1.xpose.msra.mxu0 0.0
    %941 = vmatprep.subr.mxu0 0.0
    %942 = vmatpush1.xpose.msra.mxu0 0.0
    %943 = vmatprep.subr.mxu0 0.0
    %944 = vmatpush1.xpose.msra.mxu0 0.0
    %945 = vmatprep.subr.mxu0 0.0
    %946 = vmatpush1.xpose.msra.mxu0 0.0
    %947 = vmatprep.mubr.f32.mxu0 0.0
    %948 = vmatmul.mubr.f32.gmra.mrb[0].mxu0 %v879
    %v949 = vpop.f32.mrb[0].mxu0
    %v950 = vadd.f32 0.0, %v949
    %v951 = vpop.f32.mrb[0].mxu0
    %952 = vdwg.mxu0
    %v953 = vmul.f32 %v872, 0.35355338
    %v954 = vmul.f32 %v950, 0.35355338
    %v955 = vadd.f32 %v953, %v59
    %v956 = vadd.f32 %v954, %v60
    %v957 = vsel %vm133, %v955, -inf
    %958 = vmax.xlane.f32.xlu0 %v957
    %v959 = vpop.xlane.xlu0 %958
    %v960 = vsel %vm133, %v956, -inf
    %961 = vmax.xlane.f32.xlu0 %v960
    %v962 = vpop.xlane.xlu0 %961
    %v963 = vsub.f32 %v955, %v959
    %v964 = vsub.f32 %v956, %v962
    %v965 = vmul.f32 %v963, 1.442695
    %v966 = vpow.pop %v965
    %v967 = vmul.f32 %v964, 1.442695
    %v968 = vpow.pop %v967
    %v969 = vsel %vm133, %v966, 0.0
    %970 = vadd.xlane.f32.xlu0 %v969
    %v971 = vpop.xlane.xlu0 %970
    %v972 = vsel %vm133, %v968, 0.0
    %973 = vadd.xlane.f32.xlu0 %v972
    %v974 = vpop.xlane.xlu0 %973
    %v975 = vrcp.pop %v971
    %v976 = vmul.f32 %v966, %v975
    %v977 = vrcp.pop %v974
    %v978 = vmul.f32 %v968, %v977
    %979 = vrot.lane.b32.xlu0 %v124, 48
    %v980 = vpop.permute.xlu0 %979
    %v983 = vsel %vm133, %v976, 0
    %985 = vmatprep.subr.mxu0 0.0
    %986 = vmatpush1.msra.mxu0 %v980
    %987 = vmatprep.subr.mxu0 0.0
    %988 = vmatpush1.msra.mxu0 0.0
    %989 = vmatprep.subr.mxu0 0.0
    %990 = vmatpush1.msra.mxu0 0.0
    %991 = vmatprep.subr.mxu0 0.0
    %992 = vmatpush1.msra.mxu0 0.0
    %993 = vmatprep.subr.mxu0 0.0
    %994 = vmatpush1.msra.mxu0 0.0
    %995 = vmatprep.subr.mxu0 0.0
    %996 = vmatpush1.msra.mxu0 0.0
    %997 = vmatprep.subr.mxu0 0.0
    %998 = vmatpush1.msra.mxu0 0.0
    %999 = vmatprep.subr.mxu0 0.0
    %1000 = vmatpush1.msra.mxu0 0.0
    %1001 = vmatprep.subr.mxu0 0.0
    %1002 = vmatpush1.msra.mxu0 0.0
    %1003 = vmatprep.subr.mxu0 0.0
    %1004 = vmatpush1.msra.mxu0 0.0
    %1005 = vmatprep.subr.mxu0 0.0
    %1006 = vmatpush1.msra.mxu0 0.0
    %1007 = vmatprep.subr.mxu0 0.0
    %1008 = vmatpush1.msra.mxu0 0.0
    %1009 = vmatprep.subr.mxu0 0.0
    %1010 = vmatpush1.msra.mxu0 0.0
    %1011 = vmatprep.subr.mxu0 0.0
    %1012 = vmatpush1.msra.mxu0 0.0
    %1013 = vmatprep.subr.mxu0 0.0
    %1014 = vmatpush1.msra.mxu0 0.0
    %1015 = vmatprep.subr.mxu0 0.0
    %1016 = vmatpush1.msra.mxu0 0.0
    %1017 = vmatprep.subr.mxu0 0.0
    %1018 = vmatpush1.msra.mxu0 0.0
    %1019 = vmatprep.subr.mxu0 0.0
    %1020 = vmatpush1.msra.mxu0 0.0
    %1021 = vmatprep.subr.mxu0 0.0
    %1022 = vmatpush1.msra.mxu0 0.0
    %1023 = vmatprep.subr.mxu0 0.0
    %1024 = vmatpush1.msra.mxu0 0.0
    %1025 = vmatprep.subr.mxu0 0.0
    %1026 = vmatpush1.msra.mxu0 0.0
    %1027 = vmatprep.subr.mxu0 0.0
    %1028 = vmatpush1.msra.mxu0 0.0
    %1029 = vmatprep.subr.mxu0 0.0
    %1030 = vmatpush1.msra.mxu0 0.0
    %1031 = vmatprep.subr.mxu0 0.0
    %1032 = vmatpush1.msra.mxu0 0.0
    %1033 = vmatprep.subr.mxu0 0.0
    %1034 = vmatpush1.msra.mxu0 0.0
    %1035 = vmatprep.subr.mxu0 0.0
    %1036 = vmatpush1.msra.mxu0 0.0
    %1037 = vmatprep.subr.mxu0 0.0
    %1038 = vmatpush1.msra.mxu0 0.0
    %1039 = vmatprep.subr.mxu0 0.0
    %1040 = vmatpush1.msra.mxu0 0.0
    %1041 = vmatprep.subr.mxu0 0.0
    %1042 = vmatpush1.msra.mxu0 0.0
    %1043 = vmatprep.subr.mxu0 0.0
    %1044 = vmatpush1.msra.mxu0 0.0
    %1045 = vmatprep.subr.mxu0 0.0
    %1046 = vmatpush1.msra.mxu0 0.0
    %1047 = vmatprep.subr.mxu0 0.0
    %1048 = vmatpush1.msra.mxu0 0.0
    %1049 = vmatprep.mubr.f32.mxu0 0.0
    %1050 = vmatmul.mubr.f32.gmra.mrb[0].mxu0 %v983
    %v1051 = vpop.f32.mrb[0].mxu0
    %v1052 = vadd.f32 0.0, %v1051
    %v1053 = vpop.f32.mrb[0].mxu0
    %1054 = vdwg.mxu0
    %1055 = vrot.lane.b32.xlu0 %v127, 48
    %v1056 = vpop.permute.xlu0 %1055
    %v1059 = vsel %vm133, %v978, 0
    %1061 = vmatprep.subr.mxu0 0.0
    %1062 = vmatpush1.msra.mxu0 %v1056
    %1063 = vmatprep.subr.mxu0 0.0
    %1064 = vmatpush1.msra.mxu0 0.0
    %1065 = vmatprep.subr.mxu0 0.0
    %1066 = vmatpush1.msra.mxu0 0.0
    %1067 = vmatprep.subr.mxu0 0.0
    %1068 = vmatpush1.msra.mxu0 0.0
    %1069 = vmatprep.subr.mxu0 0.0
    %1070 = vmatpush1.msra.mxu0 0.0
    %1071 = vmatprep.subr.mxu0 0.0
    %1072 = vmatpush1.msra.mxu0 0.0
    %1073 = vmatprep.subr.mxu0 0.0
    %1074 = vmatpush1.msra.mxu0 0.0
    %1075 = vmatprep.subr.mxu0 0.0
    %1076 = vmatpush1.msra.mxu0 0.0
    %1077 = vmatprep.subr.mxu0 0.0
    %1078 = vmatpush1.msra.mxu0 0.0
    %1079 = vmatprep.subr.mxu0 0.0
    %1080 = vmatpush1.msra.mxu0 0.0
    %1081 = vmatprep.subr.mxu0 0.0
    %1082 = vmatpush1.msra.mxu0 0.0
    %1083 = vmatprep.subr.mxu0 0.0
    %1084 = vmatpush1.msra.mxu0 0.0
    %1085 = vmatprep.subr.mxu0 0.0
    %1086 = vmatpush1.msra.mxu0 0.0
    %1087 = vmatprep.subr.mxu0 0.0
    %1088 = vmatpush1.msra.mxu0 0.0
    %1089 = vmatprep.subr.mxu0 0.0
    %1090 = vmatpush1.msra.mxu0 0.0
    %1091 = vmatprep.subr.mxu0 0.0
    %1092 = vmatpush1.msra.mxu0 0.0
    %1093 = vmatprep.subr.mxu0 0.0
    %1094 = vmatpush1.msra.mxu0 0.0
    %1095 = vmatprep.subr.mxu0 0.0
    %1096 = vmatpush1.msra.mxu0 0.0
    %1097 = vmatprep.subr.mxu0 0.0
    %1098 = vmatpush1.msra.mxu0 0.0
    %1099 = vmatprep.subr.mxu0 0.0
    %1100 = vmatpush1.msra.mxu0 0.0
    %1101 = vmatprep.subr.mxu0 0.0
    %1102 = vmatpush1.msra.mxu0 0.0
    %1103 = vmatprep.subr.mxu0 0.0
    %1104 = vmatpush1.msra.mxu0 0.0
    %1105 = vmatprep.subr.mxu0 0.0
    %1106 = vmatpush1.msra.mxu0 0.0
    %1107 = vmatprep.subr.mxu0 0.0
    %1108 = vmatpush1.msra.mxu0 0.0
    %1109 = vmatprep.subr.mxu0 0.0
    %1110 = vmatpush1.msra.mxu0 0.0
    %1111 = vmatprep.subr.mxu0 0.0
    %1112 = vmatpush1.msra.mxu0 0.0
    %1113 = vmatprep.subr.mxu0 0.0
    %1114 = vmatpush1.msra.mxu0 0.0
    %1115 = vmatprep.subr.mxu0 0.0
    %1116 = vmatpush1.msra.mxu0 0.0
    %1117 = vmatprep.subr.mxu0 0.0
    %1118 = vmatpush1.msra.mxu0 0.0
    %1119 = vmatprep.subr.mxu0 0.0
    %1120 = vmatpush1.msra.mxu0 0.0
    %1121 = vmatprep.subr.mxu0 0.0
    %1122 = vmatpush1.msra.mxu0 0.0
    %1123 = vmatprep.subr.mxu0 0.0
    %1124 = vmatpush1.msra.mxu0 0.0
    %1125 = vmatprep.mubr.f32.mxu0 0.0
    %1126 = vmatmul.mubr.f32.gmra.mrb[0].mxu0 %v1059
    %v1127 = vpop.f32.mrb[0].mxu0
    %v1128 = vadd.f32 0.0, %v1127
    %v1129 = vpop.f32.mrb[0].mxu0
    %1130 = vdwg.mxu0
    %1131 = vrot.lane.b32.xlu0 %v124, 104
    %v1132 = vpop.permute.xlu0 %1131
    %1133 = vrot.lane.b32.xlu0 %v124, 72
    %v1134 = vpop.permute.xlu0 %1133
    %v1135 = vsel %vm133, %v1132, 0
    %v1137 = vsel %vm133, %v1134, 0
    %1139 = vmatprep.subr.mxu0 0.0
    %1140 = vmatpush1.xpose.msra.mxu0 %v1137
    %1141 = vmatprep.subr.mxu0 0.0
    %1142 = vmatpush1.xpose.msra.mxu0 0.0
    %1143 = vmatprep.subr.mxu0 0.0
    %1144 = vmatpush1.xpose.msra.mxu0 0.0
    %1145 = vmatprep.subr.mxu0 0.0
    %1146 = vmatpush1.xpose.msra.mxu0 0.0
    %1147 = vmatprep.subr.mxu0 0.0
    %1148 = vmatpush1.xpose.msra.mxu0 0.0
    %1149 = vmatprep.subr.mxu0 0.0
    %1150 = vmatpush1.xpose.msra.mxu0 0.0
    %1151 = vmatprep.subr.mxu0 0.0
    %1152 = vmatpush1.xpose.msra.mxu0 0.0
    %1153 = vmatprep.subr.mxu0 0.0
    %1154 = vmatpush1.xpose.msra.mxu0 0.0
    %1155 = vmatprep.subr.mxu0 0.0
    %1156 = vmatpush1.xpose.msra.mxu0 0.0
    %1157 = vmatprep.subr.mxu0 0.0
    %1158 = vmatpush1.xpose.msra.mxu0 0.0
    %1159 = vmatprep.subr.mxu0 0.0
    %1160 = vmatpush1.xpose.msra.mxu0 0.0
    %1161 = vmatprep.subr.mxu0 0.0
    %1162 = vmatpush1.xpose.msra.mxu0 0.0
    %1163 = vmatprep.subr.mxu0 0.0
    %1164 = vmatpush1.xpose.msra.mxu0 0.0
    %1165 = vmatprep.subr.mxu0 0.0
    %1166 = vmatpush1.xpose.msra.mxu0 0.0
    %1167 = vmatprep.subr.mxu0 0.0
    %1168 = vmatpush1.xpose.msra.mxu0 0.0
    %1169 = vmatprep.subr.mxu0 0.0
    %1170 = vmatpush1.xpose.msra.mxu0 0.0
    %1171 = vmatprep.subr.mxu0 0.0
    %1172 = vmatpush1.xpose.msra.mxu0 0.0
    %1173 = vmatprep.subr.mxu0 0.0
    %1174 = vmatpush1.xpose.msra.mxu0 0.0
    %1175 = vmatprep.subr.mxu0 0.0
    %1176 = vmatpush1.xpose.msra.mxu0 0.0
    %1177 = vmatprep.subr.mxu0 0.0
    %1178 = vmatpush1.xpose.msra.mxu0 0.0
    %1179 = vmatprep.subr.mxu0 0.0
    %1180 = vmatpush1.xpose.msra.mxu0 0.0
    %1181 = vmatprep.subr.mxu0 0.0
    %1182 = vmatpush1.xpose.msra.mxu0 0.0
    %1183 = vmatprep.subr.mxu0 0.0
    %1184 = vmatpush1.xpose.msra.mxu0 0.0
    %1185 = vmatprep.subr.mxu0 0.0
    %1186 = vmatpush1.xpose.msra.mxu0 0.0
    %1187 = vmatprep.subr.mxu0 0.0
    %1188 = vmatpush1.xpose.msra.mxu0 0.0
    %1189 = vmatprep.subr.mxu0 0.0
    %1190 = vmatpush1.xpose.msra.mxu0 0.0
    %1191 = vmatprep.subr.mxu0 0.0
    %1192 = vmatpush1.xpose.msra.mxu0 0.0
    %1193 = vmatprep.subr.mxu0 0.0
    %1194 = vmatpush1.xpose.msra.mxu0 0.0
    %1195 = vmatprep.subr.mxu0 0.0
    %1196 = vmatpush1.xpose.msra.mxu0 0.0
    %1197 = vmatprep.subr.mxu0 0.0
    %1198 = vmatpush1.xpose.msra.mxu0 0.0
    %1199 = vmatprep.subr.mxu0 0.0
    %1200 = vmatpush1.xpose.msra.mxu0 0.0
    %1201 = vmatprep.subr.mxu0 0.0
    %1202 = vmatpush1.xpose.msra.mxu0 0.0
    %1203 = vmatprep.mubr.f32.mxu0 0.0
    %1204 = vmatmul.mubr.f32.gmra.mrb[0].mxu0 %v1135
    %v1205 = vpop.f32.mrb[0].mxu0
    %v1206 = vadd.f32 0.0, %v1205
    %v1207 = vpop.f32.mrb[0].mxu0
    %1208 = vdwg.mxu0
    %1209 = vrot.lane.b32.xlu0 %v127, 104
    %v1210 = vpop.permute.xlu0 %1209
    %1211 = vrot.lane.b32.xlu0 %v127, 72
    %v1212 = vpop.permute.xlu0 %1211
    %v1213 = vsel %vm133, %v1210, 0
    %v1215 = vsel %vm133, %v1212, 0
    %1217 = vmatprep.subr.mxu0 0.0
    %1218 = vmatpush1.xpose.msra.mxu0 %v1215
    %1219 = vmatprep.subr.mxu0 0.0
    %1220 = vmatpush1.xpose.msra.mxu0 0.0
    %1221 = vmatprep.subr.mxu0 0.0
    %1222 = vmatpush1.xpose.msra.mxu0 0.0
    %1223 = vmatprep.subr.mxu0 0.0
    %1224 = vmatpush1.xpose.msra.mxu0 0.0
    %1225 = vmatprep.subr.mxu0 0.0
    %1226 = vmatpush1.xpose.msra.mxu0 0.0
    %1227 = vmatprep.subr.mxu0 0.0
    %1228 = vmatpush1.xpose.msra.mxu0 0.0
    %1229 = vmatprep.subr.mxu0 0.0
    %1230 = vmatpush1.xpose.msra.mxu0 0.0
    %1231 = vmatprep.subr.mxu0 0.0
    %1232 = vmatpush1.xpose.msra.mxu0 0.0
    %1233 = vmatprep.subr.mxu0 0.0
    %1234 = vmatpush1.xpose.msra.mxu0 0.0
    %1235 = vmatprep.subr.mxu0 0.0
    %1236 = vmatpush1.xpose.msra.mxu0 0.0
    %1237 = vmatprep.subr.mxu0 0.0
    %1238 = vmatpush1.xpose.msra.mxu0 0.0
    %1239 = vmatprep.subr.mxu0 0.0
    %1240 = vmatpush1.xpose.msra.mxu0 0.0
    %1241 = vmatprep.subr.mxu0 0.0
    %1242 = vmatpush1.xpose.msra.mxu0 0.0
    %1243 = vmatprep.subr.mxu0 0.0
    %1244 = vmatpush1.xpose.msra.mxu0 0.0
    %1245 = vmatprep.subr.mxu0 0.0
    %1246 = vmatpush1.xpose.msra.mxu0 0.0
    %1247 = vmatprep.subr.mxu0 0.0
    %1248 = vmatpush1.xpose.msra.mxu0 0.0
    %1249 = vmatprep.subr.mxu0 0.0
    %1250 = vmatpush1.xpose.msra.mxu0 0.0
    %1251 = vmatprep.subr.mxu0 0.0
    %1252 = vmatpush1.xpose.msra.mxu0 0.0
    %1253 = vmatprep.subr.mxu0 0.0
    %1254 = vmatpush1.xpose.msra.mxu0 0.0
    %1255 = vmatprep.subr.mxu0 0.0
    %1256 = vmatpush1.xpose.msra.mxu0 0.0
    %1257 = vmatprep.subr.mxu0 0.0
    %1258 = vmatpush1.xpose.msra.mxu0 0.0
    %1259 = vmatprep.subr.mxu0 0.0
    %1260 = vmatpush1.xpose.msra.mxu0 0.0
    %1261 = vmatprep.subr.mxu0 0.0
    %1262 = vmatpush1.xpose.msra.mxu0 0.0
    %1263 = vmatprep.subr.mxu0 0.0
    %1264 = vmatpush1.xpose.msra.mxu0 0.0
    %1265 = vmatprep.subr.mxu0 0.0
    %1266 = vmatpush1.xpose.msra.mxu0 0.0
    %1267 = vmatprep.subr.mxu0 0.0
    %1268 = vmatpush1.xpose.msra.mxu0 0.0
    %1269 = vmatprep.subr.mxu0 0.0
    %1270 = vmatpush1.xpose.msra.mxu0 0.0
    %1271 = vmatprep.subr.mxu0 0.0
    %1272 = vmatpush1.xpose.msra.mxu0 0.0
    %1273 = vmatprep.subr.mxu0 0.0
    %1274 = vmatpush1.xpose.msra.mxu0 0.0
    %1275 = vmatprep.subr.mxu0 0.0
    %1276 = vmatpush1.xpose.msra.mxu0 0.0
    %1277 = vmatprep.subr.mxu0 0.0
    %1278 = vmatpush1.xpose.msra.mxu0 0.0
    %1279 = vmatprep.subr.mxu0 0.0
    %1280 = vmatpush1.xpose.msra.mxu0 0.0
    %1281 = vmatprep.mubr.f32.mxu0 0.0
    %1282 = vmatmul.mubr.f32.gmra.mrb[0].mxu0 %v1213
    %v1283 = vpop.f32.mrb[0].mxu0
    %v1284 = vadd.f32 0.0, %v1283
    %v1285 = vpop.f32.mrb[0].mxu0
    %1286 = vdwg.mxu0
    %v1287 = vmul.f32 %v1206, 0.35355338
    %v1288 = vmul.f32 %v1284, 0.35355338
    %v1289 = vadd.f32 %v1287, %v59
    %v1290 = vadd.f32 %v1288, %v60
    %v1291 = vsel %vm133, %v1289, -inf
    %1292 = vmax.xlane.f32.xlu0 %v1291
    %v1293 = vpop.xlane.xlu0 %1292
    %v1294 = vsel %vm133, %v1290, -inf
    %1295 = vmax.xlane.f32.xlu0 %v1294
    %v1296 = vpop.xlane.xlu0 %1295
    %v1297 = vsub.f32 %v1289, %v1293
    %v1298 = vsub.f32 %v1290, %v1296
    %v1299 = vmul.f32 %v1297, 1.442695
    %v1300 = vpow.pop %v1299
    %v1301 = vmul.f32 %v1298, 1.442695
    %v1302 = vpow.pop %v1301
    %v1303 = vsel %vm133, %v1300, 0.0
    %1304 = vadd.xlane.f32.xlu0 %v1303
    %v1305 = vpop.xlane.xlu0 %1304
    %v1306 = vsel %vm133, %v1302, 0.0
    %1307 = vadd.xlane.f32.xlu0 %v1306
    %v1308 = vpop.xlane.xlu0 %1307
    %v1309 = vrcp.pop %v1305
    %v1310 = vmul.f32 %v1300, %v1309
    %v1311 = vrcp.pop %v1308
    %v1312 = vmul.f32 %v1302, %v1311
    %1313 = vrot.lane.b32.xlu0 %v124, 40
    %v1314 = vpop.permute.xlu0 %1313
    %v1317 = vsel %vm133, %v1310, 0
    %1319 = vmatprep.subr.mxu0 0.0
    %1320 = vmatpush1.msra.mxu0 %v1314
    %1321 = vmatprep.subr.mxu0 0.0
    %1322 = vmatpush1.msra.mxu0 0.0
    %1323 = vmatprep.subr.mxu0 0.0
    %1324 = vmatpush1.msra.mxu0 0.0
    %1325 = vmatprep.subr.mxu0 0.0
    %1326 = vmatpush1.msra.mxu0 0.0
    %1327 = vmatprep.subr.mxu0 0.0
    %1328 = vmatpush1.msra.mxu0 0.0
    %1329 = vmatprep.subr.mxu0 0.0
    %1330 = vmatpush1.msra.mxu0 0.0
    %1331 = vmatprep.subr.mxu0 0.0
    %1332 = vmatpush1.msra.mxu0 0.0
    %1333 = vmatprep.subr.mxu0 0.0
    %1334 = vmatpush1.msra.mxu0 0.0
    %1335 = vmatprep.subr.mxu0 0.0
    %1336 = vmatpush1.msra.mxu0 0.0
    %1337 = vmatprep.subr.mxu0 0.0
    %1338 = vmatpush1.msra.mxu0 0.0
    %1339 = vmatprep.subr.mxu0 0.0
    %1340 = vmatpush1.msra.mxu0 0.0
    %1341 = vmatprep.subr.mxu0 0.0
    %1342 = vmatpush1.msra.mxu0 0.0
    %1343 = vmatprep.subr.mxu0 0.0
    %1344 = vmatpush1.msra.mxu0 0.0
    %1345 = vmatprep.subr.mxu0 0.0
    %1346 = vmatpush1.msra.mxu0 0.0
    %1347 = vmatprep.subr.mxu0 0.0
    %1348 = vmatpush1.msra.mxu0 0.0
    %1349 = vmatprep.subr.mxu0 0.0
    %1350 = vmatpush1.msra.mxu0 0.0
    %1351 = vmatprep.subr.mxu0 0.0
    %1352 = vmatpush1.msra.mxu0 0.0
    %1353 = vmatprep.subr.mxu0 0.0
    %1354 = vmatpush1.msra.mxu0 0.0
    %1355 = vmatprep.subr.mxu0 0.0
    %1356 = vmatpush1.msra.mxu0 0.0
    %1357 = vmatprep.subr.mxu0 0.0
    %1358 = vmatpush1.msra.mxu0 0.0
    %1359 = vmatprep.subr.mxu0 0.0
    %1360 = vmatpush1.msra.mxu0 0.0
    %1361 = vmatprep.subr.mxu0 0.0
    %1362 = vmatpush1.msra.mxu0 0.0
    %1363 = vmatprep.subr.mxu0 0.0
    %1364 = vmatpush1.msra.mxu0 0.0
    %1365 = vmatprep.subr.mxu0 0.0
    %1366 = vmatpush1.msra.mxu0 0.0
    %1367 = vmatprep.subr.mxu0 0.0
    %1368 = vmatpush1.msra.mxu0 0.0
    %1369 = vmatprep.subr.mxu0 0.0
    %1370 = vmatpush1.msra.mxu0 0.0
    %1371 = vmatprep.subr.mxu0 0.0
    %1372 = vmatpush1.msra.mxu0 0.0
    %1373 = vmatprep.subr.mxu0 0.0
    %1374 = vmatpush1.msra.mxu0 0.0
    %1375 = vmatprep.subr.mxu0 0.0
    %1376 = vmatpush1.msra.mxu0 0.0
    %1377 = vmatprep.subr.mxu0 0.0
    %1378 = vmatpush1.msra.mxu0 0.0
    %1379 = vmatprep.subr.mxu0 0.0
    %1380 = vmatpush1.msra.mxu0 0.0
    %1381 = vmatprep.subr.mxu0 0.0
    %1382 = vmatpush1.msra.mxu0 0.0
    %1383 = vmatprep.mubr.f32.mxu0 0.0
    %1384 = vmatmul.mubr.f32.gmra.mrb[0].mxu0 %v1317
    %v1385 = vpop.f32.mrb[0].mxu0
    %v1386 = vadd.f32 0.0, %v1385
    %v1387 = vpop.f32.mrb[0].mxu0
    %1388 = vdwg.mxu0
    %1389 = vrot.lane.b32.xlu0 %v127, 40
    %v1390 = vpop.permute.xlu0 %1389
    %v1393 = vsel %vm133, %v1312, 0
    %1395 = vmatprep.subr.mxu0 0.0
    %1396 = vmatpush1.msra.mxu0 %v1390
    %1397 = vmatprep.subr.mxu0 0.0
    %1398 = vmatpush1.msra.mxu0 0.0
    %1399 = vmatprep.subr.mxu0 0.0
    %1400 = vmatpush1.msra.mxu0 0.0
    %1401 = vmatprep.subr.mxu0 0.0
    %1402 = vmatpush1.msra.mxu0 0.0
    %1403 = vmatprep.subr.mxu0 0.0
    %1404 = vmatpush1.msra.mxu0 0.0
    %1405 = vmatprep.subr.mxu0 0.0
    %1406 = vmatpush1.msra.mxu0 0.0
    %1407 = vmatprep.subr.mxu0 0.0
    %1408 = vmatpush1.msra.mxu0 0.0
    %1409 = vmatprep.subr.mxu0 0.0
    %1410 = vmatpush1.msra.mxu0 0.0
    %1411 = vmatprep.subr.mxu0 0.0
    %1412 = vmatpush1.msra.mxu0 0.0
    %1413 = vmatprep.subr.mxu0 0.0
    %1414 = vmatpush1.msra.mxu0 0.0
    %1415 = vmatprep.subr.mxu0 0.0
    %1416 = vmatpush1.msra.mxu0 0.0
    %1417 = vmatprep.subr.mxu0 0.0
    %1418 = vmatpush1.msra.mxu0 0.0
    %1419 = vmatprep.subr.mxu0 0.0
    %1420 = vmatpush1.msra.mxu0 0.0
    %1421 = vmatprep.subr.mxu0 0.0
    %1422 = vmatpush1.msra.mxu0 0.0
    %1423 = vmatprep.subr.mxu0 0.0
    %1424 = vmatpush1.msra.mxu0 0.0
    %1425 = vmatprep.subr.mxu0 0.0
    %1426 = vmatpush1.msra.mxu0 0.0
    %1427 = vmatprep.subr.mxu0 0.0
    %1428 = vmatpush1.msra.mxu0 0.0
    %1429 = vmatprep.subr.mxu0 0.0
    %1430 = vmatpush1.msra.mxu0 0.0
    %1431 = vmatprep.subr.mxu0 0.0
    %1432 = vmatpush1.msra.mxu0 0.0
    %1433 = vmatprep.subr.mxu0 0.0
    %1434 = vmatpush1.msra.mxu0 0.0
    %1435 = vmatprep.subr.mxu0 0.0
    %1436 = vmatpush1.msra.mxu0 0.0
    %1437 = vmatprep.subr.mxu0 0.0
    %1438 = vmatpush1.msra.mxu0 0.0
    %1439 = vmatprep.subr.mxu0 0.0
    %1440 = vmatpush1.msra.mxu0 0.0
    %1441 = vmatprep.subr.mxu0 0.0
    %1442 = vmatpush1.msra.mxu0 0.0
    %1443 = vmatprep.subr.mxu0 0.0
    %1444 = vmatpush1.msra.mxu0 0.0
    %1445 = vmatprep.subr.mxu0 0.0
    %1446 = vmatpush1.msra.mxu0 0.0
    %1447 = vmatprep.subr.mxu0 0.0
    %1448 = vmatpush1.msra.mxu0 0.0
    %1449 = vmatprep.subr.mxu0 0.0
    %1450 = vmatpush1.msra.mxu0 0.0
    %1451 = vmatprep.subr.mxu0 0.0
    %1452 = vmatpush1.msra.mxu0 0.0
    %1453 = vmatprep.subr.mxu0 0.0
    %1454 = vmatpush1.msra.mxu0 0.0
    %1455 = vmatprep.subr.mxu0 0.0
    %1456 = vmatpush1.msra.mxu0 0.0
    %1457 = vmatprep.subr.mxu0 0.0
    %1458 = vmatpush1.msra.mxu0 0.0
    %1459 = vmatprep.mubr.f32.mxu0 0.0
    %1460 = vmatmul.mubr.f32.gmra.mrb[0].mxu0 %v1393
    %v1461 = vpop.f32.mrb[0].mxu0
    %v1462 = vadd.f32 0.0, %v1461
    %v1463 = vpop.f32.mrb[0].mxu0
    %1464 = vdwg.mxu0
    %1467 = vrot.lane.b32.xlu0 %v718, 8
    %v1468 = vpop.permute.xlu0 %1467
    %1469 = vrot.lane.b32.xlu0 %v794, 8
    %v1470 = vpop.permute.xlu0 %1469
    %1475 = vrot.lane.b32.xlu0 %v1052, 16
    %v1476 = vpop.permute.xlu0 %1475
    %1477 = vrot.lane.b32.xlu0 %v1128, 16
    %v1478 = vpop.permute.xlu0 %1477
    %1483 = vrot.lane.b32.xlu0 %v1386, 24
    %v1484 = vpop.permute.xlu0 %1483
    %1485 = vrot.lane.b32.xlu0 %v1462, 24
    %v1486 = vpop.permute.xlu0 %1485
    %v1489 = vsel %vm133, %v384, %v1468
    %v1490 = vsel %vm133, %v460, %v1470
    %vm1491 = vcmask 130048
    %v1492 = vsel %vm1491, %v1489, %v1476
    %v1493 = vsel %vm1491, %v1490, %v1478
    %vm1494 = vcmask 195584
    %v1495 = vsel %vm1494, %v1492, %v1484
    %v1496 = vsel %vm1494, %v1493, %v1486
    %1497 = vrot.lane.b32.xlu0 %v642, 8
    %v1498 = vpop.permute.xlu0 %1497
    %1499 = vrot.lane.b32.xlu0 %v644, 8
    %v1500 = vpop.permute.xlu0 %1499
    %1503 = vrot.lane.b32.xlu0 %v976, 16
    %v1504 = vpop.permute.xlu0 %1503
    %1505 = vrot.lane.b32.xlu0 %v978, 16
    %v1506 = vpop.permute.xlu0 %1505
    %1509 = vrot.lane.b32.xlu0 %v1310, 24
    %v1510 = vpop.permute.xlu0 %1509
    %1511 = vrot.lane.b32.xlu0 %v1312, 24
    %v1512 = vpop.permute.xlu0 %1511
    %v1515 = vsel %vm133, %v308, %v1498
    %v1516 = vsel %vm133, %v310, %v1500
    %v1517 = vsel %vm1491, %v1515, %v1504
    %v1518 = vsel %vm1491, %v1516, %v1506
    %v1519 = vsel %vm1494, %v1517, %v1510
    %v1520 = vsel %vm1494, %v1518, %v1512
    %1521 = vst.msk [vmem:[%s17] sm:$0xff] %vm85, %v1519
    %1522 = vst.msk [vmem:[%s17 + $0x8] sm:$0xff] %vm85, %v1520
    %v1523 = vpack.c.bf16 %v1496, %v1495
    %v1524 = vld [vmem:[%s4] sm:$0xf]
    %v1525 = vld [vmem:[%s4 + $0x4] sm:$0xf]
    %v1526 = vld [vmem:[%s4 + $0x8] sm:$0xf]
    %v1527 = vld [vmem:[%s4 + $0xc] sm:$0xf]
    %v1528 = vld [vmem:[%s5] sm:$0x1]
    %v1530 = vlaneseq
    %v1531 = vshrl.u32 %v1530, 7
    %v1532 = vsub.s32 0, %v1531
    %v1533 = vrot.slane %v1528, %v1532
    %v1539 = vunpack.c.l.b16 %v1524
    %v1540 = vunpack.c.l.b16 %v1525
    %v1541 = vunpack.c.l.b16 %v1526
    %v1542 = vunpack.c.l.b16 %v1527
    %v1543 = vpack.c.b16 %v1540, %v1539
    %v1544 = vpack.c.b16 %v1542, %v1541
    %v1548 = vsel %vm85, %v1523, 0
    %1550 = vmatprep.subr.bf16.mxu0 0
    %1551 = vmatpush1.bf16.msra.mxu0 %v1543
    %1552 = vmatprep.subr.bf16.mxu0 0
    %1553 = vmatpush1.bf16.msra.mxu0 %v1544
    %1554 = vmatprep.subr.bf16.mxu0 0
    %1555 = vmatpush1.bf16.msra.mxu0 0
    %1556 = vmatprep.subr.bf16.mxu0 0
    %1557 = vmatpush1.bf16.msra.mxu0 0
    %1558 = vmatprep.subr.bf16.mxu0 0
    %1559 = vmatpush1.bf16.msra.mxu0 0
    %1560 = vmatprep.subr.bf16.mxu0 0
    %1561 = vmatpush1.bf16.msra.mxu0 0
    %1562 = vmatprep.subr.bf16.mxu0 0
    %1563 = vmatpush1.bf16.msra.mxu0 0
    %1564 = vmatprep.subr.bf16.mxu0 0
    %1565 = vmatpush1.bf16.msra.mxu0 0
    %1566 = vmatprep.subr.bf16.mxu0 0
    %1567 = vmatpush1.bf16.msra.mxu0 0
    %1568 = vmatprep.subr.bf16.mxu0 0
    %1569 = vmatpush1.bf16.msra.mxu0 0
    %1570 = vmatprep.subr.bf16.mxu0 0
    %1571 = vmatpush1.bf16.msra.mxu0 0
    %1572 = vmatprep.subr.bf16.mxu0 0
    %1573 = vmatpush1.bf16.msra.mxu0 0
    %1574 = vmatprep.subr.bf16.mxu0 0
    %1575 = vmatpush1.bf16.msra.mxu0 0
    %1576 = vmatprep.subr.bf16.mxu0 0
    %1577 = vmatpush1.bf16.msra.mxu0 0
    %1578 = vmatprep.subr.bf16.mxu0 0
    %1579 = vmatpush1.bf16.msra.mxu0 0
    %1580 = vmatprep.subr.bf16.mxu0 0
    %1581 = vmatpush1.bf16.msra.mxu0 0
    %1582 = vmatprep.mubr.bf16.mxu0 0
    %1583 = vmatmul.mubr.bf16.gmra.mrb[0].mxu0 %v1548
    %v1584 = vpop.f32.mrb[0].mxu0
    %v1585 = vadd.f32 %v1533, %v1584
    %v1586 = vpop.f32.mrb[0].mxu0
    %v1587 = vpop.f32.mrb[0].mxu0
    %v1588 = vadd.f32 %v1533, %v1587
    %v1589 = vpop.f32.mrb[0].mxu0
    %1590 = vdwg.mxu0
    %v1591 = vadd.f32 %v1585, %v57
    %v1592 = vadd.f32 %v1588, %v58
    %v1593 = vld [vmem:[%s6] sm:$0x1]
    %v1594 = vld [vmem:[%s7] sm:$0x1]
    %v1595 = vsel %vm85, %v1591, 0.0
    %1596 = vadd.xlane.f32.xlu0 %v1595
    %v1597 = vpop.xlane.xlu0 %1596
    %v1598 = vsel %vm85, %v1592, 0.0
    %1599 = vadd.xlane.f32.xlu0 %v1598
    %v1600 = vpop.xlane.xlu0 %1599
    %v1601 = vrcp.pop 32.0
    %v1602 = vmul.f32 %v1597, %v1601
    %v1603 = vmul.f32 %v1600, %v1601
    %v1604 = vsub.f32 %v1591, %v1602
    %v1605 = vsub.f32 %v1592, %v1603
    %v1606 = vmul.f32 %v1604, %v1604
    %v1607 = vmul.f32 %v1605, %v1605
    %v1608 = vsel %vm85, %v1606, 0.0
    %1609 = vadd.xlane.f32.xlu0 %v1608
    %v1610 = vpop.xlane.xlu0 %1609
    %v1611 = vsel %vm85, %v1607, 0.0
    %1612 = vadd.xlane.f32.xlu0 %v1611
    %v1613 = vpop.xlane.xlu0 %1612
    %v1614 = vmul.f32 %v1610, %v1601
    %v1615 = vmul.f32 %v1613, %v1601
    %v1616 = vadd.f32 %v1614, 1e-05
    %v1617 = vadd.f32 %v1615, 1e-05
    %v1618 = vrsqrt.pop %v1616
    %v1619 = vrsqrt.pop %v1617
    %v1620 = vmul.f32 %v1604, %v1618
    %v1621 = vmul.f32 %v1605, %v1619
    %v1623 = vlaneseq
    %v1624 = vshrl.u32 %v1623, 7
    %v1625 = vsub.s32 0, %v1624
    %v1626 = vrot.slane %v1593, %v1625
    %v1628 = vmul.f32 %v1620, %v1626
    %v1629 = vmul.f32 %v1621, %v1626
    %v1631 = vlaneseq
    %v1632 = vshrl.u32 %v1631, 7
    %v1633 = vsub.s32 0, %v1632
    %v1634 = vrot.slane %v1594, %v1633
    %v1636 = vadd.f32 %v1628, %v1634
    %v1637 = vadd.f32 %v1629, %v1634
    %v1638 = vpack.c.bf16 %v1637, %v1636
    %v1639 = vld [vmem:[%s8] sm:$0xf]
    %v1640 = vld [vmem:[%s8 + $0x4] sm:$0xf]
    %v1641 = vld [vmem:[%s8 + $0x8] sm:$0xf]
    %v1642 = vld [vmem:[%s8 + $0xc] sm:$0xf]
    %v1643 = vld [vmem:[%s9] sm:$0x1]
    %v1645 = vlaneseq
    %v1646 = vshrl.u32 %v1645, 7
    %v1647 = vsub.s32 0, %v1646
    %v1648 = vrot.slane %v1643, %v1647
    %v1654 = vunpack.c.l.b16 %v1639
    %v1655 = vunpack.c.l.b16 %v1640
    %v1656 = vunpack.c.l.b16 %v1641
    %v1657 = vunpack.c.l.b16 %v1642
    %v1658 = vpack.c.b16 %v1655, %v1654
    %v1659 = vpack.c.b16 %v1657, %v1656
    %v1663 = vsel %vm85, %v1638, 0
    %1665 = vmatprep.subr.bf16.mxu0 0
    %1666 = vmatpush1.bf16.msra.mxu0 %v1658
    %1667 = vmatprep.subr.bf16.mxu0 0
    %1668 = vmatpush1.bf16.msra.mxu0 %v1659
    %1669 = vmatprep.subr.bf16.mxu0 0
    %1670 = vmatpush1.bf16.msra.mxu0 0
    %1671 = vmatprep.subr.bf16.mxu0 0
    %1672 = vmatpush1.bf16.msra.mxu0 0
    %1673 = vmatprep.subr.bf16.mxu0 0
    %1674 = vmatpush1.bf16.msra.mxu0 0
    %1675 = vmatprep.subr.bf16.mxu0 0
    %1676 = vmatpush1.bf16.msra.mxu0 0
    %1677 = vmatprep.subr.bf16.mxu0 0
    %1678 = vmatpush1.bf16.msra.mxu0 0
    %1679 = vmatprep.subr.bf16.mxu0 0
    %1680 = vmatpush1.bf16.msra.mxu0 0
    %1681 = vmatprep.subr.bf16.mxu0 0
    %1682 = vmatpush1.bf16.msra.mxu0 0
    %1683 = vmatprep.subr.bf16.mxu0 0
    %1684 = vmatpush1.bf16.msra.mxu0 0
    %1685 = vmatprep.subr.bf16.mxu0 0
    %1686 = vmatpush1.bf16.msra.mxu0 0
    %1687 = vmatprep.subr.bf16.mxu0 0
    %1688 = vmatpush1.bf16.msra.mxu0 0
    %1689 = vmatprep.subr.bf16.mxu0 0
    %1690 = vmatpush1.bf16.msra.mxu0 0
    %1691 = vmatprep.subr.bf16.mxu0 0
    %1692 = vmatpush1.bf16.msra.mxu0 0
    %1693 = vmatprep.subr.bf16.mxu0 0
    %1694 = vmatpush1.bf16.msra.mxu0 0
    %1695 = vmatprep.subr.bf16.mxu0 0
    %1696 = vmatpush1.bf16.msra.mxu0 0
    %1697 = vmatprep.mubr.bf16.mxu0 0
    %1698 = vmatmul.mubr.bf16.gmra.mrb[0].mxu0 %v1663
    %v1699 = vpop.f32.mrb[0].mxu0
    %v1700 = vadd.f32 %v1648, %v1699
    %v1701 = vpop.f32.mrb[0].mxu0
    %v1702 = vpop.f32.mrb[0].mxu0
    %v1703 = vadd.f32 %v1648, %v1702
    %v1704 = vpop.f32.mrb[0].mxu0
    %1705 = vdwg.mxu0
    %v1706 = vmax.f32 %v1700, 0.0
    %v1707 = vmax.f32 %v1703, 0.0
    %v1708 = vpack.c.bf16 %v1707, %v1706
    %v1709 = vld [vmem:[%s10] sm:$0xf]
    %v1710 = vld [vmem:[%s10 + $0x4] sm:$0xf]
    %v1711 = vld [vmem:[%s10 + $0x8] sm:$0xf]
    %v1712 = vld [vmem:[%s10 + $0xc] sm:$0xf]
    %v1713 = vld [vmem:[%s10 + $0x10] sm:$0xf]
    %v1714 = vld [vmem:[%s10 + $0x14] sm:$0xf]
    %v1715 = vld [vmem:[%s10 + $0x18] sm:$0xf]
    %v1716 = vld [vmem:[%s10 + $0x1c] sm:$0xf]
    %v1717 = vld [vmem:[%s10 + $0x20] sm:$0xf]
    %v1718 = vld [vmem:[%s10 + $0x24] sm:$0xf]
    %v1719 = vld [vmem:[%s10 + $0x28] sm:$0xf]
    %v1720 = vld [vmem:[%s10 + $0x2c] sm:$0xf]
    %v1721 = vld [vmem:[%s10 + $0x30] sm:$0xf]
    %v1722 = vld [vmem:[%s10 + $0x34] sm:$0xf]
    %v1723 = vld [vmem:[%s10 + $0x38] sm:$0xf]
    %v1724 = vld [vmem:[%s10 + $0x3c] sm:$0xf]
    %v1725 = vld [vmem:[%s11] sm:$0x1]
    %v1727 = vlaneseq
    %v1728 = vshrl.u32 %v1727, 7
    %v1729 = vsub.s32 0, %v1728
    %v1730 = vrot.slane %v1725, %v1729
    %v1748 = vunpack.c.l.b16 %v1709
    %v1749 = vunpack.c.l.b16 %v1710
    %v1750 = vunpack.c.l.b16 %v1711
    %v1751 = vunpack.c.l.b16 %v1712
    %v1752 = vunpack.c.l.b16 %v1713
    %v1753 = vunpack.c.l.b16 %v1714
    %v1754 = vunpack.c.l.b16 %v1715
    %v1755 = vunpack.c.l.b16 %v1716
    %v1756 = vunpack.c.l.b16 %v1717
    %v1757 = vunpack.c.l.b16 %v1718
    %v1758 = vunpack.c.l.b16 %v1719
    %v1759 = vunpack.c.l.b16 %v1720
    %v1760 = vunpack.c.l.b16 %v1721
    %v1761 = vunpack.c.l.b16 %v1722
    %v1762 = vunpack.c.l.b16 %v1723
    %v1763 = vunpack.c.l.b16 %v1724
    %v1764 = vpack.c.b16 %v1749, %v1748
    %v1765 = vpack.c.b16 %v1751, %v1750
    %v1766 = vpack.c.b16 %v1753, %v1752
    %v1767 = vpack.c.b16 %v1755, %v1754
    %v1768 = vpack.c.b16 %v1757, %v1756
    %v1769 = vpack.c.b16 %v1759, %v1758
    %v1770 = vpack.c.b16 %v1761, %v1760
    %v1771 = vpack.c.b16 %v1763, %v1762
    %1780 = vmatprep.subr.bf16.mxu0 0
    %1781 = vmatpush1.bf16.msra.mxu0 %v1764
    %1782 = vmatprep.subr.bf16.mxu0 0
    %1783 = vmatpush1.bf16.msra.mxu0 %v1765
    %1784 = vmatprep.subr.bf16.mxu0 0
    %1785 = vmatpush1.bf16.msra.mxu0 %v1766
    %1786 = vmatprep.subr.bf16.mxu0 0
    %1787 = vmatpush1.bf16.msra.mxu0 %v1767
    %1788 = vmatprep.subr.bf16.mxu0 0
    %1789 = vmatpush1.bf16.msra.mxu0 %v1768
    %1790 = vmatprep.subr.bf16.mxu0 0
    %1791 = vmatpush1.bf16.msra.mxu0 %v1769
    %1792 = vmatprep.subr.bf16.mxu0 0
    %1793 = vmatpush1.bf16.msra.mxu0 %v1770
    %1794 = vmatprep.subr.bf16.mxu0 0
    %1795 = vmatpush1.bf16.msra.mxu0 %v1771
    %1796 = vmatprep.subr.bf16.mxu0 0
    %1797 = vmatpush1.bf16.msra.mxu0 0
    %1798 = vmatprep.subr.bf16.mxu0 0
    %1799 = vmatpush1.bf16.msra.mxu0 0
    %1800 = vmatprep.subr.bf16.mxu0 0
    %1801 = vmatpush1.bf16.msra.mxu0 0
    %1802 = vmatprep.subr.bf16.mxu0 0
    %1803 = vmatpush1.bf16.msra.mxu0 0
    %1804 = vmatprep.subr.bf16.mxu0 0
    %1805 = vmatpush1.bf16.msra.mxu0 0
    %1806 = vmatprep.subr.bf16.mxu0 0
    %1807 = vmatpush1.bf16.msra.mxu0 0
    %1808 = vmatprep.subr.bf16.mxu0 0
    %1809 = vmatpush1.bf16.msra.mxu0 0
    %1810 = vmatprep.subr.bf16.mxu0 0
    %1811 = vmatpush1.bf16.msra.mxu0 0
    %1812 = vmatprep.mubr.bf16.mxu0 0
    %1813 = vmatmul.mubr.bf16.gmra.mrb[0].mxu0 %v1708
    %v1814 = vpop.f32.mrb[0].mxu0
    %v1815 = vadd.f32 %v1730, %v1814
    %v1816 = vpop.f32.mrb[0].mxu0
    %v1817 = vpop.f32.mrb[0].mxu0
    %v1818 = vadd.f32 %v1730, %v1817
    %v1819 = vpop.f32.mrb[0].mxu0
    %1820 = vdwg.mxu0
    %v1821 = vadd.f32 %v1815, %v1636
    %v1822 = vadd.f32 %v1818, %v1637
    %v1823 = vld [vmem:[%s12] sm:$0x1]
    %v1824 = vld [vmem:[%s13] sm:$0x1]
    %v1825 = vsel %vm85, %v1821, 0.0
    %1826 = vadd.xlane.f32.xlu0 %v1825
    %v1827 = vpop.xlane.xlu0 %1826
    %v1828 = vsel %vm85, %v1822, 0.0
    %1829 = vadd.xlane.f32.xlu0 %v1828
    %v1830 = vpop.xlane.xlu0 %1829
    %v1831 = vmul.f32 %v1827, %v1601
    %v1832 = vmul.f32 %v1830, %v1601
    %v1833 = vsub.f32 %v1821, %v1831
    %v1834 = vsub.f32 %v1822, %v1832
    %v1835 = vmul.f32 %v1833, %v1833
    %v1836 = vmul.f32 %v1834, %v1834
    %v1837 = vsel %vm85, %v1835, 0.0
    %1838 = vadd.xlane.f32.xlu0 %v1837
    %v1839 = vpop.xlane.xlu0 %1838
    %v1840 = vsel %vm85, %v1836, 0.0
    %1841 = vadd.xlane.f32.xlu0 %v1840
    %v1842 = vpop.xlane.xlu0 %1841
    %v1843 = vmul.f32 %v1839, %v1601
    %v1844 = vmul.f32 %v1842, %v1601
    %v1845 = vadd.f32 %v1843, 1e-05
    %v1846 = vadd.f32 %v1844, 1e-05
    %v1847 = vrsqrt.pop %v1845
    %v1848 = vrsqrt.pop %v1846
    %v1849 = vmul.f32 %v1833, %v1847
    %v1850 = vmul.f32 %v1834, %v1848
    %v1852 = vlaneseq
    %v1853 = vshrl.u32 %v1852, 7
    %v1854 = vsub.s32 0, %v1853
    %v1855 = vrot.slane %v1823, %v1854
    %v1857 = vmul.f32 %v1849, %v1855
    %v1858 = vmul.f32 %v1850, %v1855
    %v1860 = vlaneseq
    %v1861 = vshrl.u32 %v1860, 7
    %v1862 = vsub.s32 0, %v1861
    %v1863 = vrot.slane %v1824, %v1862
    %v1865 = vadd.f32 %v1857, %v1863
    %v1866 = vadd.f32 %v1858, %v1863
    %v1867 = vpack.c.bf16 %v1866, %v1865
    %s1868 = scalar_lea.vmem %s2, 16
    %v1869 = vld [vmem:[%s1868] sm:$0xf]
    %v1870 = vld [vmem:[%s1868 + $0x4] sm:$0xf]
    %v1871 = vld [vmem:[%s1868 + $0x8] sm:$0xf]
    %v1872 = vld [vmem:[%s1868 + $0xc] sm:$0xf]
    %s1873 = scalar_lea.vmem %s3, 1
    %v1874 = vld [vmem:[%s1873] sm:$0x1]
    %v1876 = vlaneseq
    %v1877 = vshrl.u32 %v1876, 7
    %v1878 = vsub.s32 0, %v1877
    %v1879 = vrot.slane %v1874, %v1878
    %v1885 = vunpack.c.l.b16 %v1869
    %v1886 = vunpack.c.l.b16 %v1870
    %v1887 = vunpack.c.l.b16 %v1871
    %v1888 = vunpack.c.l.b16 %v1872
    %v1889 = vpack.c.b16 %v1886, %v1885
    %v1890 = vpack.c.b16 %v1888, %v1887
    %v1894 = vsel %vm85, %v1867, 0
    %1896 = vmatprep.subr.bf16.mxu0 0
    %1897 = vmatpush1.bf16.msra.mxu0 %v1889
    %1898 = vmatprep.subr.bf16.mxu0 0
    %1899 = vmatpush1.bf16.msra.mxu0 %v1890
    %1900 = vmatprep.subr.bf16.mxu0 0
    %1901 = vmatpush1.bf16.msra.mxu0 0
    %1902 = vmatprep.subr.bf16.mxu0 0
    %1903 = vmatpush1.bf16.msra.mxu0 0
    %1904 = vmatprep.subr.bf16.mxu0 0
    %1905 = vmatpush1.bf16.msra.mxu0 0
    %1906 = vmatprep.subr.bf16.mxu0 0
    %1907 = vmatpush1.bf16.msra.mxu0 0
    %1908 = vmatprep.subr.bf16.mxu0 0
    %1909 = vmatpush1.bf16.msra.mxu0 0
    %1910 = vmatprep.subr.bf16.mxu0 0
    %1911 = vmatpush1.bf16.msra.mxu0 0
    %1912 = vmatprep.subr.bf16.mxu0 0
    %1913 = vmatpush1.bf16.msra.mxu0 0
    %1914 = vmatprep.subr.bf16.mxu0 0
    %1915 = vmatpush1.bf16.msra.mxu0 0
    %1916 = vmatprep.subr.bf16.mxu0 0
    %1917 = vmatpush1.bf16.msra.mxu0 0
    %1918 = vmatprep.subr.bf16.mxu0 0
    %1919 = vmatpush1.bf16.msra.mxu0 0
    %1920 = vmatprep.subr.bf16.mxu0 0
    %1921 = vmatpush1.bf16.msra.mxu0 0
    %1922 = vmatprep.subr.bf16.mxu0 0
    %1923 = vmatpush1.bf16.msra.mxu0 0
    %1924 = vmatprep.subr.bf16.mxu0 0
    %1925 = vmatpush1.bf16.msra.mxu0 0
    %1926 = vmatprep.subr.bf16.mxu0 0
    %1927 = vmatpush1.bf16.msra.mxu0 0
    %1928 = vmatprep.mubr.bf16.mxu0 0
    %1929 = vmatmul.mubr.bf16.gmra.mrb[0].mxu0 %v1894
    %v1930 = vpop.f32.mrb[0].mxu0
    %v1931 = vadd.f32 %v1879, %v1930
    %v1932 = vpop.f32.mrb[0].mxu0
    %v1933 = vpop.f32.mrb[0].mxu0
    %v1934 = vadd.f32 %v1879, %v1933
    %v1935 = vpop.f32.mrb[0].mxu0
    %1936 = vdwg.mxu0
    %1938 = vrot.lane.b32.xlu0 %v1931, 96
    %v1939 = vpop.permute.xlu0 %1938
    %v1940 = vsel %vm133, %v1931, 0
    %v1942 = vsel %vm133, %v1939, 0
    %1944 = vmatprep.subr.mxu0 0.0
    %1945 = vmatpush1.xpose.msra.mxu0 %v1942
    %1946 = vmatprep.subr.mxu0 0.0
    %1947 = vmatpush1.xpose.msra.mxu0 0.0
    %1948 = vmatprep.subr.mxu0 0.0
    %1949 = vmatpush1.xpose.msra.mxu0 0.0
    %1950 = vmatprep.subr.mxu0 0.0
    %1951 = vmatpush1.xpose.msra.mxu0 0.0
    %1952 = vmatprep.subr.mxu0 0.0
    %1953 = vmatpush1.xpose.msra.mxu0 0.0
    %1954 = vmatprep.subr.mxu0 0.0
    %1955 = vmatpush1.xpose.msra.mxu0 0.0
    %1956 = vmatprep.subr.mxu0 0.0
    %1957 = vmatpush1.xpose.msra.mxu0 0.0
    %1958 = vmatprep.subr.mxu0 0.0
    %1959 = vmatpush1.xpose.msra.mxu0 0.0
    %1960 = vmatprep.subr.mxu0 0.0
    %1961 = vmatpush1.xpose.msra.mxu0 0.0
    %1962 = vmatprep.subr.mxu0 0.0
    %1963 = vmatpush1.xpose.msra.mxu0 0.0
    %1964 = vmatprep.subr.mxu0 0.0
    %1965 = vmatpush1.xpose.msra.mxu0 0.0
    %1966 = vmatprep.subr.mxu0 0.0
    %1967 = vmatpush1.xpose.msra.mxu0 0.0
    %1968 = vmatprep.subr.mxu0 0.0
    %1969 = vmatpush1.xpose.msra.mxu0 0.0
    %1970 = vmatprep.subr.mxu0 0.0
    %1971 = vmatpush1.xpose.msra.mxu0 0.0
    %1972 = vmatprep.subr.mxu0 0.0
    %1973 = vmatpush1.xpose.msra.mxu0 0.0
    %1974 = vmatprep.subr.mxu0 0.0
    %1975 = vmatpush1.xpose.msra.mxu0 0.0
    %1976 = vmatprep.subr.mxu0 0.0
    %1977 = vmatpush1.xpose.msra.mxu0 0.0
    %1978 = vmatprep.subr.mxu0 0.0
    %1979 = vmatpush1.xpose.msra.mxu0 0.0
    %1980 = vmatprep.subr.mxu0 0.0
    %1981 = vmatpush1.xpose.msra.mxu0 0.0
    %1982 = vmatprep.subr.mxu0 0.0
    %1983 = vmatpush1.xpose.msra.mxu0 0.0
    %1984 = vmatprep.subr.mxu0 0.0
    %1985 = vmatpush1.xpose.msra.mxu0 0.0
    %1986 = vmatprep.subr.mxu0 0.0
    %1987 = vmatpush1.xpose.msra.mxu0 0.0
    %1988 = vmatprep.subr.mxu0 0.0
    %1989 = vmatpush1.xpose.msra.mxu0 0.0
    %1990 = vmatprep.subr.mxu0 0.0
    %1991 = vmatpush1.xpose.msra.mxu0 0.0
    %1992 = vmatprep.subr.mxu0 0.0
    %1993 = vmatpush1.xpose.msra.mxu0 0.0
    %1994 = vmatprep.subr.mxu0 0.0
    %1995 = vmatpush1.xpose.msra.mxu0 0.0
    %1996 = vmatprep.subr.mxu0 0.0
    %1997 = vmatpush1.xpose.msra.mxu0 0.0
    %1998 = vmatprep.subr.mxu0 0.0
    %1999 = vmatpush1.xpose.msra.mxu0 0.0
    %2000 = vmatprep.subr.mxu0 0.0
    %2001 = vmatpush1.xpose.msra.mxu0 0.0
    %2002 = vmatprep.subr.mxu0 0.0
    %2003 = vmatpush1.xpose.msra.mxu0 0.0
    %2004 = vmatprep.subr.mxu0 0.0
    %2005 = vmatpush1.xpose.msra.mxu0 0.0
    %2006 = vmatprep.subr.mxu0 0.0
    %2007 = vmatpush1.xpose.msra.mxu0 0.0
    %2008 = vmatprep.mubr.f32.mxu0 0.0
    %2009 = vmatmul.mubr.f32.gmra.mrb[0].mxu0 %v1940
    %v2010 = vpop.f32.mrb[0].mxu0
    %v2011 = vadd.f32 0.0, %v2010
    %v2012 = vpop.f32.mrb[0].mxu0
    %2013 = vdwg.mxu0
    %2015 = vrot.lane.b32.xlu0 %v1934, 96
    %v2016 = vpop.permute.xlu0 %2015
    %v2017 = vsel %vm133, %v1934, 0
    %v2019 = vsel %vm133, %v2016, 0
    %2021 = vmatprep.subr.mxu0 0.0
    %2022 = vmatpush1.xpose.msra.mxu0 %v2019
    %2023 = vmatprep.subr.mxu0 0.0
    %2024 = vmatpush1.xpose.msra.mxu0 0.0
    %2025 = vmatprep.subr.mxu0 0.0
    %2026 = vmatpush1.xpose.msra.mxu0 0.0
    %2027 = vmatprep.subr.mxu0 0.0
    %2028 = vmatpush1.xpose.msra.mxu0 0.0
    %2029 = vmatprep.subr.mxu0 0.0
    %2030 = vmatpush1.xpose.msra.mxu0 0.0
    %2031 = vmatprep.subr.mxu0 0.0
    %2032 = vmatpush1.xpose.msra.mxu0 0.0
    %2033 = vmatprep.subr.mxu0 0.0
    %2034 = vmatpush1.xpose.msra.mxu0 0.0
    %2035 = vmatprep.subr.mxu0 0.0
    %2036 = vmatpush1.xpose.msra.mxu0 0.0
    %2037 = vmatprep.subr.mxu0 0.0
    %2038 = vmatpush1.xpose.msra.mxu0 0.0
    %2039 = vmatprep.subr.mxu0 0.0
    %2040 = vmatpush1.xpose.msra.mxu0 0.0
    %2041 = vmatprep.subr.mxu0 0.0
    %2042 = vmatpush1.xpose.msra.mxu0 0.0
    %2043 = vmatprep.subr.mxu0 0.0
    %2044 = vmatpush1.xpose.msra.mxu0 0.0
    %2045 = vmatprep.subr.mxu0 0.0
    %2046 = vmatpush1.xpose.msra.mxu0 0.0
    %2047 = vmatprep.subr.mxu0 0.0
    %2048 = vmatpush1.xpose.msra.mxu0 0.0
    %2049 = vmatprep.subr.mxu0 0.0
    %2050 = vmatpush1.xpose.msra.mxu0 0.0
    %2051 = vmatprep.subr.mxu0 0.0
    %2052 = vmatpush1.xpose.msra.mxu0 0.0
    %2053 = vmatprep.subr.mxu0 0.0
    %2054 = vmatpush1.xpose.msra.mxu0 0.0
    %2055 = vmatprep.subr.mxu0 0.0
    %2056 = vmatpush1.xpose.msra.mxu0 0.0
    %2057 = vmatprep.subr.mxu0 0.0
    %2058 = vmatpush1.xpose.msra.mxu0 0.0
    %2059 = vmatprep.subr.mxu0 0.0
    %2060 = vmatpush1.xpose.msra.mxu0 0.0
    %2061 = vmatprep.subr.mxu0 0.0
    %2062 = vmatpush1.xpose.msra.mxu0 0.0
    %2063 = vmatprep.subr.mxu0 0.0
    %2064 = vmatpush1.xpose.msra.mxu0 0.0
    %2065 = vmatprep.subr.mxu0 0.0
    %2066 = vmatpush1.xpose.msra.mxu0 0.0
    %2067 = vmatprep.subr.mxu0 0.0
    %2068 = vmatpush1.xpose.msra.mxu0 0.0
    %2069 = vmatprep.subr.mxu0 0.0
    %2070 = vmatpush1.xpose.msra.mxu0 0.0
    %2071 = vmatprep.subr.mxu0 0.0
    %2072 = vmatpush1.xpose.msra.mxu0 0.0
    %2073 = vmatprep.subr.mxu0 0.0
    %2074 = vmatpush1.xpose.msra.mxu0 0.0
    %2075 = vmatprep.subr.mxu0 0.0
    %2076 = vmatpush1.xpose.msra.mxu0 0.0
    %2077 = vmatprep.subr.mxu0 0.0
    %2078 = vmatpush1.xpose.msra.mxu0 0.0
    %2079 = vmatprep.subr.mxu0 0.0
    %2080 = vmatpush1.xpose.msra.mxu0 0.0
    %2081 = vmatprep.subr.mxu0 0.0
    %2082 = vmatpush1.xpose.msra.mxu0 0.0
    %2083 = vmatprep.subr.mxu0 0.0
    %2084 = vmatpush1.xpose.msra.mxu0 0.0
    %2085 = vmatprep.mubr.f32.mxu0 0.0
    %2086 = vmatmul.mubr.f32.gmra.mrb[0].mxu0 %v2017
    %v2087 = vpop.f32.mrb[0].mxu0
    %v2088 = vadd.f32 0.0, %v2087
    %v2089 = vpop.f32.mrb[0].mxu0
    %2090 = vdwg.mxu0
    %v2091 = vmul.f32 %v2011, 0.35355338
    %v2092 = vmul.f32 %v2088, 0.35355338
    %v2093 = vadd.f32 %v2091, %v59
    %v2094 = vadd.f32 %v2092, %v60
    %v2095 = vsel %vm133, %v2093, -inf
    %2096 = vmax.xlane.f32.xlu0 %v2095
    %v2097 = vpop.xlane.xlu0 %2096
    %v2098 = vsel %vm133, %v2094, -inf
    %2099 = vmax.xlane.f32.xlu0 %v2098
    %v2100 = vpop.xlane.xlu0 %2099
    %v2101 = vsub.f32 %v2093, %v2097
    %v2102 = vsub.f32 %v2094, %v2100
    %v2103 = vmul.f32 %v2101, 1.442695
    %v2104 = vpow.pop %v2103
    %v2105 = vmul.f32 %v2102, 1.442695
    %v2106 = vpow.pop %v2105
    %v2107 = vsel %vm133, %v2104, 0.0
    %2108 = vadd.xlane.f32.xlu0 %v2107
    %v2109 = vpop.xlane.xlu0 %2108
    %v2110 = vsel %vm133, %v2106, 0.0
    %2111 = vadd.xlane.f32.xlu0 %v2110
    %v2112 = vpop.xlane.xlu0 %2111
    %v2113 = vrcp.pop %v2109
    %v2114 = vmul.f32 %v2104, %v2113
    %v2115 = vrcp.pop %v2112
    %v2116 = vmul.f32 %v2106, %v2115
    %2117 = vrot.lane.b32.xlu0 %v1931, 64
    %v2118 = vpop.permute.xlu0 %2117
    %v2121 = vsel %vm133, %v2114, 0
    %2123 = vmatprep.subr.mxu0 0.0
    %2124 = vmatpush1.msra.mxu0 %v2118
    %2125 = vmatprep.subr.mxu0 0.0
    %2126 = vmatpush1.msra.mxu0 0.0
    %2127 = vmatprep.subr.mxu0 0.0
    %2128 = vmatpush1.msra.mxu0 0.0
    %2129 = vmatprep.subr.mxu0 0.0
    %2130 = vmatpush1.msra.mxu0 0.0
    %2131 = vmatprep.subr.mxu0 0.0
    %2132 = vmatpush1.msra.mxu0 0.0
    %2133 = vmatprep.subr.mxu0 0.0
    %2134 = vmatpush1.msra.mxu0 0.0
    %2135 = vmatprep.subr.mxu0 0.0
    %2136 = vmatpush1.msra.mxu0 0.0
    %2137 = vmatprep.subr.mxu0 0.0
    %2138 = vmatpush1.msra.mxu0 0.0
    %2139 = vmatprep.subr.mxu0 0.0
    %2140 = vmatpush1.msra.mxu0 0.0
    %2141 = vmatprep.subr.mxu0 0.0
    %2142 = vmatpush1.msra.mxu0 0.0
    %2143 = vmatprep.subr.mxu0 0.0
    %2144 = vmatpush1.msra.mxu0 0.0
    %2145 = vmatprep.subr.mxu0 0.0
    %2146 = vmatpush1.msra.mxu0 0.0
    %2147 = vmatprep.subr.mxu0 0.0
    %2148 = vmatpush1.msra.mxu0 0.0
    %2149 = vmatprep.subr.mxu0 0.0
    %2150 = vmatpush1.msra.mxu0 0.0
    %2151 = vmatprep.subr.mxu0 0.0
    %2152 = vmatpush1.msra.mxu0 0.0
    %2153 = vmatprep.subr.mxu0 0.0
    %2154 = vmatpush1.msra.mxu0 0.0
    %2155 = vmatprep.subr.mxu0 0.0
    %2156 = vmatpush1.msra.mxu0 0.0
    %2157 = vmatprep.subr.mxu0 0.0
    %2158 = vmatpush1.msra.mxu0 0.0
    %2159 = vmatprep.subr.mxu0 0.0
    %2160 = vmatpush1.msra.mxu0 0.0
    %2161 = vmatprep.subr.mxu0 0.0
    %2162 = vmatpush1.msra.mxu0 0.0
    %2163 = vmatprep.subr.mxu0 0.0
    %2164 = vmatpush1.msra.mxu0 0.0
    %2165 = vmatprep.subr.mxu0 0.0
    %2166 = vmatpush1.msra.mxu0 0.0
    %2167 = vmatprep.subr.mxu0 0.0
    %2168 = vmatpush1.msra.mxu0 0.0
    %2169 = vmatprep.subr.mxu0 0.0
    %2170 = vmatpush1.msra.mxu0 0.0
    %2171 = vmatprep.subr.mxu0 0.0
    %2172 = vmatpush1.msra.mxu0 0.0
    %2173 = vmatprep.subr.mxu0 0.0
    %2174 = vmatpush1.msra.mxu0 0.0
    %2175 = vmatprep.subr.mxu0 0.0
    %2176 = vmatpush1.msra.mxu0 0.0
    %2177 = vmatprep.subr.mxu0 0.0
    %2178 = vmatpush1.msra.mxu0 0.0
    %2179 = vmatprep.subr.mxu0 0.0
    %2180 = vmatpush1.msra.mxu0 0.0
    %2181 = vmatprep.subr.mxu0 0.0
    %2182 = vmatpush1.msra.mxu0 0.0
    %2183 = vmatprep.subr.mxu0 0.0
    %2184 = vmatpush1.msra.mxu0 0.0
    %2185 = vmatprep.subr.mxu0 0.0
    %2186 = vmatpush1.msra.mxu0 0.0
    %2187 = vmatprep.mubr.f32.mxu0 0.0
    %2188 = vmatmul.mubr.f32.gmra.mrb[0].mxu0 %v2121
    %v2189 = vpop.f32.mrb[0].mxu0
    %v2190 = vadd.f32 0.0, %v2189
    %v2191 = vpop.f32.mrb[0].mxu0
    %2192 = vdwg.mxu0
    %2193 = vrot.lane.b32.xlu0 %v1934, 64
    %v2194 = vpop.permute.xlu0 %2193
    %v2197 = vsel %vm133, %v2116, 0
    %2199 = vmatprep.subr.mxu0 0.0
    %2200 = vmatpush1.msra.mxu0 %v2194
    %2201 = vmatprep.subr.mxu0 0.0
    %2202 = vmatpush1.msra.mxu0 0.0
    %2203 = vmatprep.subr.mxu0 0.0
    %2204 = vmatpush1.msra.mxu0 0.0
    %2205 = vmatprep.subr.mxu0 0.0
    %2206 = vmatpush1.msra.mxu0 0.0
    %2207 = vmatprep.subr.mxu0 0.0
    %2208 = vmatpush1.msra.mxu0 0.0
    %2209 = vmatprep.subr.mxu0 0.0
    %2210 = vmatpush1.msra.mxu0 0.0
    %2211 = vmatprep.subr.mxu0 0.0
    %2212 = vmatpush1.msra.mxu0 0.0
    %2213 = vmatprep.subr.mxu0 0.0
    %2214 = vmatpush1.msra.mxu0 0.0
    %2215 = vmatprep.subr.mxu0 0.0
    %2216 = vmatpush1.msra.mxu0 0.0
    %2217 = vmatprep.subr.mxu0 0.0
    %2218 = vmatpush1.msra.mxu0 0.0
    %2219 = vmatprep.subr.mxu0 0.0
    %2220 = vmatpush1.msra.mxu0 0.0
    %2221 = vmatprep.subr.mxu0 0.0
    %2222 = vmatpush1.msra.mxu0 0.0
    %2223 = vmatprep.subr.mxu0 0.0
    %2224 = vmatpush1.msra.mxu0 0.0
    %2225 = vmatprep.subr.mxu0 0.0
    %2226 = vmatpush1.msra.mxu0 0.0
    %2227 = vmatprep.subr.mxu0 0.0
    %2228 = vmatpush1.msra.mxu0 0.0
    %2229 = vmatprep.subr.mxu0 0.0
    %2230 = vmatpush1.msra.mxu0 0.0
    %2231 = vmatprep.subr.mxu0 0.0
    %2232 = vmatpush1.msra.mxu0 0.0
    %2233 = vmatprep.subr.mxu0 0.0
    %2234 = vmatpush1.msra.mxu0 0.0
    %2235 = vmatprep.subr.mxu0 0.0
    %2236 = vmatpush1.msra.mxu0 0.0
    %2237 = vmatprep.subr.mxu0 0.0
    %2238 = vmatpush1.msra.mxu0 0.0
    %2239 = vmatprep.subr.mxu0 0.0
    %2240 = vmatpush1.msra.mxu0 0.0
    %2241 = vmatprep.subr.mxu0 0.0
    %2242 = vmatpush1.msra.mxu0 0.0
    %2243 = vmatprep.subr.mxu0 0.0
    %2244 = vmatpush1.msra.mxu0 0.0
    %2245 = vmatprep.subr.mxu0 0.0
    %2246 = vmatpush1.msra.mxu0 0.0
    %2247 = vmatprep.subr.mxu0 0.0
    %2248 = vmatpush1.msra.mxu0 0.0
    %2249 = vmatprep.subr.mxu0 0.0
    %2250 = vmatpush1.msra.mxu0 0.0
    %2251 = vmatprep.subr.mxu0 0.0
    %2252 = vmatpush1.msra.mxu0 0.0
    %2253 = vmatprep.subr.mxu0 0.0
    %2254 = vmatpush1.msra.mxu0 0.0
    %2255 = vmatprep.subr.mxu0 0.0
    %2256 = vmatpush1.msra.mxu0 0.0
    %2257 = vmatprep.subr.mxu0 0.0
    %2258 = vmatpush1.msra.mxu0 0.0
    %2259 = vmatprep.subr.mxu0 0.0
    %2260 = vmatpush1.msra.mxu0 0.0
    %2261 = vmatprep.subr.mxu0 0.0
    %2262 = vmatpush1.msra.mxu0 0.0
    %2263 = vmatprep.mubr.f32.mxu0 0.0
    %2264 = vmatmul.mubr.f32.gmra.mrb[0].mxu0 %v2197
    %v2265 = vpop.f32.mrb[0].mxu0
    %v2266 = vadd.f32 0.0, %v2265
    %v2267 = vpop.f32.mrb[0].mxu0
    %2268 = vdwg.mxu0
    %2269 = vrot.lane.b32.xlu0 %v1931, 120
    %v2270 = vpop.permute.xlu0 %2269
    %2271 = vrot.lane.b32.xlu0 %v1931, 88
    %v2272 = vpop.permute.xlu0 %2271
    %v2273 = vsel %vm133, %v2270, 0
    %v2275 = vsel %vm133, %v2272, 0
    %2277 = vmatprep.subr.mxu0 0.0
    %2278 = vmatpush1.xpose.msra.mxu0 %v2275
    %2279 = vmatprep.subr.mxu0 0.0
    %2280 = vmatpush1.xpose.msra.mxu0 0.0
    %2281 = vmatprep.subr.mxu0 0.0
    %2282 = vmatpush1.xpose.msra.mxu0 0.0
    %2283 = vmatprep.subr.mxu0 0.0
    %2284 = vmatpush1.xpose.msra.mxu0 0.0
    %2285 = vmatprep.subr.mxu0 0.0
    %2286 = vmatpush1.xpose.msra.mxu0 0.0
    %2287 = vmatprep.subr.mxu0 0.0
    %2288 = vmatpush1.xpose.msra.mxu0 0.0
    %2289 = vmatprep.subr.mxu0 0.0
    %2290 = vmatpush1.xpose.msra.mxu0 0.0
    %2291 = vmatprep.subr.mxu0 0.0
    %2292 = vmatpush1.xpose.msra.mxu0 0.0
    %2293 = vmatprep.subr.mxu0 0.0
    %2294 = vmatpush1.xpose.msra.mxu0 0.0
    %2295 = vmatprep.subr.mxu0 0.0
    %2296 = vmatpush1.xpose.msra.mxu0 0.0
    %2297 = vmatprep.subr.mxu0 0.0
    %2298 = vmatpush1.xpose.msra.mxu0 0.0
    %2299 = vmatprep.subr.mxu0 0.0
    %2300 = vmatpush1.xpose.msra.mxu0 0.0
    %2301 = vmatprep.subr.mxu0 0.0
    %2302 = vmatpush1.xpose.msra.mxu0 0.0
    %2303 = vmatprep.subr.mxu0 0.0
    %2304 = vmatpush1.xpose.msra.mxu0 0.0
    %2305 = vmatprep.subr.mxu0 0.0
    %2306 = vmatpush1.xpose.msra.mxu0 0.0
    %2307 = vmatprep.subr.mxu0 0.0
    %2308 = vmatpush1.xpose.msra.mxu0 0.0
    %2309 = vmatprep.subr.mxu0 0.0
    %2310 = vmatpush1.xpose.msra.mxu0 0.0
    %2311 = vmatprep.subr.mxu0 0.0
    %2312 = vmatpush1.xpose.msra.mxu0 0.0
    %2313 = vmatprep.subr.mxu0 0.0
    %2314 = vmatpush1.xpose.msra.mxu0 0.0
    %2315 = vmatprep.subr.mxu0 0.0
    %2316 = vmatpush1.xpose.msra.mxu0 0.0
    %2317 = vmatprep.subr.mxu0 0.0
    %2318 = vmatpush1.xpose.msra.mxu0 0.0
    %2319 = vmatprep.subr.mxu0 0.0
    %2320 = vmatpush1.xpose.msra.mxu0 0.0
    %2321 = vmatprep.subr.mxu0 0.0
    %2322 = vmatpush1.xpose.msra.mxu0 0.0
    %2323 = vmatprep.subr.mxu0 0.0
    %2324 = vmatpush1.xpose.msra.mxu0 0.0
    %2325 = vmatprep.subr.mxu0 0.0
    %2326 = vmatpush1.xpose.msra.mxu0 0.0
    %2327 = vmatprep.subr.mxu0 0.0
    %2328 = vmatpush1.xpose.msra.mxu0 0.0
    %2329 = vmatprep.subr.mxu0 0.0
    %2330 = vmatpush1.xpose.msra.mxu0 0.0
    %2331 = vmatprep.subr.mxu0 0.0
    %2332 = vmatpush1.xpose.msra.mxu0 0.0
    %2333 = vmatprep.subr.mxu0 0.0
    %2334 = vmatpush1.xpose.msra.mxu0 0.0
    %2335 = vmatprep.subr.mxu0 0.0
    %2336 = vmatpush1.xpose.msra.mxu0 0.0
    %2337 = vmatprep.subr.mxu0 0.0
    %2338 = vmatpush1.xpose.msra.mxu0 0.0
    %2339 = vmatprep.subr.mxu0 0.0
    %2340 = vmatpush1.xpose.msra.mxu0 0.0
    %2341 = vmatprep.mubr.f32.mxu0 0.0
    %2342 = vmatmul.mubr.f32.gmra.mrb[0].mxu0 %v2273
    %v2343 = vpop.f32.mrb[0].mxu0
    %v2344 = vadd.f32 0.0, %v2343
    %v2345 = vpop.f32.mrb[0].mxu0
    %2346 = vdwg.mxu0
    %2347 = vrot.lane.b32.xlu0 %v1934, 120
    %v2348 = vpop.permute.xlu0 %2347
    %2349 = vrot.lane.b32.xlu0 %v1934, 88
    %v2350 = vpop.permute.xlu0 %2349
    %v2351 = vsel %vm133, %v2348, 0
    %v2353 = vsel %vm133, %v2350, 0
    %2355 = vmatprep.subr.mxu0 0.0
    %2356 = vmatpush1.xpose.msra.mxu0 %v2353
    %2357 = vmatprep.subr.mxu0 0.0
    %2358 = vmatpush1.xpose.msra.mxu0 0.0
    %2359 = vmatprep.subr.mxu0 0.0
    %2360 = vmatpush1.xpose.msra.mxu0 0.0
    %2361 = vmatprep.subr.mxu0 0.0
    %2362 = vmatpush1.xpose.msra.mxu0 0.0
    %2363 = vmatprep.subr.mxu0 0.0
    %2364 = vmatpush1.xpose.msra.mxu0 0.0
    %2365 = vmatprep.subr.mxu0 0.0
    %2366 = vmatpush1.xpose.msra.mxu0 0.0
    %2367 = vmatprep.subr.mxu0 0.0
    %2368 = vmatpush1.xpose.msra.mxu0 0.0
    %2369 = vmatprep.subr.mxu0 0.0
    %2370 = vmatpush1.xpose.msra.mxu0 0.0
    %2371 = vmatprep.subr.mxu0 0.0
    %2372 = vmatpush1.xpose.msra.mxu0 0.0
    %2373 = vmatprep.subr.mxu0 0.0
    %2374 = vmatpush1.xpose.msra.mxu0 0.0
    %2375 = vmatprep.subr.mxu0 0.0
    %2376 = vmatpush1.xpose.msra.mxu0 0.0
    %2377 = vmatprep.subr.mxu0 0.0
    %2378 = vmatpush1.xpose.msra.mxu0 0.0
    %2379 = vmatprep.subr.mxu0 0.0
    %2380 = vmatpush1.xpose.msra.mxu0 0.0
    %2381 = vmatprep.subr.mxu0 0.0
    %2382 = vmatpush1.xpose.msra.mxu0 0.0
    %2383 = vmatprep.subr.mxu0 0.0
    %2384 = vmatpush1.xpose.msra.mxu0 0.0
    %2385 = vmatprep.subr.mxu0 0.0
    %2386 = vmatpush1.xpose.msra.mxu0 0.0
    %2387 = vmatprep.subr.mxu0 0.0
    %2388 = vmatpush1.xpose.msra.mxu0 0.0
    %2389 = vmatprep.subr.mxu0 0.0
    %2390 = vmatpush1.xpose.msra.mxu0 0.0
    %2391 = vmatprep.subr.mxu0 0.0
    %2392 = vmatpush1.xpose.msra.mxu0 0.0
    %2393 = vmatprep.subr.mxu0 0.0
    %2394 = vmatpush1.xpose.msra.mxu0 0.0
    %2395 = vmatprep.subr.mxu0 0.0
    %2396 = vmatpush1.xpose.msra.mxu0 0.0
    %2397 = vmatprep.subr.mxu0 0.0
    %2398 = vmatpush1.xpose.msra.mxu0 0.0
    %2399 = vmatprep.subr.mxu0 0.0
    %2400 = vmatpush1.xpose.msra.mxu0 0.0
    %2401 = vmatprep.subr.mxu0 0.0
    %2402 = vmatpush1.xpose.msra.mxu0 0.0
    %2403 = vmatprep.subr.mxu0 0.0
    %2404 = vmatpush1.xpose.msra.mxu0 0.0
    %2405 = vmatprep.subr.mxu0 0.0
    %2406 = vmatpush1.xpose.msra.mxu0 0.0
    %2407 = vmatprep.subr.mxu0 0.0
    %2408 = vmatpush1.xpose.msra.mxu0 0.0
    %2409 = vmatprep.subr.mxu0 0.0
    %2410 = vmatpush1.xpose.msra.mxu0 0.0
    %2411 = vmatprep.subr.mxu0 0.0
    %2412 = vmatpush1.xpose.msra.mxu0 0.0
    %2413 = vmatprep.subr.mxu0 0.0
    %2414 = vmatpush1.xpose.msra.mxu0 0.0
    %2415 = vmatprep.subr.mxu0 0.0
    %2416 = vmatpush1.xpose.msra.mxu0 0.0
    %2417 = vmatprep.subr.mxu0 0.0
    %2418 = vmatpush1.xpose.msra.mxu0 0.0
    %2419 = vmatprep.mubr.f32.mxu0 0.0
    %2420 = vmatmul.mubr.f32.gmra.mrb[0].mxu0 %v2351
    %v2421 = vpop.f32.mrb[0].mxu0
    %v2422 = vadd.f32 0.0, %v2421
    %v2423 = vpop.f32.mrb[0].mxu0
    %2424 = vdwg.mxu0
    %v2425 = vmul.f32 %v2344, 0.35355338
    %v2426 = vmul.f32 %v2422, 0.35355338
    %v2427 = vadd.f32 %v2425, %v59
    %v2428 = vadd.f32 %v2426, %v60
    %v2429 = vsel %vm133, %v2427, -inf
    %2430 = vmax.xlane.f32.xlu0 %v2429
    %v2431 = vpop.xlane.xlu0 %2430
    %v2432 = vsel %vm133, %v2428, -inf
    %2433 = vmax.xlane.f32.xlu0 %v2432
    %v2434 = vpop.xlane.xlu0 %2433
    %v2435 = vsub.f32 %v2427, %v2431
    %v2436 = vsub.f32 %v2428, %v2434
    %v2437 = vmul.f32 %v2435, 1.442695
    %v2438 = vpow.pop %v2437
    %v2439 = vmul.f32 %v2436, 1.442695
    %v2440 = vpow.pop %v2439
    %v2441 = vsel %vm133, %v2438, 0.0
    %2442 = vadd.xlane.f32.xlu0 %v2441
    %v2443 = vpop.xlane.xlu0 %2442
    %v2444 = vsel %vm133, %v2440, 0.0
    %2445 = vadd.xlane.f32.xlu0 %v2444
    %v2446 = vpop.xlane.xlu0 %2445
    %v2447 = vrcp.pop %v2443
    %v2448 = vmul.f32 %v2438, %v2447
    %v2449 = vrcp.pop %v2446
    %v2450 = vmul.f32 %v2440, %v2449
    %2451 = vrot.lane.b32.xlu0 %v1931, 56
    %v2452 = vpop.permute.xlu0 %2451
    %v2455 = vsel %vm133, %v2448, 0
    %2457 = vmatprep.subr.mxu0 0.0
    %2458 = vmatpush1.msra.mxu0 %v2452
    %2459 = vmatprep.subr.mxu0 0.0
    %2460 = vmatpush1.msra.mxu0 0.0
    %2461 = vmatprep.subr.mxu0 0.0
    %2462 = vmatpush1.msra.mxu0 0.0
    %2463 = vmatprep.subr.mxu0 0.0
    %2464 = vmatpush1.msra.mxu0 0.0
    %2465 = vmatprep.subr.mxu0 0.0
    %2466 = vmatpush1.msra.mxu0 0.0
    %2467 = vmatprep.subr.mxu0 0.0
    %2468 = vmatpush1.msra.mxu0 0.0
    %2469 = vmatprep.subr.mxu0 0.0
    %2470 = vmatpush1.msra.mxu0 0.0
    %2471 = vmatprep.subr.mxu0 0.0
    %2472 = vmatpush1.msra.mxu0 0.0
    %2473 = vmatprep.subr.mxu0 0.0
    %2474 = vmatpush1.msra.mxu0 0.0
    %2475 = vmatprep.subr.mxu0 0.0
    %2476 = vmatpush1.msra.mxu0 0.0
    %2477 = vmatprep.subr.mxu0 0.0
    %2478 = vmatpush1.msra.mxu0 0.0
    %2479 = vmatprep.subr.mxu0 0.0
    %2480 = vmatpush1.msra.mxu0 0.0
    %2481 = vmatprep.subr.mxu0 0.0
    %2482 = vmatpush1.msra.mxu0 0.0
    %2483 = vmatprep.subr.mxu0 0.0
    %2484 = vmatpush1.msra.mxu0 0.0
    %2485 = vmatprep.subr.mxu0 0.0
    %2486 = vmatpush1.msra.mxu0 0.0
    %2487 = vmatprep.subr.mxu0 0.0
    %2488 = vmatpush1.msra.mxu0 0.0
    %2489 = vmatprep.subr.mxu0 0.0
    %2490 = vmatpush1.msra.mxu0 0.0
    %2491 = vmatprep.subr.mxu0 0.0
    %2492 = vmatpush1.msra.mxu0 0.0
    %2493 = vmatprep.subr.mxu0 0.0
    %2494 = vmatpush1.msra.mxu0 0.0
    %2495 = vmatprep.subr.mxu0 0.0
    %2496 = vmatpush1.msra.mxu0 0.0
    %2497 = vmatprep.subr.mxu0 0.0
    %2498 = vmatpush1.msra.mxu0 0.0
    %2499 = vmatprep.subr.mxu0 0.0
    %2500 = vmatpush1.msra.mxu0 0.0
    %2501 = vmatprep.subr.mxu0 0.0
    %2502 = vmatpush1.msra.mxu0 0.0
    %2503 = vmatprep.subr.mxu0 0.0
    %2504 = vmatpush1.msra.mxu0 0.0
    %2505 = vmatprep.subr.mxu0 0.0
    %2506 = vmatpush1.msra.mxu0 0.0
    %2507 = vmatprep.subr.mxu0 0.0
    %2508 = vmatpush1.msra.mxu0 0.0
    %2509 = vmatprep.subr.mxu0 0.0
    %2510 = vmatpush1.msra.mxu0 0.0
    %2511 = vmatprep.subr.mxu0 0.0
    %2512 = vmatpush1.msra.mxu0 0.0
    %2513 = vmatprep.subr.mxu0 0.0
    %2514 = vmatpush1.msra.mxu0 0.0
    %2515 = vmatprep.subr.mxu0 0.0
    %2516 = vmatpush1.msra.mxu0 0.0
    %2517 = vmatprep.subr.mxu0 0.0
    %2518 = vmatpush1.msra.mxu0 0.0
    %2519 = vmatprep.subr.mxu0 0.0
    %2520 = vmatpush1.msra.mxu0 0.0
    %2521 = vmatprep.mubr.f32.mxu0 0.0
    %2522 = vmatmul.mubr.f32.gmra.mrb[0].mxu0 %v2455
    %v2523 = vpop.f32.mrb[0].mxu0
    %v2524 = vadd.f32 0.0, %v2523
    %v2525 = vpop.f32.mrb[0].mxu0
    %2526 = vdwg.mxu0
    %2527 = vrot.lane.b32.xlu0 %v1934, 56
    %v2528 = vpop.permute.xlu0 %2527
    %v2531 = vsel %vm133, %v2450, 0
    %2533 = vmatprep.subr.mxu0 0.0
    %2534 = vmatpush1.msra.mxu0 %v2528
    %2535 = vmatprep.subr.mxu0 0.0
    %2536 = vmatpush1.msra.mxu0 0.0
    %2537 = vmatprep.subr.mxu0 0.0
    %2538 = vmatpush1.msra.mxu0 0.0
    %2539 = vmatprep.subr.mxu0 0.0
    %2540 = vmatpush1.msra.mxu0 0.0
    %2541 = vmatprep.subr.mxu0 0.0
    %2542 = vmatpush1.msra.mxu0 0.0
    %2543 = vmatprep.subr.mxu0 0.0
    %2544 = vmatpush1.msra.mxu0 0.0
    %2545 = vmatprep.subr.mxu0 0.0
    %2546 = vmatpush1.msra.mxu0 0.0
    %2547 = vmatprep.subr.mxu0 0.0
    %2548 = vmatpush1.msra.mxu0 0.0
    %2549 = vmatprep.subr.mxu0 0.0
    %2550 = vmatpush1.msra.mxu0 0.0
    %2551 = vmatprep.subr.mxu0 0.0
    %2552 = vmatpush1.msra.mxu0 0.0
    %2553 = vmatprep.subr.mxu0 0.0
    %2554 = vmatpush1.msra.mxu0 0.0
    %2555 = vmatprep.subr.mxu0 0.0
    %2556 = vmatpush1.msra.mxu0 0.0
    %2557 = vmatprep.subr.mxu0 0.0
    %2558 = vmatpush1.msra.mxu0 0.0
    %2559 = vmatprep.subr.mxu0 0.0
    %2560 = vmatpush1.msra.mxu0 0.0
    %2561 = vmatprep.subr.mxu0 0.0
    %2562 = vmatpush1.msra.mxu0 0.0
    %2563 = vmatprep.subr.mxu0 0.0
    %2564 = vmatpush1.msra.mxu0 0.0
    %2565 = vmatprep.subr.mxu0 0.0
    %2566 = vmatpush1.msra.mxu0 0.0
    %2567 = vmatprep.subr.mxu0 0.0
    %2568 = vmatpush1.msra.mxu0 0.0
    %2569 = vmatprep.subr.mxu0 0.0
    %2570 = vmatpush1.msra.mxu0 0.0
    %2571 = vmatprep.subr.mxu0 0.0
    %2572 = vmatpush1.msra.mxu0 0.0
    %2573 = vmatprep.subr.mxu0 0.0
    %2574 = vmatpush1.msra.mxu0 0.0
    %2575 = vmatprep.subr.mxu0 0.0
    %2576 = vmatpush1.msra.mxu0 0.0
    %2577 = vmatprep.subr.mxu0 0.0
    %2578 = vmatpush1.msra.mxu0 0.0
    %2579 = vmatprep.subr.mxu0 0.0
    %2580 = vmatpush1.msra.mxu0 0.0
    %2581 = vmatprep.subr.mxu0 0.0
    %2582 = vmatpush1.msra.mxu0 0.0
    %2583 = vmatprep.subr.mxu0 0.0
    %2584 = vmatpush1.msra.mxu0 0.0
    %2585 = vmatprep.subr.mxu0 0.0
    %2586 = vmatpush1.msra.mxu0 0.0
    %2587 = vmatprep.subr.mxu0 0.0
    %2588 = vmatpush1.msra.mxu0 0.0
    %2589 = vmatprep.subr.mxu0 0.0
    %2590 = vmatpush1.msra.mxu0 0.0
    %2591 = vmatprep.subr.mxu0 0.0
    %2592 = vmatpush1.msra.mxu0 0.0
    %2593 = vmatprep.subr.mxu0 0.0
    %2594 = vmatpush1.msra.mxu0 0.0
    %2595 = vmatprep.subr.mxu0 0.0
    %2596 = vmatpush1.msra.mxu0 0.0
    %2597 = vmatprep.mubr.f32.mxu0 0.0
    %2598 = vmatmul.mubr.f32.gmra.mrb[0].mxu0 %v2531
    %v2599 = vpop.f32.mrb[0].mxu0
    %v2600 = vadd.f32 0.0, %v2599
    %v2601 = vpop.f32.mrb[0].mxu0
    %2602 = vdwg.mxu0
    %2603 = vrot.lane.b32.xlu0 %v1931, 112
    %v2604 = vpop.permute.xlu0 %2603
    %2605 = vrot.lane.b32.xlu0 %v1931, 80
    %v2606 = vpop.permute.xlu0 %2605
    %v2607 = vsel %vm133, %v2604, 0
    %v2609 = vsel %vm133, %v2606, 0
    %2611 = vmatprep.subr.mxu0 0.0
    %2612 = vmatpush1.xpose.msra.mxu0 %v2609
    %2613 = vmatprep.subr.mxu0 0.0
    %2614 = vmatpush1.xpose.msra.mxu0 0.0
    %2615 = vmatprep.subr.mxu0 0.0
    %2616 = vmatpush1.xpose.msra.mxu0 0.0
    %2617 = vmatprep.subr.mxu0 0.0
    %2618 = vmatpush1.xpose.msra.mxu0 0.0
    %2619 = vmatprep.subr.mxu0 0.0
    %2620 = vmatpush1.xpose.msra.mxu0 0.0
    %2621 = vmatprep.subr.mxu0 0.0
    %2622 = vmatpush1.xpose.msra.mxu0 0.0
    %2623 = vmatprep.subr.mxu0 0.0
    %2624 = vmatpush1.xpose.msra.mxu0 0.0
    %2625 = vmatprep.subr.mxu0 0.0
    %2626 = vmatpush1.xpose.msra.mxu0 0.0
    %2627 = vmatprep.subr.mxu0 0.0
    %2628 = vmatpush1.xpose.msra.mxu0 0.0
    %2629 = vmatprep.subr.mxu0 0.0
    %2630 = vmatpush1.xpose.msra.mxu0 0.0
    %2631 = vmatprep.subr.mxu0 0.0
    %2632 = vmatpush1.xpose.msra.mxu0 0.0
    %2633 = vmatprep.subr.mxu0 0.0
    %2634 = vmatpush1.xpose.msra.mxu0 0.0
    %2635 = vmatprep.subr.mxu0 0.0
    %2636 = vmatpush1.xpose.msra.mxu0 0.0
    %2637 = vmatprep.subr.mxu0 0.0
    %2638 = vmatpush1.xpose.msra.mxu0 0.0
    %2639 = vmatprep.subr.mxu0 0.0
    %2640 = vmatpush1.xpose.msra.mxu0 0.0
    %2641 = vmatprep.subr.mxu0 0.0
    %2642 = vmatpush1.xpose.msra.mxu0 0.0
    %2643 = vmatprep.subr.mxu0 0.0
    %2644 = vmatpush1.xpose.msra.mxu0 0.0
    %2645 = vmatprep.subr.mxu0 0.0
    %2646 = vmatpush1.xpose.msra.mxu0 0.0
    %2647 = vmatprep.subr.mxu0 0.0
    %2648 = vmatpush1.xpose.msra.mxu0 0.0
    %2649 = vmatprep.subr.mxu0 0.0
    %2650 = vmatpush1.xpose.msra.mxu0 0.0
    %2651 = vmatprep.subr.mxu0 0.0
    %2652 = vmatpush1.xpose.msra.mxu0 0.0
    %2653 = vmatprep.subr.mxu0 0.0
    %2654 = vmatpush1.xpose.msra.mxu0 0.0
    %2655 = vmatprep.subr.mxu0 0.0
    %2656 = vmatpush1.xpose.msra.mxu0 0.0
    %2657 = vmatprep.subr.mxu0 0.0
    %2658 = vmatpush1.xpose.msra.mxu0 0.0
    %2659 = vmatprep.subr.mxu0 0.0
    %2660 = vmatpush1.xpose.msra.mxu0 0.0
    %2661 = vmatprep.subr.mxu0 0.0
    %2662 = vmatpush1.xpose.msra.mxu0 0.0
    %2663 = vmatprep.subr.mxu0 0.0
    %2664 = vmatpush1.xpose.msra.mxu0 0.0
    %2665 = vmatprep.subr.mxu0 0.0
    %2666 = vmatpush1.xpose.msra.mxu0 0.0
    %2667 = vmatprep.subr.mxu0 0.0
    %2668 = vmatpush1.xpose.msra.mxu0 0.0
    %2669 = vmatprep.subr.mxu0 0.0
    %2670 = vmatpush1.xpose.msra.mxu0 0.0
    %2671 = vmatprep.subr.mxu0 0.0
    %2672 = vmatpush1.xpose.msra.mxu0 0.0
    %2673 = vmatprep.subr.mxu0 0.0
    %2674 = vmatpush1.xpose.msra.mxu0 0.0
    %2675 = vmatprep.mubr.f32.mxu0 0.0
    %2676 = vmatmul.mubr.f32.gmra.mrb[0].mxu0 %v2607
    %v2677 = vpop.f32.mrb[0].mxu0
    %v2678 = vadd.f32 0.0, %v2677
    %v2679 = vpop.f32.mrb[0].mxu0
    %2680 = vdwg.mxu0
    %2681 = vrot.lane.b32.xlu0 %v1934, 112
    %v2682 = vpop.permute.xlu0 %2681
    %2683 = vrot.lane.b32.xlu0 %v1934, 80
    %v2684 = vpop.permute.xlu0 %2683
    %v2685 = vsel %vm133, %v2682, 0
    %v2687 = vsel %vm133, %v2684, 0
    %2689 = vmatprep.subr.mxu0 0.0
    %2690 = vmatpush1.xpose.msra.mxu0 %v2687
    %2691 = vmatprep.subr.mxu0 0.0
    %2692 = vmatpush1.xpose.msra.mxu0 0.0
    %2693 = vmatprep.subr.mxu0 0.0
    %2694 = vmatpush1.xpose.msra.mxu0 0.0
    %2695 = vmatprep.subr.mxu0 0.0
    %2696 = vmatpush1.xpose.msra.mxu0 0.0
    %2697 = vmatprep.subr.mxu0 0.0
    %2698 = vmatpush1.xpose.msra.mxu0 0.0
    %2699 = vmatprep.subr.mxu0 0.0
    %2700 = vmatpush1.xpose.msra.mxu0 0.0
    %2701 = vmatprep.subr.mxu0 0.0
    %2702 = vmatpush1.xpose.msra.mxu0 0.0
    %2703 = vmatprep.subr.mxu0 0.0
    %2704 = vmatpush1.xpose.msra.mxu0 0.0
    %2705 = vmatprep.subr.mxu0 0.0
    %2706 = vmatpush1.xpose.msra.mxu0 0.0
    %2707 = vmatprep.subr.mxu0 0.0
    %2708 = vmatpush1.xpose.msra.mxu0 0.0
    %2709 = vmatprep.subr.mxu0 0.0
    %2710 = vmatpush1.xpose.msra.mxu0 0.0
    %2711 = vmatprep.subr.mxu0 0.0
    %2712 = vmatpush1.xpose.msra.mxu0 0.0
    %2713 = vmatprep.subr.mxu0 0.0
    %2714 = vmatpush1.xpose.msra.mxu0 0.0
    %2715 = vmatprep.subr.mxu0 0.0
    %2716 = vmatpush1.xpose.msra.mxu0 0.0
    %2717 = vmatprep.subr.mxu0 0.0
    %2718 = vmatpush1.xpose.msra.mxu0 0.0
    %2719 = vmatprep.subr.mxu0 0.0
    %2720 = vmatpush1.xpose.msra.mxu0 0.0
    %2721 = vmatprep.subr.mxu0 0.0
    %2722 = vmatpush1.xpose.msra.mxu0 0.0
    %2723 = vmatprep.subr.mxu0 0.0
    %2724 = vmatpush1.xpose.msra.mxu0 0.0
    %2725 = vmatprep.subr.mxu0 0.0
    %2726 = vmatpush1.xpose.msra.mxu0 0.0
    %2727 = vmatprep.subr.mxu0 0.0
    %2728 = vmatpush1.xpose.msra.mxu0 0.0
    %2729 = vmatprep.subr.mxu0 0.0
    %2730 = vmatpush1.xpose.msra.mxu0 0.0
    %2731 = vmatprep.subr.mxu0 0.0
    %2732 = vmatpush1.xpose.msra.mxu0 0.0
    %2733 = vmatprep.subr.mxu0 0.0
    %2734 = vmatpush1.xpose.msra.mxu0 0.0
    %2735 = vmatprep.subr.mxu0 0.0
    %2736 = vmatpush1.xpose.msra.mxu0 0.0
    %2737 = vmatprep.subr.mxu0 0.0
    %2738 = vmatpush1.xpose.msra.mxu0 0.0
    %2739 = vmatprep.subr.mxu0 0.0
    %2740 = vmatpush1.xpose.msra.mxu0 0.0
    %2741 = vmatprep.subr.mxu0 0.0
    %2742 = vmatpush1.xpose.msra.mxu0 0.0
    %2743 = vmatprep.subr.mxu0 0.0
    %2744 = vmatpush1.xpose.msra.mxu0 0.0
    %2745 = vmatprep.subr.mxu0 0.0
    %2746 = vmatpush1.xpose.msra.mxu0 0.0
    %2747 = vmatprep.subr.mxu0 0.0
    %2748 = vmatpush1.xpose.msra.mxu0 0.0
    %2749 = vmatprep.subr.mxu0 0.0
    %2750 = vmatpush1.xpose.msra.mxu0 0.0
    %2751 = vmatprep.subr.mxu0 0.0
    %2752 = vmatpush1.xpose.msra.mxu0 0.0
    %2753 = vmatprep.mubr.f32.mxu0 0.0
    %2754 = vmatmul.mubr.f32.gmra.mrb[0].mxu0 %v2685
    %v2755 = vpop.f32.mrb[0].mxu0
    %v2756 = vadd.f32 0.0, %v2755
    %v2757 = vpop.f32.mrb[0].mxu0
    %2758 = vdwg.mxu0
    %v2759 = vmul.f32 %v2678, 0.35355338
    %v2760 = vmul.f32 %v2756, 0.35355338
    %v2761 = vadd.f32 %v2759, %v59
    %v2762 = vadd.f32 %v2760, %v60
    %v2763 = vsel %vm133, %v2761, -inf
    %2764 = vmax.xlane.f32.xlu0 %v2763
    %v2765 = vpop.xlane.xlu0 %2764
    %v2766 = vsel %vm133, %v2762, -inf
    %2767 = vmax.xlane.f32.xlu0 %v2766
    %v2768 = vpop.xlane.xlu0 %2767
    %v2769 = vsub.f32 %v2761, %v2765
    %v2770 = vsub.f32 %v2762, %v2768
    %v2771 = vmul.f32 %v2769, 1.442695
    %v2772 = vpow.pop %v2771
    %v2773 = vmul.f32 %v2770, 1.442695
    %v2774 = vpow.pop %v2773
    %v2775 = vsel %vm133, %v2772, 0.0
    %2776 = vadd.xlane.f32.xlu0 %v2775
    %v2777 = vpop.xlane.xlu0 %2776
    %v2778 = vsel %vm133, %v2774, 0.0
    %2779 = vadd.xlane.f32.xlu0 %v2778
    %v2780 = vpop.xlane.xlu0 %2779
    %v2781 = vrcp.pop %v2777
    %v2782 = vmul.f32 %v2772, %v2781
    %v2783 = vrcp.pop %v2780
    %v2784 = vmul.f32 %v2774, %v2783
    %2785 = vrot.lane.b32.xlu0 %v1931, 48
    %v2786 = vpop.permute.xlu0 %2785
    %v2789 = vsel %vm133, %v2782, 0
    %2791 = vmatprep.subr.mxu0 0.0
    %2792 = vmatpush1.msra.mxu0 %v2786
    %2793 = vmatprep.subr.mxu0 0.0
    %2794 = vmatpush1.msra.mxu0 0.0
    %2795 = vmatprep.subr.mxu0 0.0
    %2796 = vmatpush1.msra.mxu0 0.0
    %2797 = vmatprep.subr.mxu0 0.0
    %2798 = vmatpush1.msra.mxu0 0.0
    %2799 = vmatprep.subr.mxu0 0.0
    %2800 = vmatpush1.msra.mxu0 0.0
    %2801 = vmatprep.subr.mxu0 0.0
    %2802 = vmatpush1.msra.mxu0 0.0
    %2803 = vmatprep.subr.mxu0 0.0
    %2804 = vmatpush1.msra.mxu0 0.0
    %2805 = vmatprep.subr.mxu0 0.0
    %2806 = vmatpush1.msra.mxu0 0.0
    %2807 = vmatprep.subr.mxu0 0.0
    %2808 = vmatpush1.msra.mxu0 0.0
    %2809 = vmatprep.subr.mxu0 0.0
    %2810 = vmatpush1.msra.mxu0 0.0
    %2811 = vmatprep.subr.mxu0 0.0
    %2812 = vmatpush1.msra.mxu0 0.0
    %2813 = vmatprep.subr.mxu0 0.0
    %2814 = vmatpush1.msra.mxu0 0.0
    %2815 = vmatprep.subr.mxu0 0.0
    %2816 = vmatpush1.msra.mxu0 0.0
    %2817 = vmatprep.subr.mxu0 0.0
    %2818 = vmatpush1.msra.mxu0 0.0
    %2819 = vmatprep.subr.mxu0 0.0
    %2820 = vmatpush1.msra.mxu0 0.0
    %2821 = vmatprep.subr.mxu0 0.0
    %2822 = vmatpush1.msra.mxu0 0.0
    %2823 = vmatprep.subr.mxu0 0.0
    %2824 = vmatpush1.msra.mxu0 0.0
    %2825 = vmatprep.subr.mxu0 0.0
    %2826 = vmatpush1.msra.mxu0 0.0
    %2827 = vmatprep.subr.mxu0 0.0
    %2828 = vmatpush1.msra.mxu0 0.0
    %2829 = vmatprep.subr.mxu0 0.0
    %2830 = vmatpush1.msra.mxu0 0.0
    %2831 = vmatprep.subr.mxu0 0.0
    %2832 = vmatpush1.msra.mxu0 0.0
    %2833 = vmatprep.subr.mxu0 0.0
    %2834 = vmatpush1.msra.mxu0 0.0
    %2835 = vmatprep.subr.mxu0 0.0
    %2836 = vmatpush1.msra.mxu0 0.0
    %2837 = vmatprep.subr.mxu0 0.0
    %2838 = vmatpush1.msra.mxu0 0.0
    %2839 = vmatprep.subr.mxu0 0.0
    %2840 = vmatpush1.msra.mxu0 0.0
    %2841 = vmatprep.subr.mxu0 0.0
    %2842 = vmatpush1.msra.mxu0 0.0
    %2843 = vmatprep.subr.mxu0 0.0
    %2844 = vmatpush1.msra.mxu0 0.0
    %2845 = vmatprep.subr.mxu0 0.0
    %2846 = vmatpush1.msra.mxu0 0.0
    %2847 = vmatprep.subr.mxu0 0.0
    %2848 = vmatpush1.msra.mxu0 0.0
    %2849 = vmatprep.subr.mxu0 0.0
    %2850 = vmatpush1.msra.mxu0 0.0
    %2851 = vmatprep.subr.mxu0 0.0
    %2852 = vmatpush1.msra.mxu0 0.0
    %2853 = vmatprep.subr.mxu0 0.0
    %2854 = vmatpush1.msra.mxu0 0.0
    %2855 = vmatprep.mubr.f32.mxu0 0.0
    %2856 = vmatmul.mubr.f32.gmra.mrb[0].mxu0 %v2789
    %v2857 = vpop.f32.mrb[0].mxu0
    %v2858 = vadd.f32 0.0, %v2857
    %v2859 = vpop.f32.mrb[0].mxu0
    %2860 = vdwg.mxu0
    %2861 = vrot.lane.b32.xlu0 %v1934, 48
    %v2862 = vpop.permute.xlu0 %2861
    %v2865 = vsel %vm133, %v2784, 0
    %2867 = vmatprep.subr.mxu0 0.0
    %2868 = vmatpush1.msra.mxu0 %v2862
    %2869 = vmatprep.subr.mxu0 0.0
    %2870 = vmatpush1.msra.mxu0 0.0
    %2871 = vmatprep.subr.mxu0 0.0
    %2872 = vmatpush1.msra.mxu0 0.0
    %2873 = vmatprep.subr.mxu0 0.0
    %2874 = vmatpush1.msra.mxu0 0.0
    %2875 = vmatprep.subr.mxu0 0.0
    %2876 = vmatpush1.msra.mxu0 0.0
    %2877 = vmatprep.subr.mxu0 0.0
    %2878 = vmatpush1.msra.mxu0 0.0
    %2879 = vmatprep.subr.mxu0 0.0
    %2880 = vmatpush1.msra.mxu0 0.0
    %2881 = vmatprep.subr.mxu0 0.0
    %2882 = vmatpush1.msra.mxu0 0.0
    %2883 = vmatprep.subr.mxu0 0.0
    %2884 = vmatpush1.msra.mxu0 0.0
    %2885 = vmatprep.subr.mxu0 0.0
    %2886 = vmatpush1.msra.mxu0 0.0
    %2887 = vmatprep.subr.mxu0 0.0
    %2888 = vmatpush1.msra.mxu0 0.0
    %2889 = vmatprep.subr.mxu0 0.0
    %2890 = vmatpush1.msra.mxu0 0.0
    %2891 = vmatprep.subr.mxu0 0.0
    %2892 = vmatpush1.msra.mxu0 0.0
    %2893 = vmatprep.subr.mxu0 0.0
    %2894 = vmatpush1.msra.mxu0 0.0
    %2895 = vmatprep.subr.mxu0 0.0
    %2896 = vmatpush1.msra.mxu0 0.0
    %2897 = vmatprep.subr.mxu0 0.0
    %2898 = vmatpush1.msra.mxu0 0.0
    %2899 = vmatprep.subr.mxu0 0.0
    %2900 = vmatpush1.msra.mxu0 0.0
    %2901 = vmatprep.subr.mxu0 0.0
    %2902 = vmatpush1.msra.mxu0 0.0
    %2903 = vmatprep.subr.mxu0 0.0
    %2904 = vmatpush1.msra.mxu0 0.0
    %2905 = vmatprep.subr.mxu0 0.0
    %2906 = vmatpush1.msra.mxu0 0.0
    %2907 = vmatprep.subr.mxu0 0.0
    %2908 = vmatpush1.msra.mxu0 0.0
    %2909 = vmatprep.subr.mxu0 0.0
    %2910 = vmatpush1.msra.mxu0 0.0
    %2911 = vmatprep.subr.mxu0 0.0
    %2912 = vmatpush1.msra.mxu0 0.0
    %2913 = vmatprep.subr.mxu0 0.0
    %2914 = vmatpush1.msra.mxu0 0.0
    %2915 = vmatprep.subr.mxu0 0.0
    %2916 = vmatpush1.msra.mxu0 0.0
    %2917 = vmatprep.subr.mxu0 0.0
    %2918 = vmatpush1.msra.mxu0 0.0
    %2919 = vmatprep.subr.mxu0 0.0
    %2920 = vmatpush1.msra.mxu0 0.0
    %2921 = vmatprep.subr.mxu0 0.0
    %2922 = vmatpush1.msra.mxu0 0.0
    %2923 = vmatprep.subr.mxu0 0.0
    %2924 = vmatpush1.msra.mxu0 0.0
    %2925 = vmatprep.subr.mxu0 0.0
    %2926 = vmatpush1.msra.mxu0 0.0
    %2927 = vmatprep.subr.mxu0 0.0
    %2928 = vmatpush1.msra.mxu0 0.0
    %2929 = vmatprep.subr.mxu0 0.0
    %2930 = vmatpush1.msra.mxu0 0.0
    %2931 = vmatprep.mubr.f32.mxu0 0.0
    %2932 = vmatmul.mubr.f32.gmra.mrb[0].mxu0 %v2865
    %v2933 = vpop.f32.mrb[0].mxu0
    %v2934 = vadd.f32 0.0, %v2933
    %v2935 = vpop.f32.mrb[0].mxu0
    %2936 = vdwg.mxu0
    %2937 = vrot.lane.b32.xlu0 %v1931, 104
    %v2938 = vpop.permute.xlu0 %2937
    %2939 = vrot.lane.b32.xlu0 %v1931, 72
    %v2940 = vpop.permute.xlu0 %2939
    %v2941 = vsel %vm133, %v2938, 0
    %v2943 = vsel %vm133, %v2940, 0
    %2945 = vmatprep.subr.mxu0 0.0
    %2946 = vmatpush1.xpose.msra.mxu0 %v2943
    %2947 = vmatprep.subr.mxu0 0.0
    %2948 = vmatpush1.xpose.msra.mxu0 0.0
    %2949 = vmatprep.subr.mxu0 0.0
    %2950 = vmatpush1.xpose.msra.mxu0 0.0
    %2951 = vmatprep.subr.mxu0 0.0
    %2952 = vmatpush1.xpose.msra.mxu0 0.0
    %2953 = vmatprep.subr.mxu0 0.0
    %2954 = vmatpush1.xpose.msra.mxu0 0.0
    %2955 = vmatprep.subr.mxu0 0.0
    %2956 = vmatpush1.xpose.msra.mxu0 0.0
    %2957 = vmatprep.subr.mxu0 0.0
    %2958 = vmatpush1.xpose.msra.mxu0 0.0
    %2959 = vmatprep.subr.mxu0 0.0
    %2960 = vmatpush1.xpose.msra.mxu0 0.0
    %2961 = vmatprep.subr.mxu0 0.0
    %2962 = vmatpush1.xpose.msra.mxu0 0.0
    %2963 = vmatprep.subr.mxu0 0.0
    %2964 = vmatpush1.xpose.msra.mxu0 0.0
    %2965 = vmatprep.subr.mxu0 0.0
    %2966 = vmatpush1.xpose.msra.mxu0 0.0
    %2967 = vmatprep.subr.mxu0 0.0
    %2968 = vmatpush1.xpose.msra.mxu0 0.0
    %2969 = vmatprep.subr.mxu0 0.0
    %2970 = vmatpush1.xpose.msra.mxu0 0.0
    %2971 = vmatprep.subr.mxu0 0.0
    %2972 = vmatpush1.xpose.msra.mxu0 0.0
    %2973 = vmatprep.subr.mxu0 0.0
    %2974 = vmatpush1.xpose.msra.mxu0 0.0
    %2975 = vmatprep.subr.mxu0 0.0
    %2976 = vmatpush1.xpose.msra.mxu0 0.0
    %2977 = vmatprep.subr.mxu0 0.0
    %2978 = vmatpush1.xpose.msra.mxu0 0.0
    %2979 = vmatprep.subr.mxu0 0.0
    %2980 = vmatpush1.xpose.msra.mxu0 0.0
    %2981 = vmatprep.subr.mxu0 0.0
    %2982 = vmatpush1.xpose.msra.mxu0 0.0
    %2983 = vmatprep.subr.mxu0 0.0
    %2984 = vmatpush1.xpose.msra.mxu0 0.0
    %2985 = vmatprep.subr.mxu0 0.0
    %2986 = vmatpush1.xpose.msra.mxu0 0.0
    %2987 = vmatprep.subr.mxu0 0.0
    %2988 = vmatpush1.xpose.msra.mxu0 0.0
    %2989 = vmatprep.subr.mxu0 0.0
    %2990 = vmatpush1.xpose.msra.mxu0 0.0
    %2991 = vmatprep.subr.mxu0 0.0
    %2992 = vmatpush1.xpose.msra.mxu0 0.0
    %2993 = vmatprep.subr.mxu0 0.0
    %2994 = vmatpush1.xpose.msra.mxu0 0.0
    %2995 = vmatprep.subr.mxu0 0.0
    %2996 = vmatpush1.xpose.msra.mxu0 0.0
    %2997 = vmatprep.subr.mxu0 0.0
    %2998 = vmatpush1.xpose.msra.mxu0 0.0
    %2999 = vmatprep.subr.mxu0 0.0
    %3000 = vmatpush1.xpose.msra.mxu0 0.0
    %3001 = vmatprep.subr.mxu0 0.0
    %3002 = vmatpush1.xpose.msra.mxu0 0.0
    %3003 = vmatprep.subr.mxu0 0.0
    %3004 = vmatpush1.xpose.msra.mxu0 0.0
    %3005 = vmatprep.subr.mxu0 0.0
    %3006 = vmatpush1.xpose.msra.mxu0 0.0
    %3007 = vmatprep.subr.mxu0 0.0
    %3008 = vmatpush1.xpose.msra.mxu0 0.0
    %3009 = vmatprep.mubr.f32.mxu0 0.0
    %3010 = vmatmul.mubr.f32.gmra.mrb[0].mxu0 %v2941
    %v3011 = vpop.f32.mrb[0].mxu0
    %v3012 = vadd.f32 0.0, %v3011
    %v3013 = vpop.f32.mrb[0].mxu0
    %3014 = vdwg.mxu0
    %3015 = vrot.lane.b32.xlu0 %v1934, 104
    %v3016 = vpop.permute.xlu0 %3015
    %3017 = vrot.lane.b32.xlu0 %v1934, 72
    %v3018 = vpop.permute.xlu0 %3017
    %v3019 = vsel %vm133, %v3016, 0
    %v3021 = vsel %vm133, %v3018, 0
    %3023 = vmatprep.subr.mxu0 0.0
    %3024 = vmatpush1.xpose.msra.mxu0 %v3021
    %3025 = vmatprep.subr.mxu0 0.0
    %3026 = vmatpush1.xpose.msra.mxu0 0.0
    %3027 = vmatprep.subr.mxu0 0.0
    %3028 = vmatpush1.xpose.msra.mxu0 0.0
    %3029 = vmatprep.subr.mxu0 0.0
    %3030 = vmatpush1.xpose.msra.mxu0 0.0
    %3031 = vmatprep.subr.mxu0 0.0
    %3032 = vmatpush1.xpose.msra.mxu0 0.0
    %3033 = vmatprep.subr.mxu0 0.0
    %3034 = vmatpush1.xpose.msra.mxu0 0.0
    %3035 = vmatprep.subr.mxu0 0.0
    %3036 = vmatpush1.xpose.msra.mxu0 0.0
    %3037 = vmatprep.subr.mxu0 0.0
    %3038 = vmatpush1.xpose.msra.mxu0 0.0
    %3039 = vmatprep.subr.mxu0 0.0
    %3040 = vmatpush1.xpose.msra.mxu0 0.0
    %3041 = vmatprep.subr.mxu0 0.0
    %3042 = vmatpush1.xpose.msra.mxu0 0.0
    %3043 = vmatprep.subr.mxu0 0.0
    %3044 = vmatpush1.xpose.msra.mxu0 0.0
    %3045 = vmatprep.subr.mxu0 0.0
    %3046 = vmatpush1.xpose.msra.mxu0 0.0
    %3047 = vmatprep.subr.mxu0 0.0
    %3048 = vmatpush1.xpose.msra.mxu0 0.0
    %3049 = vmatprep.subr.mxu0 0.0
    %3050 = vmatpush1.xpose.msra.mxu0 0.0
    %3051 = vmatprep.subr.mxu0 0.0
    %3052 = vmatpush1.xpose.msra.mxu0 0.0
    %3053 = vmatprep.subr.mxu0 0.0
    %3054 = vmatpush1.xpose.msra.mxu0 0.0
    %3055 = vmatprep.subr.mxu0 0.0
    %3056 = vmatpush1.xpose.msra.mxu0 0.0
    %3057 = vmatprep.subr.mxu0 0.0
    %3058 = vmatpush1.xpose.msra.mxu0 0.0
    %3059 = vmatprep.subr.mxu0 0.0
    %3060 = vmatpush1.xpose.msra.mxu0 0.0
    %3061 = vmatprep.subr.mxu0 0.0
    %3062 = vmatpush1.xpose.msra.mxu0 0.0
    %3063 = vmatprep.subr.mxu0 0.0
    %3064 = vmatpush1.xpose.msra.mxu0 0.0
    %3065 = vmatprep.subr.mxu0 0.0
    %3066 = vmatpush1.xpose.msra.mxu0 0.0
    %3067 = vmatprep.subr.mxu0 0.0
    %3068 = vmatpush1.xpose.msra.mxu0 0.0
    %3069 = vmatprep.subr.mxu0 0.0
    %3070 = vmatpush1.xpose.msra.mxu0 0.0
    %3071 = vmatprep.subr.mxu0 0.0
    %3072 = vmatpush1.xpose.msra.mxu0 0.0
    %3073 = vmatprep.subr.mxu0 0.0
    %3074 = vmatpush1.xpose.msra.mxu0 0.0
    %3075 = vmatprep.subr.mxu0 0.0
    %3076 = vmatpush1.xpose.msra.mxu0 0.0
    %3077 = vmatprep.subr.mxu0 0.0
    %3078 = vmatpush1.xpose.msra.mxu0 0.0
    %3079 = vmatprep.subr.mxu0 0.0
    %3080 = vmatpush1.xpose.msra.mxu0 0.0
    %3081 = vmatprep.subr.mxu0 0.0
    %3082 = vmatpush1.xpose.msra.mxu0 0.0
    %3083 = vmatprep.subr.mxu0 0.0
    %3084 = vmatpush1.xpose.msra.mxu0 0.0
    %3085 = vmatprep.subr.mxu0 0.0
    %3086 = vmatpush1.xpose.msra.mxu0 0.0
    %3087 = vmatprep.mubr.f32.mxu0 0.0
    %3088 = vmatmul.mubr.f32.gmra.mrb[0].mxu0 %v3019
    %v3089 = vpop.f32.mrb[0].mxu0
    %v3090 = vadd.f32 0.0, %v3089
    %v3091 = vpop.f32.mrb[0].mxu0
    %3092 = vdwg.mxu0
    %v3093 = vmul.f32 %v3012, 0.35355338
    %v3094 = vmul.f32 %v3090, 0.35355338
    %v3095 = vadd.f32 %v3093, %v59
    %v3096 = vadd.f32 %v3094, %v60
    %v3097 = vsel %vm133, %v3095, -inf
    %3098 = vmax.xlane.f32.xlu0 %v3097
    %v3099 = vpop.xlane.xlu0 %3098
    %v3100 = vsel %vm133, %v3096, -inf
    %3101 = vmax.xlane.f32.xlu0 %v3100
    %v3102 = vpop.xlane.xlu0 %3101
    %v3103 = vsub.f32 %v3095, %v3099
    %v3104 = vsub.f32 %v3096, %v3102
    %v3105 = vmul.f32 %v3103, 1.442695
    %v3106 = vpow.pop %v3105
    %v3107 = vmul.f32 %v3104, 1.442695
    %v3108 = vpow.pop %v3107
    %v3109 = vsel %vm133, %v3106, 0.0
    %3110 = vadd.xlane.f32.xlu0 %v3109
    %v3111 = vpop.xlane.xlu0 %3110
    %v3112 = vsel %vm133, %v3108, 0.0
    %3113 = vadd.xlane.f32.xlu0 %v3112
    %v3114 = vpop.xlane.xlu0 %3113
    %v3115 = vrcp.pop %v3111
    %v3116 = vmul.f32 %v3106, %v3115
    %v3117 = vrcp.pop %v3114
    %v3118 = vmul.f32 %v3108, %v3117
    %3119 = vrot.lane.b32.xlu0 %v1931, 40
    %v3120 = vpop.permute.xlu0 %3119
    %v3123 = vsel %vm133, %v3116, 0
    %3125 = vmatprep.subr.mxu0 0.0
    %3126 = vmatpush1.msra.mxu0 %v3120
    %3127 = vmatprep.subr.mxu0 0.0
    %3128 = vmatpush1.msra.mxu0 0.0
    %3129 = vmatprep.subr.mxu0 0.0
    %3130 = vmatpush1.msra.mxu0 0.0
    %3131 = vmatprep.subr.mxu0 0.0
    %3132 = vmatpush1.msra.mxu0 0.0
    %3133 = vmatprep.subr.mxu0 0.0
    %3134 = vmatpush1.msra.mxu0 0.0
    %3135 = vmatprep.subr.mxu0 0.0
    %3136 = vmatpush1.msra.mxu0 0.0
    %3137 = vmatprep.subr.mxu0 0.0
    %3138 = vmatpush1.msra.mxu0 0.0
    %3139 = vmatprep.subr.mxu0 0.0
    %3140 = vmatpush1.msra.mxu0 0.0
    %3141 = vmatprep.subr.mxu0 0.0
    %3142 = vmatpush1.msra.mxu0 0.0
    %3143 = vmatprep.subr.mxu0 0.0
    %3144 = vmatpush1.msra.mxu0 0.0
    %3145 = vmatprep.subr.mxu0 0.0
    %3146 = vmatpush1.msra.mxu0 0.0
    %3147 = vmatprep.subr.mxu0 0.0
    %3148 = vmatpush1.msra.mxu0 0.0
    %3149 = vmatprep.subr.mxu0 0.0
    %3150 = vmatpush1.msra.mxu0 0.0
    %3151 = vmatprep.subr.mxu0 0.0
    %3152 = vmatpush1.msra.mxu0 0.0
    %3153 = vmatprep.subr.mxu0 0.0
    %3154 = vmatpush1.msra.mxu0 0.0
    %3155 = vmatprep.subr.mxu0 0.0
    %3156 = vmatpush1.msra.mxu0 0.0
    %3157 = vmatprep.subr.mxu0 0.0
    %3158 = vmatpush1.msra.mxu0 0.0
    %3159 = vmatprep.subr.mxu0 0.0
    %3160 = vmatpush1.msra.mxu0 0.0
    %3161 = vmatprep.subr.mxu0 0.0
    %3162 = vmatpush1.msra.mxu0 0.0
    %3163 = vmatprep.subr.mxu0 0.0
    %3164 = vmatpush1.msra.mxu0 0.0
    %3165 = vmatprep.subr.mxu0 0.0
    %3166 = vmatpush1.msra.mxu0 0.0
    %3167 = vmatprep.subr.mxu0 0.0
    %3168 = vmatpush1.msra.mxu0 0.0
    %3169 = vmatprep.subr.mxu0 0.0
    %3170 = vmatpush1.msra.mxu0 0.0
    %3171 = vmatprep.subr.mxu0 0.0
    %3172 = vmatpush1.msra.mxu0 0.0
    %3173 = vmatprep.subr.mxu0 0.0
    %3174 = vmatpush1.msra.mxu0 0.0
    %3175 = vmatprep.subr.mxu0 0.0
    %3176 = vmatpush1.msra.mxu0 0.0
    %3177 = vmatprep.subr.mxu0 0.0
    %3178 = vmatpush1.msra.mxu0 0.0
    %3179 = vmatprep.subr.mxu0 0.0
    %3180 = vmatpush1.msra.mxu0 0.0
    %3181 = vmatprep.subr.mxu0 0.0
    %3182 = vmatpush1.msra.mxu0 0.0
    %3183 = vmatprep.subr.mxu0 0.0
    %3184 = vmatpush1.msra.mxu0 0.0
    %3185 = vmatprep.subr.mxu0 0.0
    %3186 = vmatpush1.msra.mxu0 0.0
    %3187 = vmatprep.subr.mxu0 0.0
    %3188 = vmatpush1.msra.mxu0 0.0
    %3189 = vmatprep.mubr.f32.mxu0 0.0
    %3190 = vmatmul.mubr.f32.gmra.mrb[0].mxu0 %v3123
    %v3191 = vpop.f32.mrb[0].mxu0
    %v3192 = vadd.f32 0.0, %v3191
    %v3193 = vpop.f32.mrb[0].mxu0
    %3194 = vdwg.mxu0
    %3195 = vrot.lane.b32.xlu0 %v1934, 40
    %v3196 = vpop.permute.xlu0 %3195
    %v3199 = vsel %vm133, %v3118, 0
    %3201 = vmatprep.subr.mxu0 0.0
    %3202 = vmatpush1.msra.mxu0 %v3196
    %3203 = vmatprep.subr.mxu0 0.0
    %3204 = vmatpush1.msra.mxu0 0.0
    %3205 = vmatprep.subr.mxu0 0.0
    %3206 = vmatpush1.msra.mxu0 0.0
    %3207 = vmatprep.subr.mxu0 0.0
    %3208 = vmatpush1.msra.mxu0 0.0
    %3209 = vmatprep.subr.mxu0 0.0
    %3210 = vmatpush1.msra.mxu0 0.0
    %3211 = vmatprep.subr.mxu0 0.0
    %3212 = vmatpush1.msra.mxu0 0.0
    %3213 = vmatprep.subr.mxu0 0.0
    %3214 = vmatpush1.msra.mxu0 0.0
    %3215 = vmatprep.subr.mxu0 0.0
    %3216 = vmatpush1.msra.mxu0 0.0
    %3217 = vmatprep.subr.mxu0 0.0
    %3218 = vmatpush1.msra.mxu0 0.0
    %3219 = vmatprep.subr.mxu0 0.0
    %3220 = vmatpush1.msra.mxu0 0.0
    %3221 = vmatprep.subr.mxu0 0.0
    %3222 = vmatpush1.msra.mxu0 0.0
    %3223 = vmatprep.subr.mxu0 0.0
    %3224 = vmatpush1.msra.mxu0 0.0
    %3225 = vmatprep.subr.mxu0 0.0
    %3226 = vmatpush1.msra.mxu0 0.0
    %3227 = vmatprep.subr.mxu0 0.0
    %3228 = vmatpush1.msra.mxu0 0.0
    %3229 = vmatprep.subr.mxu0 0.0
    %3230 = vmatpush1.msra.mxu0 0.0
    %3231 = vmatprep.subr.mxu0 0.0
    %3232 = vmatpush1.msra.mxu0 0.0
    %3233 = vmatprep.subr.mxu0 0.0
    %3234 = vmatpush1.msra.mxu0 0.0
    %3235 = vmatprep.subr.mxu0 0.0
    %3236 = vmatpush1.msra.mxu0 0.0
    %3237 = vmatprep.subr.mxu0 0.0
    %3238 = vmatpush1.msra.mxu0 0.0
    %3239 = vmatprep.subr.mxu0 0.0
    %3240 = vmatpush1.msra.mxu0 0.0
    %3241 = vmatprep.subr.mxu0 0.0
    %3242 = vmatpush1.msra.mxu0 0.0
    %3243 = vmatprep.subr.mxu0 0.0
    %3244 = vmatpush1.msra.mxu0 0.0
    %3245 = vmatprep.subr.mxu0 0.0
    %3246 = vmatpush1.msra.mxu0 0.0
    %3247 = vmatprep.subr.mxu0 0.0
    %3248 = vmatpush1.msra.mxu0 0.0
    %3249 = vmatprep.subr.mxu0 0.0
    %3250 = vmatpush1.msra.mxu0 0.0
    %3251 = vmatprep.subr.mxu0 0.0
    %3252 = vmatpush1.msra.mxu0 0.0
    %3253 = vmatprep.subr.mxu0 0.0
    %3254 = vmatpush1.msra.mxu0 0.0
    %3255 = vmatprep.subr.mxu0 0.0
    %3256 = vmatpush1.msra.mxu0 0.0
    %3257 = vmatprep.subr.mxu0 0.0
    %3258 = vmatpush1.msra.mxu0 0.0
    %3259 = vmatprep.subr.mxu0 0.0
    %3260 = vmatpush1.msra.mxu0 0.0
    %3261 = vmatprep.subr.mxu0 0.0
    %3262 = vmatpush1.msra.mxu0 0.0
    %3263 = vmatprep.subr.mxu0 0.0
    %3264 = vmatpush1.msra.mxu0 0.0
    %3265 = vmatprep.mubr.f32.mxu0 0.0
    %3266 = vmatmul.mubr.f32.gmra.mrb[0].mxu0 %v3199
    %v3267 = vpop.f32.mrb[0].mxu0
    %v3268 = vadd.f32 0.0, %v3267
    %v3269 = vpop.f32.mrb[0].mxu0
    %3270 = vdwg.mxu0
    %3273 = vrot.lane.b32.xlu0 %v2524, 8
    %v3274 = vpop.permute.xlu0 %3273
    %3275 = vrot.lane.b32.xlu0 %v2600, 8
    %v3276 = vpop.permute.xlu0 %3275
    %3281 = vrot.lane.b32.xlu0 %v2858, 16
    %v3282 = vpop.permute.xlu0 %3281
    %3283 = vrot.lane.b32.xlu0 %v2934, 16
    %v3284 = vpop.permute.xlu0 %3283
    %3289 = vrot.lane.b32.xlu0 %v3192, 24
    %v3290 = vpop.permute.xlu0 %3289
    %3291 = vrot.lane.b32.xlu0 %v3268, 24
    %v3292 = vpop.permute.xlu0 %3291
    %v3295 = vsel %vm133, %v2190, %v3274
    %v3296 = vsel %vm133, %v2266, %v3276
    %v3297 = vsel %vm1491, %v3295, %v3282
    %v3298 = vsel %vm1491, %v3296, %v3284
    %v3299 = vsel %vm1494, %v3297, %v3290
    %v3300 = vsel %vm1494, %v3298, %v3292
    %3301 = vrot.lane.b32.xlu0 %v2448, 8
    %v3302 = vpop.permute.xlu0 %3301
    %3303 = vrot.lane.b32.xlu0 %v2450, 8
    %v3304 = vpop.permute.xlu0 %3303
    %3307 = vrot.lane.b32.xlu0 %v2782, 16
    %v3308 = vpop.permute.xlu0 %3307
    %3309 = vrot.lane.b32.xlu0 %v2784, 16
    %v3310 = vpop.permute.xlu0 %3309
    %3313 = vrot.lane.b32.xlu0 %v3116, 24
    %v3314 = vpop.permute.xlu0 %3313
    %3315 = vrot.lane.b32.xlu0 %v3118, 24
    %v3316 = vpop.permute.xlu0 %3315
    %v3319 = vsel %vm133, %v2114, %v3302
    %v3320 = vsel %vm133, %v2116, %v3304
    %v3321 = vsel %vm1491, %v3319, %v3308
    %v3322 = vsel %vm1491, %v3320, %v3310
    %v3323 = vsel %vm1494, %v3321, %v3314
    %v3324 = vsel %vm1494, %v3322, %v3316
    %s3325 = scalar_lea.vmem %s17, 16
    %3326 = vst.msk [vmem:[%s3325] sm:$0xff] %vm85, %v3323
    %3327 = vst.msk [vmem:[%s3325 + $0x8] sm:$0xff] %vm85, %v3324
    %v3328 = vpack.c.bf16 %v3300, %v3299
    %s3329 = scalar_lea.vmem %s4, 16
    %v3330 = vld [vmem:[%s3329] sm:$0xf]
    %v3331 = vld [vmem:[%s3329 + $0x4] sm:$0xf]
    %v3332 = vld [vmem:[%s3329 + $0x8] sm:$0xf]
    %v3333 = vld [vmem:[%s3329 + $0xc] sm:$0xf]
    %s3334 = scalar_lea.vmem %s5, 1
    %v3335 = vld [vmem:[%s3334] sm:$0x1]
    %v3337 = vlaneseq
    %v3338 = vshrl.u32 %v3337, 7
    %v3339 = vsub.s32 0, %v3338
    %v3340 = vrot.slane %v3335, %v3339
    %v3346 = vunpack.c.l.b16 %v3330
    %v3347 = vunpack.c.l.b16 %v3331
    %v3348 = vunpack.c.l.b16 %v3332
    %v3349 = vunpack.c.l.b16 %v3333
    %v3350 = vpack.c.b16 %v3347, %v3346
    %v3351 = vpack.c.b16 %v3349, %v3348
    %v3355 = vsel %vm85, %v3328, 0
    %3357 = vmatprep.subr.bf16.mxu0 0
    %3358 = vmatpush1.bf16.msra.mxu0 %v3350
    %3359 = vmatprep.subr.bf16.mxu0 0
    %3360 = vmatpush1.bf16.msra.mxu0 %v3351
    %3361 = vmatprep.subr.bf16.mxu0 0
    %3362 = vmatpush1.bf16.msra.mxu0 0
    %3363 = vmatprep.subr.bf16.mxu0 0
    %3364 = vmatpush1.bf16.msra.mxu0 0
    %3365 = vmatprep.subr.bf16.mxu0 0
    %3366 = vmatpush1.bf16.msra.mxu0 0
    %3367 = vmatprep.subr.bf16.mxu0 0
    %3368 = vmatpush1.bf16.msra.mxu0 0
    %3369 = vmatprep.subr.bf16.mxu0 0
    %3370 = vmatpush1.bf16.msra.mxu0 0
    %3371 = vmatprep.subr.bf16.mxu0 0
    %3372 = vmatpush1.bf16.msra.mxu0 0
    %3373 = vmatprep.subr.bf16.mxu0 0
    %3374 = vmatpush1.bf16.msra.mxu0 0
    %3375 = vmatprep.subr.bf16.mxu0 0
    %3376 = vmatpush1.bf16.msra.mxu0 0
    %3377 = vmatprep.subr.bf16.mxu0 0
    %3378 = vmatpush1.bf16.msra.mxu0 0
    %3379 = vmatprep.subr.bf16.mxu0 0
    %3380 = vmatpush1.bf16.msra.mxu0 0
    %3381 = vmatprep.subr.bf16.mxu0 0
    %3382 = vmatpush1.bf16.msra.mxu0 0
    %3383 = vmatprep.subr.bf16.mxu0 0
    %3384 = vmatpush1.bf16.msra.mxu0 0
    %3385 = vmatprep.subr.bf16.mxu0 0
    %3386 = vmatpush1.bf16.msra.mxu0 0
    %3387 = vmatprep.subr.bf16.mxu0 0
    %3388 = vmatpush1.bf16.msra.mxu0 0
    %3389 = vmatprep.mubr.bf16.mxu0 0
    %3390 = vmatmul.mubr.bf16.gmra.mrb[0].mxu0 %v3355
    %v3391 = vpop.f32.mrb[0].mxu0
    %v3392 = vadd.f32 %v3340, %v3391
    %v3393 = vpop.f32.mrb[0].mxu0
    %v3394 = vpop.f32.mrb[0].mxu0
    %v3395 = vadd.f32 %v3340, %v3394
    %v3396 = vpop.f32.mrb[0].mxu0
    %3397 = vdwg.mxu0
    %v3398 = vadd.f32 %v3392, %v1865
    %v3399 = vadd.f32 %v3395, %v1866
    %s3400 = scalar_lea.vmem %s6, 1
    %v3401 = vld [vmem:[%s3400] sm:$0x1]
    %s3402 = scalar_lea.vmem %s7, 1
    %v3403 = vld [vmem:[%s3402] sm:$0x1]
    %v3404 = vsel %vm85, %v3398, 0.0
    %3405 = vadd.xlane.f32.xlu0 %v3404
    %v3406 = vpop.xlane.xlu0 %3405
    %v3407 = vsel %vm85, %v3399, 0.0
    %3408 = vadd.xlane.f32.xlu0 %v3407
    %v3409 = vpop.xlane.xlu0 %3408
    %v3410 = vmul.f32 %v3406, %v1601
    %v3411 = vmul.f32 %v3409, %v1601
    %v3412 = vsub.f32 %v3398, %v3410
    %v3413 = vsub.f32 %v3399, %v3411
    %v3414 = vmul.f32 %v3412, %v3412
    %v3415 = vmul.f32 %v3413, %v3413
    %v3416 = vsel %vm85, %v3414, 0.0
    %3417 = vadd.xlane.f32.xlu0 %v3416
    %v3418 = vpop.xlane.xlu0 %3417
    %v3419 = vsel %vm85, %v3415, 0.0
    %3420 = vadd.xlane.f32.xlu0 %v3419
    %v3421 = vpop.xlane.xlu0 %3420
    %v3422 = vmul.f32 %v3418, %v1601
    %v3423 = vmul.f32 %v3421, %v1601
    %v3424 = vadd.f32 %v3422, 1e-05
    %v3425 = vadd.f32 %v3423, 1e-05
    %v3426 = vrsqrt.pop %v3424
    %v3427 = vrsqrt.pop %v3425
    %v3428 = vmul.f32 %v3412, %v3426
    %v3429 = vmul.f32 %v3413, %v3427
    %v3431 = vlaneseq
    %v3432 = vshrl.u32 %v3431, 7
    %v3433 = vsub.s32 0, %v3432
    %v3434 = vrot.slane %v3401, %v3433
    %v3436 = vmul.f32 %v3428, %v3434
    %v3437 = vmul.f32 %v3429, %v3434
    %v3439 = vlaneseq
    %v3440 = vshrl.u32 %v3439, 7
    %v3441 = vsub.s32 0, %v3440
    %v3442 = vrot.slane %v3403, %v3441
    %v3444 = vadd.f32 %v3436, %v3442
    %v3445 = vadd.f32 %v3437, %v3442
    %v3446 = vpack.c.bf16 %v3445, %v3444
    %s3447 = scalar_lea.vmem %s8, 16
    %v3448 = vld [vmem:[%s3447] sm:$0xf]
    %v3449 = vld [vmem:[%s3447 + $0x4] sm:$0xf]
    %v3450 = vld [vmem:[%s3447 + $0x8] sm:$0xf]
    %v3451 = vld [vmem:[%s3447 + $0xc] sm:$0xf]
    %s3452 = scalar_lea.vmem %s9, 1
    %v3453 = vld [vmem:[%s3452] sm:$0x1]
    %v3455 = vlaneseq
    %v3456 = vshrl.u32 %v3455, 7
    %v3457 = vsub.s32 0, %v3456
    %v3458 = vrot.slane %v3453, %v3457
    %v3464 = vunpack.c.l.b16 %v3448
    %v3465 = vunpack.c.l.b16 %v3449
    %v3466 = vunpack.c.l.b16 %v3450
    %v3467 = vunpack.c.l.b16 %v3451
    %v3468 = vpack.c.b16 %v3465, %v3464
    %v3469 = vpack.c.b16 %v3467, %v3466
    %v3473 = vsel %vm85, %v3446, 0
    %3475 = vmatprep.subr.bf16.mxu0 0
    %3476 = vmatpush1.bf16.msra.mxu0 %v3468
    %3477 = vmatprep.subr.bf16.mxu0 0
    %3478 = vmatpush1.bf16.msra.mxu0 %v3469
    %3479 = vmatprep.subr.bf16.mxu0 0
    %3480 = vmatpush1.bf16.msra.mxu0 0
    %3481 = vmatprep.subr.bf16.mxu0 0
    %3482 = vmatpush1.bf16.msra.mxu0 0
    %3483 = vmatprep.subr.bf16.mxu0 0
    %3484 = vmatpush1.bf16.msra.mxu0 0
    %3485 = vmatprep.subr.bf16.mxu0 0
    %3486 = vmatpush1.bf16.msra.mxu0 0
    %3487 = vmatprep.subr.bf16.mxu0 0
    %3488 = vmatpush1.bf16.msra.mxu0 0
    %3489 = vmatprep.subr.bf16.mxu0 0
    %3490 = vmatpush1.bf16.msra.mxu0 0
    %3491 = vmatprep.subr.bf16.mxu0 0
    %3492 = vmatpush1.bf16.msra.mxu0 0
    %3493 = vmatprep.subr.bf16.mxu0 0
    %3494 = vmatpush1.bf16.msra.mxu0 0
    %3495 = vmatprep.subr.bf16.mxu0 0
    %3496 = vmatpush1.bf16.msra.mxu0 0
    %3497 = vmatprep.subr.bf16.mxu0 0
    %3498 = vmatpush1.bf16.msra.mxu0 0
    %3499 = vmatprep.subr.bf16.mxu0 0
    %3500 = vmatpush1.bf16.msra.mxu0 0
    %3501 = vmatprep.subr.bf16.mxu0 0
    %3502 = vmatpush1.bf16.msra.mxu0 0
    %3503 = vmatprep.subr.bf16.mxu0 0
    %3504 = vmatpush1.bf16.msra.mxu0 0
    %3505 = vmatprep.subr.bf16.mxu0 0
    %3506 = vmatpush1.bf16.msra.mxu0 0
    %3507 = vmatprep.mubr.bf16.mxu0 0
    %3508 = vmatmul.mubr.bf16.gmra.mrb[0].mxu0 %v3473
    %v3509 = vpop.f32.mrb[0].mxu0
    %v3510 = vadd.f32 %v3458, %v3509
    %v3511 = vpop.f32.mrb[0].mxu0
    %v3512 = vpop.f32.mrb[0].mxu0
    %v3513 = vadd.f32 %v3458, %v3512
    %v3514 = vpop.f32.mrb[0].mxu0
    %3515 = vdwg.mxu0
    %v3516 = vmax.f32 %v3510, 0.0
    %v3517 = vmax.f32 %v3513, 0.0
    %v3518 = vpack.c.bf16 %v3517, %v3516
    %s3519 = scalar_lea.vmem %s10, 64
    %v3520 = vld [vmem:[%s3519] sm:$0xf]
    %v3521 = vld [vmem:[%s3519 + $0x4] sm:$0xf]
    %v3522 = vld [vmem:[%s3519 + $0x8] sm:$0xf]
    %v3523 = vld [vmem:[%s3519 + $0xc] sm:$0xf]
    %v3524 = vld [vmem:[%s3519 + $0x10] sm:$0xf]
    %v3525 = vld [vmem:[%s3519 + $0x14] sm:$0xf]
    %v3526 = vld [vmem:[%s3519 + $0x18] sm:$0xf]
    %v3527 = vld [vmem:[%s3519 + $0x1c] sm:$0xf]
    %v3528 = vld [vmem:[%s3519 + $0x20] sm:$0xf]
    %v3529 = vld [vmem:[%s3519 + $0x24] sm:$0xf]
    %v3530 = vld [vmem:[%s3519 + $0x28] sm:$0xf]
    %v3531 = vld [vmem:[%s3519 + $0x2c] sm:$0xf]
    %v3532 = vld [vmem:[%s3519 + $0x30] sm:$0xf]
    %v3533 = vld [vmem:[%s3519 + $0x34] sm:$0xf]
    %v3534 = vld [vmem:[%s3519 + $0x38] sm:$0xf]
    %v3535 = vld [vmem:[%s3519 + $0x3c] sm:$0xf]
    %s3536 = scalar_lea.vmem %s11, 1
    %v3537 = vld [vmem:[%s3536] sm:$0x1]
    %v3539 = vlaneseq
    %v3540 = vshrl.u32 %v3539, 7
    %v3541 = vsub.s32 0, %v3540
    %v3542 = vrot.slane %v3537, %v3541
    %v3560 = vunpack.c.l.b16 %v3520
    %v3561 = vunpack.c.l.b16 %v3521
    %v3562 = vunpack.c.l.b16 %v3522
    %v3563 = vunpack.c.l.b16 %v3523
    %v3564 = vunpack.c.l.b16 %v3524
    %v3565 = vunpack.c.l.b16 %v3525
    %v3566 = vunpack.c.l.b16 %v3526
    %v3567 = vunpack.c.l.b16 %v3527
    %v3568 = vunpack.c.l.b16 %v3528
    %v3569 = vunpack.c.l.b16 %v3529
    %v3570 = vunpack.c.l.b16 %v3530
    %v3571 = vunpack.c.l.b16 %v3531
    %v3572 = vunpack.c.l.b16 %v3532
    %v3573 = vunpack.c.l.b16 %v3533
    %v3574 = vunpack.c.l.b16 %v3534
    %v3575 = vunpack.c.l.b16 %v3535
    %v3576 = vpack.c.b16 %v3561, %v3560
    %v3577 = vpack.c.b16 %v3563, %v3562
    %v3578 = vpack.c.b16 %v3565, %v3564
    %v3579 = vpack.c.b16 %v3567, %v3566
    %v3580 = vpack.c.b16 %v3569, %v3568
    %v3581 = vpack.c.b16 %v3571, %v3570
    %v3582 = vpack.c.b16 %v3573, %v3572
    %v3583 = vpack.c.b16 %v3575, %v3574
    %3592 = vmatprep.subr.bf16.mxu0 0
    %3593 = vmatpush1.bf16.msra.mxu0 %v3576
    %3594 = vmatprep.subr.bf16.mxu0 0
    %3595 = vmatpush1.bf16.msra.mxu0 %v3577
    %3596 = vmatprep.subr.bf16.mxu0 0
    %3597 = vmatpush1.bf16.msra.mxu0 %v3578
    %3598 = vmatprep.subr.bf16.mxu0 0
    %3599 = vmatpush1.bf16.msra.mxu0 %v3579
    %3600 = vmatprep.subr.bf16.mxu0 0
    %3601 = vmatpush1.bf16.msra.mxu0 %v3580
    %3602 = vmatprep.subr.bf16.mxu0 0
    %3603 = vmatpush1.bf16.msra.mxu0 %v3581
    %3604 = vmatprep.subr.bf16.mxu0 0
    %3605 = vmatpush1.bf16.msra.mxu0 %v3582
    %3606 = vmatprep.subr.bf16.mxu0 0
    %3607 = vmatpush1.bf16.msra.mxu0 %v3583
    %3608 = vmatprep.subr.bf16.mxu0 0
    %3609 = vmatpush1.bf16.msra.mxu0 0
    %3610 = vmatprep.subr.bf16.mxu0 0
    %3611 = vmatpush1.bf16.msra.mxu0 0
    %3612 = vmatprep.subr.bf16.mxu0 0
    %3613 = vmatpush1.bf16.msra.mxu0 0
    %3614 = vmatprep.subr.bf16.mxu0 0
    %3615 = vmatpush1.bf16.msra.mxu0 0
    %3616 = vmatprep.subr.bf16.mxu0 0
    %3617 = vmatpush1.bf16.msra.mxu0 0
    %3618 = vmatprep.subr.bf16.mxu0 0
    %3619 = vmatpush1.bf16.msra.mxu0 0
    %3620 = vmatprep.subr.bf16.mxu0 0
    %3621 = vmatpush1.bf16.msra.mxu0 0
    %3622 = vmatprep.subr.bf16.mxu0 0
    %3623 = vmatpush1.bf16.msra.mxu0 0
    %3624 = vmatprep.mubr.bf16.mxu0 0
    %3625 = vmatmul.mubr.bf16.gmra.mrb[0].mxu0 %v3518
    %v3626 = vpop.f32.mrb[0].mxu0
    %v3627 = vadd.f32 %v3542, %v3626
    %v3628 = vpop.f32.mrb[0].mxu0
    %v3629 = vpop.f32.mrb[0].mxu0
    %v3630 = vadd.f32 %v3542, %v3629
    %v3631 = vpop.f32.mrb[0].mxu0
    %3632 = vdwg.mxu0
    %v3633 = vadd.f32 %v3627, %v3444
    %v3634 = vadd.f32 %v3630, %v3445
    %s3635 = scalar_lea.vmem %s12, 1
    %v3636 = vld [vmem:[%s3635] sm:$0x1]
    %s3637 = scalar_lea.vmem %s13, 1
    %v3638 = vld [vmem:[%s3637] sm:$0x1]
    %v3639 = vsel %vm85, %v3633, 0.0
    %3640 = vadd.xlane.f32.xlu0 %v3639
    %v3641 = vpop.xlane.xlu0 %3640
    %v3642 = vsel %vm85, %v3634, 0.0
    %3643 = vadd.xlane.f32.xlu0 %v3642
    %v3644 = vpop.xlane.xlu0 %3643
    %v3645 = vmul.f32 %v3641, %v1601
    %v3646 = vmul.f32 %v3644, %v1601
    %v3647 = vsub.f32 %v3633, %v3645
    %v3648 = vsub.f32 %v3634, %v3646
    %v3649 = vmul.f32 %v3647, %v3647
    %v3650 = vmul.f32 %v3648, %v3648
    %v3651 = vsel %vm85, %v3649, 0.0
    %3652 = vadd.xlane.f32.xlu0 %v3651
    %v3653 = vpop.xlane.xlu0 %3652
    %v3654 = vsel %vm85, %v3650, 0.0
    %3655 = vadd.xlane.f32.xlu0 %v3654
    %v3656 = vpop.xlane.xlu0 %3655
    %v3657 = vmul.f32 %v3653, %v1601
    %v3658 = vmul.f32 %v3656, %v1601
    %v3659 = vadd.f32 %v3657, 1e-05
    %v3660 = vadd.f32 %v3658, 1e-05
    %v3661 = vrsqrt.pop %v3659
    %v3662 = vrsqrt.pop %v3660
    %v3663 = vmul.f32 %v3647, %v3661
    %v3664 = vmul.f32 %v3648, %v3662
    %v3666 = vlaneseq
    %v3667 = vshrl.u32 %v3666, 7
    %v3668 = vsub.s32 0, %v3667
    %v3669 = vrot.slane %v3636, %v3668
    %v3671 = vmul.f32 %v3663, %v3669
    %v3672 = vmul.f32 %v3664, %v3669
    %v3674 = vlaneseq
    %v3675 = vshrl.u32 %v3674, 7
    %v3676 = vsub.s32 0, %v3675
    %v3677 = vrot.slane %v3638, %v3676
    %v3679 = vadd.f32 %v3671, %v3677
    %v3680 = vadd.f32 %v3672, %v3677
    %v3681 = vpack.c.bf16 %v3680, %v3679
    %v3682 = vld [vmem:[%s14] sm:$0xf]
    %v3683 = vld [vmem:[%s14 + $0x4] sm:$0xf]
    %v3684 = vld [vmem:[%s14 + $0x8] sm:$0xf]
    %v3685 = vld [vmem:[%s14 + $0xc] sm:$0xf]
    %v3686 = vld [vmem:[%s15] sm:$0x1]
    %v3688 = vlaneseq
    %v3689 = vshrl.u32 %v3688, 7
    %v3690 = vsub.s32 0, %v3689
    %v3691 = vrot.slane %v3686, %v3690
    %v3697 = vunpack.c.l.b16 %v3682
    %v3698 = vunpack.c.l.b16 %v3683
    %v3699 = vunpack.c.l.b16 %v3684
    %v3700 = vunpack.c.l.b16 %v3685
    %v3701 = vpack.c.b16 %v3698, %v3697
    %v3702 = vpack.c.b16 %v3700, %v3699
    %v3706 = vsel %vm85, %v3681, 0
    %3708 = vmatprep.subr.bf16.mxu0 0
    %3709 = vmatpush1.bf16.msra.mxu0 %v3701
    %3710 = vmatprep.subr.bf16.mxu0 0
    %3711 = vmatpush1.bf16.msra.mxu0 %v3702
    %3712 = vmatprep.subr.bf16.mxu0 0
    %3713 = vmatpush1.bf16.msra.mxu0 0
    %3714 = vmatprep.subr.bf16.mxu0 0
    %3715 = vmatpush1.bf16.msra.mxu0 0
    %3716 = vmatprep.subr.bf16.mxu0 0
    %3717 = vmatpush1.bf16.msra.mxu0 0
    %3718 = vmatprep.subr.bf16.mxu0 0
    %3719 = vmatpush1.bf16.msra.mxu0 0
    %3720 = vmatprep.subr.bf16.mxu0 0
    %3721 = vmatpush1.bf16.msra.mxu0 0
    %3722 = vmatprep.subr.bf16.mxu0 0
    %3723 = vmatpush1.bf16.msra.mxu0 0
    %3724 = vmatprep.subr.bf16.mxu0 0
    %3725 = vmatpush1.bf16.msra.mxu0 0
    %3726 = vmatprep.subr.bf16.mxu0 0
    %3727 = vmatpush1.bf16.msra.mxu0 0
    %3728 = vmatprep.subr.bf16.mxu0 0
    %3729 = vmatpush1.bf16.msra.mxu0 0
    %3730 = vmatprep.subr.bf16.mxu0 0
    %3731 = vmatpush1.bf16.msra.mxu0 0
    %3732 = vmatprep.subr.bf16.mxu0 0
    %3733 = vmatpush1.bf16.msra.mxu0 0
    %3734 = vmatprep.subr.bf16.mxu0 0
    %3735 = vmatpush1.bf16.msra.mxu0 0
    %3736 = vmatprep.subr.bf16.mxu0 0
    %3737 = vmatpush1.bf16.msra.mxu0 0
    %3738 = vmatprep.subr.bf16.mxu0 0
    %3739 = vmatpush1.bf16.msra.mxu0 0
    %3740 = vmatprep.mubr.bf16.mxu0 0
    %3741 = vmatmul.mubr.bf16.gmra.mrb[0].mxu0 %v3706
    %v3742 = vpop.f32.mrb[0].mxu0
    %v3743 = vadd.f32 %v3691, %v3742
    %v3744 = vpop.f32.mrb[0].mxu0
    %v3745 = vpop.f32.mrb[0].mxu0
    %v3746 = vadd.f32 %v3691, %v3745
    %v3747 = vpop.f32.mrb[0].mxu0
    %3748 = vdwg.mxu0
    %3749 = vst [vmem:[#allocation2] sm:$0xff] %v3743
    %3750 = vst [vmem:[#allocation2 + $0x8] sm:$0xff] %v3746
    // Predicated region
    $region66: #{lora_model_forward.1} parent=1 // pred_check
      _
    $region67: #{lora_model_forward.1} parent=1 // pred_check_branch
      %3752 = sbr.rel (0) target = $region69
    $region68: #{lora_model_forward.1} parent=1 // pred_region
      %s3754 = ssub.s32 256, 256
      %3755 = vsyncadd [#allocation3], %s3754
      %s3756 = sshll.u32 [#allocation2], 4
      %s3757 = int_to_ptr.vmem [resolvable:$true] %s3756
      %3762 = dma.vmem_to_hbm [thread:$0]  %s3757, 256, %s16, [#allocation3], 128, 128, 8
    $region69: #{lora_model_forward.1} parent=1 // pred_fallthru
      _
    // Predicated region
    $region70: #{lora_model_forward.1} parent=1 // pred_check
      _
    $region71: #{lora_model_forward.1} parent=1 // pred_check_branch
      %3764 = sbr.rel (0) target = $region73
    $region72: #{lora_model_forward.1} parent=1 // pred_region
      _
    $region73: #{lora_model_forward.1} parent=1 // pred_fallthru
      _
    // Predicated region
    $region74: #{lora_model_forward.1} parent=1 // pred_check
      _
    $region75: #{lora_model_forward.1} parent=1 // pred_check_branch
      %3766 = sbr.rel (0) target = $region77
    $region76: #{lora_model_forward.1} parent=1 // pred_region
      %3767 = dma.done [#allocation3], 256
    $region77: #{lora_model_forward.1} parent=1 // pred_fallthru
      _
    // Predicated region
    $region78: #{lora_model_forward.1} parent=1 // pred_check
      _
    $region79: #{lora_model_forward.1} parent=1 // pred_check_branch
      %3769 = sbr.rel (0) target = $region81
    $region80: #{lora_model_forward.1} parent=1 // pred_region
      _
    $region81: #{lora_model_forward.1} parent=1 // pred_fallthru
      _
    %3770 = vsyncpa [#allocation3], 1

</llo_original>
